<compile_context>
chip_gen: v7x
topology: tpu7x:2x2x1
jax: 0.10.0
libtpu: 0.0.40
codegen_flags: <defaults>
</compile_context>

<pallas_src>
import functools

import jax
import jax.numpy as jnp
from jax.experimental import pallas as pl
from jax.experimental.pallas import tpu as pltpu


def _attention_kernel(x_ref, e_ref, wx_ref, we_ref, bqkv_ref, wp_ref, aff_ref,
                      o_ref, *, batch_block, seq_len, num_heads, head_dim,
                      eps, approx_recip):
    x = x_ref[...]                      # [R, dim],     R = batch_block * seq_len
    e = e_ref[...]                      # [R, abs_dim]  (compute dtype, e.g. bf16)
    rows, dim = x.shape
    cdt = x.dtype

    # --- fused q|k|v linear: one pair of wide (3*dim output lanes) matmuls ---
    qkv = (jnp.dot(x, wx_ref[...], preferred_element_type=jnp.float32)
           + jnp.dot(e, we_ref[...], preferred_element_type=jnp.float32)
           + bqkv_ref[...])                                     # [R, 3*dim] f32
    qkv_c = qkv.reshape(batch_block, seq_len, 3 * dim).astype(cdt)

    # 'b n (h d) -> (h b) n d' via static lane slices + leading-axis concat,
    # so the attention core is batched over all heads in ONE 3-D einsum each
    # (single batch dim -> Mosaic-safe) instead of a per-head Python unroll.
    def heads(base):
        return jnp.concatenate(
            [qkv_c[:, :, base + h * head_dim: base + (h + 1) * head_dim]
             for h in range(num_heads)],
            axis=0)                                             # [H*bb, N, hd]

    qh = heads(0)            # scale already folded into the q weights/bias
    kh = heads(dim)
    vh = heads(2 * dim)

    s = jnp.einsum('bnd,bmd->bnm', qh, kh,
                   preferred_element_type=jnp.float32)          # [H*bb, N, N]
    s = s - jnp.max(s, axis=-1, keepdims=True)
    p = jnp.exp(s)                                              # f32 softmax
    pc = p.astype(cdt)
    l = jnp.sum(pc.astype(jnp.float32), axis=-1, keepdims=True)
    o = jnp.einsum('bnm,bmd->bnd', pc, vh,
                   preferred_element_type=jnp.float32)          # [H*bb, N, hd]
    # Normalize the small [*, N, hd] context, not the [*, N, N] probs.
    o = o * pl.reciprocal(l, approx=approx_recip)

    # '(h b) n d -> b n (h d)'  +  ONE dense projection matmul (K = dim).
    out = jnp.concatenate(
        [o[h * batch_block:(h + 1) * batch_block] for h in range(num_heads)],
        axis=-1)                                                # [bb, N, dim]
    out = out.reshape(rows, dim).astype(cdt)

    aff = aff_ref[...]                                          # [3, dim] f32
    y = (x.astype(jnp.float32)
         + jnp.dot(out, wp_ref[...], preferred_element_type=jnp.float32)
         + aff[0:1, :])                                         # + proj bias

    # LayerNorm, single-pass moments in f32.
    mu = jnp.mean(y, axis=-1, keepdims=True)
    m2 = jnp.mean(y * y, axis=-1, keepdims=True)
    y = (y - mu) * jax.lax.rsqrt(m2 - mu * mu + eps)
    o_ref[...] = (y * aff[1:2, :] + aff[2:3, :]).astype(o_ref.dtype)
    # TODO(synk): with dim=32 the VMEM stores are lane-masked (32/128 lanes);
    # a lane-dense (rows*dim//128, 128) output needs an in-kernel
    # (rows, 32)->(rows//4, 128) relayout that Mosaic may reject, and the HBM
    # writeback is already contiguous (blocks span the full feature width),
    # so it is intentionally left as is.


def _pick_batch_block(B, N, target_rows):
    """Largest divisor of B whose row tile fits target_rows (keeps the MXU M
    dim full); no forced multi-step split for tiny problems.  Row tiles must
    be a multiple of 8 sublanes unless they cover the whole array."""
    divs = [d for d in range(1, B + 1)
            if B % d == 0 and (((d * N) % 8 == 0) or d == B)]
    fitting = [d for d in divs if d * N <= max(target_rows, N)]
    return max(fitting) if fitting else B


def basic_attention(label_rep, abs_encoding, params, *, num_heads, eps=1e-5,
                    target_rows=1024, compute_dtype=jnp.bfloat16,
                    approx_recip=True):
    B, N, dim = label_rep.shape
    _, _, abs_dim = abs_encoding.shape
    assert dim % num_heads == 0
    head_dim = dim // num_heads
    scale = head_dim ** (-0.5)
    cdt = compute_dtype

    # ---- wrapper-side (XLA) weight prep: split the qk concat row-wise, fold
    # the softmax scale into q, and fuse q|k|v column-wise into wide slabs ----
    wq = params["wq"].astype(jnp.float32)
    wk = params["wk"].astype(jnp.float32)
    wv = params["wv"].astype(jnp.float32)
    wx = jnp.concatenate([wq[:dim] * scale, wk[:dim], wv], axis=1)      # [dim, 3*dim]
    we = jnp.concatenate([wq[dim:] * scale, wk[dim:],
                          jnp.zeros((abs_dim, dim), jnp.float32)], axis=1)
    bqkv = jnp.concatenate([params["bq"].reshape(1, dim) * scale,
                            params["bk"].reshape(1, dim),
                            params["bv"].reshape(1, dim)], axis=1)      # [1, 3*dim]
    wx, we = wx.astype(cdt), we.astype(cdt)
    bqkv = bqkv.astype(jnp.float32)
    wp = params["wp"].astype(cdt)                                       # [dim, dim]
    aff = jnp.concatenate([params["bp"].reshape(1, dim),
                           params["gamma"].reshape(1, dim),
                           params["beta"].reshape(1, dim)],
                          axis=0).astype(jnp.float32)                   # [3, dim]

    bb = _pick_batch_block(B, N, target_rows)
    rows_blk = bb * N
    grid = (B // bb,)

    # Flatten tokens so each grid step sees a [rows_blk, C] row slab; cast the
    # MXU operands to the compute dtype once, in the wrapper.
    x2 = label_rep.reshape(B * N, dim).astype(cdt)
    e2 = abs_encoding.reshape(B * N, abs_dim).astype(cdt)

    kernel = functools.partial(_attention_kernel,
                               batch_block=bb, seq_len=N,
                               num_heads=num_heads, head_dim=head_dim,
                               eps=eps, approx_recip=approx_recip)

    def row_spec(c):
        return pl.BlockSpec((rows_blk, c), lambda i: (i, 0))

    def const_spec(arr):                 # full array, resident across grid steps
        return pl.BlockSpec(arr.shape, lambda i, n=arr.ndim: (0,) * n)

    out2 = pl.pallas_call(
        kernel,
        out_shape=jax.ShapeDtypeStruct((B * N, dim), label_rep.dtype),
        grid_spec=pl.GridSpec(
            grid=grid,
            in_specs=[row_spec(dim), row_spec(abs_dim),
                      const_spec(wx), const_spec(we), const_spec(bqkv),
                      const_spec(wp), const_spec(aff)],
            out_specs=row_spec(dim),
        ),
        # Single grid step for tiny problems; for v7x cross-core sharding the
        # batch axis could be marked CORE_PARALLEL once per-step work >> 0.35us.
        compiler_params=pltpu.CompilerParams(
            dimension_semantics=("arbitrary",),
            vmem_limit_bytes=32 * 1024 * 1024),
    )(x2, e2, wx, we, bqkv, wp, aff)
    return out2.reshape(B, N, dim)


def init_params(key, dim, qk_dim):
    ks = jax.random.split(key, 8)

    def lin(kw, kb, fan_in, fan_out):
        bound = 1.0 / (fan_in ** 0.5)
        w = jax.random.uniform(kw, (fan_in, fan_out), jnp.float32, -bound, bound)
        b = jax.random.uniform(kb, (1, fan_out), jnp.float32, -bound, bound)
        return w, b

    wq, bq = lin(ks[0], ks[1], qk_dim, dim)
    wk, bk = lin(ks[2], ks[3], qk_dim, dim)
    wv, bv = lin(ks[4], ks[5], dim, dim)
    wp, bp = lin(ks[6], ks[7], dim, dim)
    return dict(wq=wq, bq=bq, wk=wk, bk=bk, wv=wv, bv=bv, wp=wp, bp=bp,
                gamma=jnp.ones((1, dim), jnp.float32),
                beta=jnp.zeros((1, dim), jnp.float32))


def reference(label_rep, abs_encoding, p, num_heads, eps=1e-5):
    B, N, dim = label_rep.shape
    head_dim = dim // num_heads
    scale = head_dim ** (-0.5)
    qk = jnp.concatenate([label_rep, abs_encoding], axis=-1)
    q = qk @ p["wq"] + p["bq"]
    k = qk @ p["wk"] + p["bk"]
    v = label_rep @ p["wv"] + p["bv"]
    q = q.reshape(B, N, num_heads, head_dim).transpose(0, 2, 1, 3)
    k = k.reshape(B, N, num_heads, head_dim).transpose(0, 2, 1, 3)
    v = v.reshape(B, N, num_heads, head_dim).transpose(0, 2, 1, 3)
    attn = jax.nn.softmax(jnp.einsum("bhid,bhjd->bhij", q, k) * scale, axis=-1)
    out = jnp.einsum("bhij,bhjd->bhid", attn, v)
    out = out.transpose(0, 2, 1, 3).reshape(B, N, dim)
    y = label_rep + (out @ p["wp"] + p["bp"])
    mu = jnp.mean(y, axis=-1, keepdims=True)
    var = jnp.mean((y - mu) ** 2, axis=-1, keepdims=True)
    return (y - mu) / jnp.sqrt(var + eps) * p["gamma"] + p["beta"]


if __name__ == "__main__":
    num_heads = 8
    # Second config exercises a larger batch block in the single grid step.
    for (B, N, dim, abs_dim) in [(2, 8, 32, 16), (8, 8, 32, 16)]:
        qk_dim = dim + abs_dim
        key = jax.random.PRNGKey(0)
        k1, k2, k3 = jax.random.split(key, 3)
        label_rep = jax.random.normal(k1, (B, N, dim), jnp.float32)
        abs_encoding = jax.random.normal(k2, (B, N, abs_dim), jnp.float32)
        params = init_params(k3, dim, qk_dim)

        ref = reference(label_rep, abs_encoding, params, num_heads)

        # Strict numerics check: f32 MXU operands + exact reciprocal.
        out_f32 = basic_attention(label_rep, abs_encoding, params,
                                  num_heads=num_heads,
                                  compute_dtype=jnp.float32,
                                  approx_recip=False)
        out_f32 = jax.block_until_ready(out_f32)
        assert out_f32.shape == (B, N, dim)
        err = float(jnp.max(jnp.abs(out_f32 - ref)))
        assert err < 2e-4, f"f32 max abs err {err} at B={B}"

        # Default fast path: bf16 MXU operands + approximate (EUP) reciprocal.
        out_bf16 = basic_attention(label_rep, abs_encoding, params,
                                   num_heads=num_heads)
        out_bf16 = jax.block_until_ready(out_bf16)
        err = float(jnp.max(jnp.abs(out_bf16 - ref)))
        assert err < 1.5e-1, f"bf16 max abs err {err} at B={B}"

    print("KERNEL_OK")
</pallas_src>

<mosaic_0001>
module attributes {stable_mosaic.version = 11 : i64} {
  func.func @_attention_kernel(%arg0: i32, %arg1: memref<16x32xf32, #tpu.memory_space<vmem>>, %arg2: memref<16x16xf32, #tpu.memory_space<vmem>>, %arg3: memref<32x96xf32, #tpu.memory_space<vmem>>, %arg4: memref<16x96xf32, #tpu.memory_space<vmem>>, %arg5: memref<1x96xf32, #tpu.memory_space<vmem>>, %arg6: memref<32x32xf32, #tpu.memory_space<vmem>>, %arg7: memref<3x32xf32, #tpu.memory_space<vmem>>, %arg8: memref<16x32xf32, #tpu.memory_space<vmem>>) attributes {dimension_semantics = [#tpu.dimension_semantics<arbitrary>], iteration_bounds = array<i64: 1>, scalar_prefetch = 0 : i64, scratch_operands = 0 : i64, tpu.core_type = #tpu.core_type<tc>, window_params = [{transform_indices = @transform_0, window_bounds = array<i64: 16, 32>}, {transform_indices = @transform_1, window_bounds = array<i64: 16, 16>}, {pipeline_mode = #tpu.pipeline_mode<synchronous>, transform_indices = @transform_2, window_bounds = array<i64: 32, 96>}, {pipeline_mode = #tpu.pipeline_mode<synchronous>, transform_indices = @transform_3, window_bounds = array<i64: 16, 96>}, {pipeline_mode = #tpu.pipeline_mode<synchronous>, transform_indices = @transform_4, window_bounds = array<i64: 1, 96>}, {pipeline_mode = #tpu.pipeline_mode<synchronous>, transform_indices = @transform_5, window_bounds = array<i64: 32, 32>}, {pipeline_mode = #tpu.pipeline_mode<synchronous>, transform_indices = @transform_6, window_bounds = array<i64: 3, 32>}, {transform_indices = @transform_7, window_bounds = array<i64: 16, 32>}]} {
    %c0 = arith.constant 0 : index
    %c0_0 = arith.constant 0 : index
    %0 = vector.load %arg1[%c0, %c0_0] : memref<16x32xf32, #tpu.memory_space<vmem>>, vector<16x32xf32>
    %c0_1 = arith.constant 0 : index
    %c0_2 = arith.constant 0 : index
    %1 = vector.load %arg2[%c0_1, %c0_2] : memref<16x16xf32, #tpu.memory_space<vmem>>, vector<16x16xf32>
    %c0_3 = arith.constant 0 : index
    %c0_4 = arith.constant 0 : index
    %2 = vector.load %arg3[%c0_3, %c0_4] : memref<32x96xf32, #tpu.memory_space<vmem>>, vector<32x96xf32>
    %cst = arith.constant dense<0.000000e+00> : vector<16x96xf32>
    %3 = tpu.matmul %0, %2, %cst {dimension_numbers = #tpu.dot_dimension_numbers<[1], [0], [0], [1], [0, 0, 1, 1], [], []>} : vector<16x32xf32>, vector<32x96xf32>, vector<16x96xf32> -> vector<16x96xf32>
    %c0_5 = arith.constant 0 : index
    %c0_6 = arith.constant 0 : index
    %4 = vector.load %arg4[%c0_5, %c0_6] : memref<16x96xf32, #tpu.memory_space<vmem>>, vector<16x96xf32>
    %cst_7 = arith.constant dense<0.000000e+00> : vector<16x96xf32>
    %5 = tpu.matmul %1, %4, %cst_7 {dimension_numbers = #tpu.dot_dimension_numbers<[1], [0], [0], [1], [0, 0, 1, 1], [], []>} : vector<16x16xf32>, vector<16x96xf32>, vector<16x96xf32> -> vector<16x96xf32>
    %6 = arith.addf %3, %5 : vector<16x96xf32>
    %c0_8 = arith.constant 0 : index
    %c0_9 = arith.constant 0 : index
    %7 = vector.load %arg5[%c0_8, %c0_9] : memref<1x96xf32, #tpu.memory_space<vmem>>, vector<1x96xf32>
    %8 = vector.broadcast %7 : vector<1x96xf32> to vector<16x96xf32>
    %9 = arith.addf %6, %8 : vector<16x96xf32>
    %10 = vector.shape_cast %9 : vector<16x96xf32> to vector<2x8x96xf32>
    %11 = vector.extract_strided_slice %10 {offsets = [0, 0, 0], sizes = [2, 8, 4], strides = [1, 1, 1]} : vector<2x8x96xf32> to vector<2x8x4xf32>
    %12 = vector.extract_strided_slice %10 {offsets = [0, 0, 4], sizes = [2, 8, 4], strides = [1, 1, 1]} : vector<2x8x96xf32> to vector<2x8x4xf32>
    %13 = vector.extract_strided_slice %10 {offsets = [0, 0, 8], sizes = [2, 8, 4], strides = [1, 1, 1]} : vector<2x8x96xf32> to vector<2x8x4xf32>
    %14 = vector.extract_strided_slice %10 {offsets = [0, 0, 12], sizes = [2, 8, 4], strides = [1, 1, 1]} : vector<2x8x96xf32> to vector<2x8x4xf32>
    %15 = vector.extract_strided_slice %10 {offsets = [0, 0, 16], sizes = [2, 8, 4], strides = [1, 1, 1]} : vector<2x8x96xf32> to vector<2x8x4xf32>
    %16 = vector.extract_strided_slice %10 {offsets = [0, 0, 20], sizes = [2, 8, 4], strides = [1, 1, 1]} : vector<2x8x96xf32> to vector<2x8x4xf32>
    %17 = vector.extract_strided_slice %10 {offsets = [0, 0, 24], sizes = [2, 8, 4], strides = [1, 1, 1]} : vector<2x8x96xf32> to vector<2x8x4xf32>
    %18 = vector.extract_strided_slice %10 {offsets = [0, 0, 28], sizes = [2, 8, 4], strides = [1, 1, 1]} : vector<2x8x96xf32> to vector<2x8x4xf32>
    %19 = tpu.concatenate %11, %12, %13, %14, %15, %16, %17, %18 in 0 : vector<2x8x4xf32>, vector<2x8x4xf32>, vector<2x8x4xf32>, vector<2x8x4xf32>, vector<2x8x4xf32>, vector<2x8x4xf32>, vector<2x8x4xf32>, vector<2x8x4xf32> -> vector<16x8x4xf32>
    %20 = vector.extract_strided_slice %10 {offsets = [0, 0, 32], sizes = [2, 8, 4], strides = [1, 1, 1]} : vector<2x8x96xf32> to vector<2x8x4xf32>
    %21 = vector.extract_strided_slice %10 {offsets = [0, 0, 36], sizes = [2, 8, 4], strides = [1, 1, 1]} : vector<2x8x96xf32> to vector<2x8x4xf32>
    %22 = vector.extract_strided_slice %10 {offsets = [0, 0, 40], sizes = [2, 8, 4], strides = [1, 1, 1]} : vector<2x8x96xf32> to vector<2x8x4xf32>
    %23 = vector.extract_strided_slice %10 {offsets = [0, 0, 44], sizes = [2, 8, 4], strides = [1, 1, 1]} : vector<2x8x96xf32> to vector<2x8x4xf32>
    %24 = vector.extract_strided_slice %10 {offsets = [0, 0, 48], sizes = [2, 8, 4], strides = [1, 1, 1]} : vector<2x8x96xf32> to vector<2x8x4xf32>
    %25 = vector.extract_strided_slice %10 {offsets = [0, 0, 52], sizes = [2, 8, 4], strides = [1, 1, 1]} : vector<2x8x96xf32> to vector<2x8x4xf32>
    %26 = vector.extract_strided_slice %10 {offsets = [0, 0, 56], sizes = [2, 8, 4], strides = [1, 1, 1]} : vector<2x8x96xf32> to vector<2x8x4xf32>
    %27 = vector.extract_strided_slice %10 {offsets = [0, 0, 60], sizes = [2, 8, 4], strides = [1, 1, 1]} : vector<2x8x96xf32> to vector<2x8x4xf32>
    %28 = tpu.concatenate %20, %21, %22, %23, %24, %25, %26, %27 in 0 : vector<2x8x4xf32>, vector<2x8x4xf32>, vector<2x8x4xf32>, vector<2x8x4xf32>, vector<2x8x4xf32>, vector<2x8x4xf32>, vector<2x8x4xf32>, vector<2x8x4xf32> -> vector<16x8x4xf32>
    %29 = vector.extract_strided_slice %10 {offsets = [0, 0, 64], sizes = [2, 8, 4], strides = [1, 1, 1]} : vector<2x8x96xf32> to vector<2x8x4xf32>
    %30 = vector.extract_strided_slice %10 {offsets = [0, 0, 68], sizes = [2, 8, 4], strides = [1, 1, 1]} : vector<2x8x96xf32> to vector<2x8x4xf32>
    %31 = vector.extract_strided_slice %10 {offsets = [0, 0, 72], sizes = [2, 8, 4], strides = [1, 1, 1]} : vector<2x8x96xf32> to vector<2x8x4xf32>
    %32 = vector.extract_strided_slice %10 {offsets = [0, 0, 76], sizes = [2, 8, 4], strides = [1, 1, 1]} : vector<2x8x96xf32> to vector<2x8x4xf32>
    %33 = vector.extract_strided_slice %10 {offsets = [0, 0, 80], sizes = [2, 8, 4], strides = [1, 1, 1]} : vector<2x8x96xf32> to vector<2x8x4xf32>
    %34 = vector.extract_strided_slice %10 {offsets = [0, 0, 84], sizes = [2, 8, 4], strides = [1, 1, 1]} : vector<2x8x96xf32> to vector<2x8x4xf32>
    %35 = vector.extract_strided_slice %10 {offsets = [0, 0, 88], sizes = [2, 8, 4], strides = [1, 1, 1]} : vector<2x8x96xf32> to vector<2x8x4xf32>
    %36 = vector.extract_strided_slice %10 {offsets = [0, 0, 92], sizes = [2, 8, 4], strides = [1, 1, 1]} : vector<2x8x96xf32> to vector<2x8x4xf32>
    %37 = tpu.concatenate %29, %30, %31, %32, %33, %34, %35, %36 in 0 : vector<2x8x4xf32>, vector<2x8x4xf32>, vector<2x8x4xf32>, vector<2x8x4xf32>, vector<2x8x4xf32>, vector<2x8x4xf32>, vector<2x8x4xf32>, vector<2x8x4xf32> -> vector<16x8x4xf32>
    "tpu.trace_start"() <{level = 10 : i32, message = "bnd,bmd->bnm"}> : () -> ()
    %cst_10 = arith.constant dense<0.000000e+00> : vector<16x8x8xf32>
    %38 = tpu.matmul %19, %28, %cst_10 {dimension_numbers = #tpu.dot_dimension_numbers<[2], [2], [1], [1], [0, 0, 0, 1, 1, 1], [0], [0]>} : vector<16x8x4xf32>, vector<16x8x4xf32>, vector<16x8x8xf32> -> vector<16x8x8xf32>
    "tpu.trace_stop"() : () -> ()
    %cst_11 = arith.constant dense<0xFF800000> : vector<16x8xf32>
    %39 = vector.multi_reduction <maximumf>, %38, %cst_11 [2] : vector<16x8x8xf32> to vector<16x8xf32>
    %40 = vector.shape_cast %39 : vector<16x8xf32> to vector<16x8x1xf32>
    %41 = vector.broadcast %40 : vector<16x8x1xf32> to vector<16x8x8xf32>
    %42 = arith.subf %38, %41 : vector<16x8x8xf32>
    %43 = math.exp %42 : vector<16x8x8xf32>
    %cst_12 = arith.constant dense<0.000000e+00> : vector<16x8xf32>
    %44 = vector.multi_reduction <add>, %43, %cst_12 [2] : vector<16x8x8xf32> to vector<16x8xf32>
    %45 = vector.shape_cast %44 : vector<16x8xf32> to vector<16x8x1xf32>
    "tpu.trace_start"() <{level = 10 : i32, message = "bnm,bmd->bnd"}> : () -> ()
    %cst_13 = arith.constant dense<0.000000e+00> : vector<16x8x4xf32>
    %46 = tpu.matmul %43, %37, %cst_13 {dimension_numbers = #tpu.dot_dimension_numbers<[2], [1], [1], [2], [0, 0, 0, 1, 1, 2], [0], [0]>} : vector<16x8x8xf32>, vector<16x8x4xf32>, vector<16x8x4xf32> -> vector<16x8x4xf32>
    "tpu.trace_stop"() : () -> ()
    %47 = tpu.reciprocal %45 : vector<16x8x1xf32> -> vector<16x8x1xf32>
    %48 = vector.broadcast %47 : vector<16x8x1xf32> to vector<16x8x4xf32>
    %49 = arith.mulf %46, %48 : vector<16x8x4xf32>
    %50 = vector.extract_strided_slice %49 {offsets = [0, 0, 0], sizes = [2, 8, 4], strides = [1, 1, 1]} : vector<16x8x4xf32> to vector<2x8x4xf32>
    %51 = vector.extract_strided_slice %49 {offsets = [2, 0, 0], sizes = [2, 8, 4], strides = [1, 1, 1]} : vector<16x8x4xf32> to vector<2x8x4xf32>
    %52 = vector.extract_strided_slice %49 {offsets = [4, 0, 0], sizes = [2, 8, 4], strides = [1, 1, 1]} : vector<16x8x4xf32> to vector<2x8x4xf32>
    %53 = vector.extract_strided_slice %49 {offsets = [6, 0, 0], sizes = [2, 8, 4], strides = [1, 1, 1]} : vector<16x8x4xf32> to vector<2x8x4xf32>
    %54 = vector.extract_strided_slice %49 {offsets = [8, 0, 0], sizes = [2, 8, 4], strides = [1, 1, 1]} : vector<16x8x4xf32> to vector<2x8x4xf32>
    %55 = vector.extract_strided_slice %49 {offsets = [10, 0, 0], sizes = [2, 8, 4], strides = [1, 1, 1]} : vector<16x8x4xf32> to vector<2x8x4xf32>
    %56 = vector.extract_strided_slice %49 {offsets = [12, 0, 0], sizes = [2, 8, 4], strides = [1, 1, 1]} : vector<16x8x4xf32> to vector<2x8x4xf32>
    %57 = vector.extract_strided_slice %49 {offsets = [14, 0, 0], sizes = [2, 8, 4], strides = [1, 1, 1]} : vector<16x8x4xf32> to vector<2x8x4xf32>
    %58 = tpu.concatenate %50, %51, %52, %53, %54, %55, %56, %57 in 2 : vector<2x8x4xf32>, vector<2x8x4xf32>, vector<2x8x4xf32>, vector<2x8x4xf32>, vector<2x8x4xf32>, vector<2x8x4xf32>, vector<2x8x4xf32>, vector<2x8x4xf32> -> vector<2x8x32xf32>
    %59 = vector.shape_cast %58 : vector<2x8x32xf32> to vector<16x32xf32>
    %c0_14 = arith.constant 0 : index
    %c0_15 = arith.constant 0 : index
    %60 = vector.load %arg7[%c0_14, %c0_15] : memref<3x32xf32, #tpu.memory_space<vmem>>, vector<3x32xf32>
    %c0_16 = arith.constant 0 : index
    %c0_17 = arith.constant 0 : index
    %61 = vector.load %arg6[%c0_16, %c0_17] : memref<32x32xf32, #tpu.memory_space<vmem>>, vector<32x32xf32>
    %cst_18 = arith.constant dense<0.000000e+00> : vector<16x32xf32>
    %62 = tpu.matmul %59, %61, %cst_18 {dimension_numbers = #tpu.dot_dimension_numbers<[1], [0], [0], [1], [0, 0, 1, 1], [], []>} : vector<16x32xf32>, vector<32x32xf32>, vector<16x32xf32> -> vector<16x32xf32>
    %63 = arith.addf %0, %62 : vector<16x32xf32>
    %64 = vector.extract_strided_slice %60 {offsets = [0, 0], sizes = [1, 32], strides = [1, 1]} : vector<3x32xf32> to vector<1x32xf32>
    %65 = vector.broadcast %64 : vector<1x32xf32> to vector<16x32xf32>
    %66 = arith.addf %63, %65 : vector<16x32xf32>
    %cst_19 = arith.constant dense<0.000000e+00> : vector<16xf32>
    %67 = vector.multi_reduction <add>, %66, %cst_19 [1] : vector<16x32xf32> to vector<16xf32>
    %68 = vector.shape_cast %67 : vector<16xf32> to vector<16x1xf32>
    %cst_20 = arith.constant 3.200000e+01 : f32
    %69 = vector.broadcast %cst_20 : f32 to vector<16x1xf32>
    %70 = arith.divf %68, %69 : vector<16x1xf32>
    %71 = arith.mulf %66, %66 : vector<16x32xf32>
    %cst_21 = arith.constant dense<0.000000e+00> : vector<16xf32>
    %72 = vector.multi_reduction <add>, %71, %cst_21 [1] : vector<16x32xf32> to vector<16xf32>
    %73 = vector.shape_cast %72 : vector<16xf32> to vector<16x1xf32>
    %cst_22 = arith.constant 3.200000e+01 : f32
    %74 = vector.broadcast %cst_22 : f32 to vector<16x1xf32>
    %75 = arith.divf %73, %74 : vector<16x1xf32>
    %76 = vector.broadcast %70 : vector<16x1xf32> to vector<16x32xf32>
    %77 = arith.subf %66, %76 : vector<16x32xf32>
    %78 = arith.mulf %70, %70 : vector<16x1xf32>
    %79 = arith.subf %75, %78 : vector<16x1xf32>
    %cst_23 = arith.constant 9.99999974E-6 : f32
    %80 = vector.broadcast %cst_23 : f32 to vector<16x1xf32>
    %81 = arith.addf %79, %80 : vector<16x1xf32>
    %82 = math.rsqrt %81 : vector<16x1xf32>
    %83 = vector.broadcast %82 : vector<16x1xf32> to vector<16x32xf32>
    %84 = arith.mulf %77, %83 : vector<16x32xf32>
    %85 = vector.extract_strided_slice %60 {offsets = [1, 0], sizes = [1, 32], strides = [1, 1]} : vector<3x32xf32> to vector<1x32xf32>
    %86 = vector.broadcast %85 : vector<1x32xf32> to vector<16x32xf32>
    %87 = arith.mulf %84, %86 : vector<16x32xf32>
    %88 = vector.extract_strided_slice %60 {offsets = [2, 0], sizes = [1, 32], strides = [1, 1]} : vector<3x32xf32> to vector<1x32xf32>
    %89 = vector.broadcast %88 : vector<1x32xf32> to vector<16x32xf32>
    %90 = arith.addf %87, %89 : vector<16x32xf32>
    %c0_24 = arith.constant 0 : index
    %c0_25 = arith.constant 0 : index
    %91 = vector.load %arg8[%c0_24, %c0_25] : memref<16x32xf32, #tpu.memory_space<vmem>>, vector<16x32xf32>
    tpu.vector_store %arg8[%c0_24, %c0_25], %90 {strides = array<i32>} : memref<16x32xf32, #tpu.memory_space<vmem>>, vector<16x32xf32>,
    return
  }
  func.func @transform_0(%arg0: i32) -> (i32, i32) {
    %c0_i32 = arith.constant 0 : i32
    %c0_i32_0 = arith.constant 0 : i32
    return %arg0, %c0_i32 : i32, i32
  }
  func.func @transform_1(%arg0: i32) -> (i32, i32) {
    %c0_i32 = arith.constant 0 : i32
    %c0_i32_0 = arith.constant 0 : i32
    return %arg0, %c0_i32 : i32, i32
  }
  func.func @transform_2(%arg0: i32) -> (i32, i32) {
    %c0_i32 = arith.constant 0 : i32
    %c0_i32_0 = arith.constant 0 : i32
    %c0_i32_1 = arith.constant 0 : i32
    return %c0_i32, %c0_i32_0 : i32, i32
  }
  func.func @transform_3(%arg0: i32) -> (i32, i32) {
    %c0_i32 = arith.constant 0 : i32
    %c0_i32_0 = arith.constant 0 : i32
    %c0_i32_1 = arith.constant 0 : i32
    return %c0_i32, %c0_i32_0 : i32, i32
  }
  func.func @transform_4(%arg0: i32) -> (i32, i32) {
    %c0_i32 = arith.constant 0 : i32
    %c0_i32_0 = arith.constant 0 : i32
    %c0_i32_1 = arith.constant 0 : i32
    return %c0_i32, %c0_i32_0 : i32, i32
  }
  func.func @transform_5(%arg0: i32) -> (i32, i32) {
    %c0_i32 = arith.constant 0 : i32
    %c0_i32_0 = arith.constant 0 : i32
    %c0_i32_1 = arith.constant 0 : i32
    return %c0_i32, %c0_i32_0 : i32, i32
  }
  func.func @transform_6(%arg0: i32) -> (i32, i32) {
    %c0_i32 = arith.constant 0 : i32
    %c0_i32_0 = arith.constant 0 : i32
    %c0_i32_1 = arith.constant 0 : i32
    return %c0_i32, %c0_i32_0 : i32, i32
  }
  func.func @transform_7(%arg0: i32) -> (i32, i32) {
    %c0_i32 = arith.constant 0 : i32
    %c0_i32_0 = arith.constant 0 : i32
    return %arg0, %c0_i32 : i32, i32
  }
}

</mosaic_0001>

<llo_original>
// kernel: tpu_custom_call.1
$region0: #{tpu_custom_call.1}
  #allocation0 [shape = 'u32[]', space=smem, size = 0x4, offset = 0x4, fixed_abs, tag = 'smem constant byte address 0x4 - core index']
  #allocation1 [shape = 'u32[144,128]{1,0:T(1,128)}', space=vmem, size = 0x12000, scoped, tag = 'internal scratch']
  %s0 = inlined_call_operand.hbm [shape: f32[16,32], index: 0, kind: input, shape index: {}]
  %s1 = inlined_call_operand.hbm [shape: f32[16,16], index: 1, kind: input, shape index: {}]
  %s2 = inlined_call_operand.hbm [shape: f32[32,96], index: 2, kind: input, shape index: {}]
  %s3 = inlined_call_operand.hbm [shape: f32[16,96], index: 3, kind: input, shape index: {}]
  %s4 = inlined_call_operand.vmem [shape: f32[1,96], index: 4, kind: input, shape index: {}]
  %s5 = inlined_call_operand.hbm [shape: f32[32,32], index: 5, kind: input, shape index: {}]
  %s6 = inlined_call_operand.vmem [shape: f32[3,32], index: 6, kind: input, shape index: {}]
  %s7 = inlined_call_operand.hbm [shape: f32[16,32], index: 7, kind: output, shape index: {}]
  %s8 = sld [smem:[#allocation0]]
  $region58: #{tpu_custom_call.1} parent=0
    _
  %s10 = ssub.s32 1, %s8
  %s11 = scalar_select 0, %s10, %s8
  $region1: #{tpu_custom_call.1} parent=0
    #allocation2 [shape = 'u8[8192]{0}', space=vmem, size = 0x2000, scoped, tag = 'input window, operand 0, single buffered']
    #allocation3 [shape = 's32[1]{0}', space=sflag, size = 0x4, scoped, tag = 'scoped memory for tpu_custom_call.1']
    #allocation4 [shape = 's32[1]{0}', space=sflag, size = 0x4, scoped, tag = 'scoped memory for tpu_custom_call.1']
    #allocation5 [shape = 'u8[8192]{0}', space=vmem, size = 0x2000, scoped, tag = 'input window, operand 1, single buffered']
    #allocation6 [shape = 's32[1]{0}', space=sflag, size = 0x4, scoped, tag = 'scoped memory for tpu_custom_call.1']
    #allocation7 [shape = 'u8[16384]{0}', space=vmem, size = 0x4000, scoped, tag = 'input window, operand 2, single buffered']
    #allocation8 [shape = 'u8[8192]{0}', space=vmem, size = 0x2000, scoped, tag = 'input window, operand 3, single buffered']
    #allocation9 [shape = 's32[1]{0}', space=sflag, size = 0x4, scoped, tag = 'scoped memory for tpu_custom_call.1']
    #allocation10 [shape = 'u8[16384]{0}', space=vmem, size = 0x4000, scoped, tag = 'input window, operand 5, single buffered']
    #allocation11 [shape = 'u8[8192]{0}', space=vmem, size = 0x2000, scoped, tag = 'output window, operand 0, single buffered']
    %12 = vsyncpa [#allocation3], 0
    %13 = vsyncpa [#allocation6], 0
    %14 = vsyncpa [#allocation9], 0
    %15 = vsyncpa [#allocation4], 0
    // Predicated region
    $region2: #{tpu_custom_call.1} parent=1 // pred_check
      _
    $region3: #{tpu_custom_call.1} parent=1 // pred_check_branch
      %17 = sbr.rel (0) target = $region5
    $region4: #{tpu_custom_call.1} parent=1 // pred_region
      %s19 = ssub.s32 256, 256
      %20 = vsyncadd [#allocation3], %s19
      %s21 = sshll.u32 [#allocation2], 4
      %s22 = int_to_ptr.vmem [resolvable:$true] %s21
      %27 = dma.hbm_to_vmem [thread:$0]  %s0, 256, %s22, [#allocation3], 128, 128, 8
    $region5: #{tpu_custom_call.1} parent=1 // pred_fallthru
      _
    // Predicated region
    $region6: #{tpu_custom_call.1} parent=1 // pred_check
      _
    $region7: #{tpu_custom_call.1} parent=1 // pred_check_branch
      %29 = sbr.rel (0) target = $region9
    $region8: #{tpu_custom_call.1} parent=1 // pred_region
      %s31 = ssub.s32 256, 256
      %32 = vsyncadd [#allocation6], %s31
      %s33 = sshll.u32 [#allocation5], 4
      %s34 = int_to_ptr.vmem [resolvable:$true] %s33
      %39 = dma.hbm_to_vmem [thread:$0]  %s1, 256, %s34, [#allocation6], 128, 128, 8
    $region9: #{tpu_custom_call.1} parent=1 // pred_fallthru
      _
    // Predicated region
    $region10: #{tpu_custom_call.1} parent=1 // pred_check
      _
    $region11: #{tpu_custom_call.1} parent=1 // pred_check_branch
      %41 = sbr.rel (0) target = $region13
    $region12: #{tpu_custom_call.1} parent=1 // pred_region
      %s43 = ssub.s32 512, 512
      %44 = vsyncadd [#allocation6], %s43
      %s45 = sshll.u32 [#allocation7], 4
      %s46 = int_to_ptr.vmem [resolvable:$true] %s45
      %51 = dma.hbm_to_vmem [thread:$0]  %s2, 512, %s46, [#allocation6], 128, 128, 8
    $region13: #{tpu_custom_call.1} parent=1 // pred_fallthru
      _
    // Predicated region
    $region14: #{tpu_custom_call.1} parent=1 // pred_check
      _
    $region15: #{tpu_custom_call.1} parent=1 // pred_check_branch
      %53 = sbr.rel (0) target = $region17
    $region16: #{tpu_custom_call.1} parent=1 // pred_region
      %s55 = ssub.s32 256, 256
      %56 = vsyncadd [#allocation9], %s55
      %s57 = sshll.u32 [#allocation8], 4
      %s58 = int_to_ptr.vmem [resolvable:$true] %s57
      %63 = dma.hbm_to_vmem [thread:$0]  %s3, 256, %s58, [#allocation9], 128, 128, 8
    $region17: #{tpu_custom_call.1} parent=1 // pred_fallthru
      _
    // Predicated region
    $region18: #{tpu_custom_call.1} parent=1 // pred_check
      _
    $region19: #{tpu_custom_call.1} parent=1 // pred_check_branch
      %65 = sbr.rel (0) target = $region21
    $region20: #{tpu_custom_call.1} parent=1 // pred_region
      _
    $region21: #{tpu_custom_call.1} parent=1 // pred_fallthru
      _
    // Predicated region
    $region22: #{tpu_custom_call.1} parent=1 // pred_check
      _
    $region23: #{tpu_custom_call.1} parent=1 // pred_check_branch
      %67 = sbr.rel (0) target = $region25
    $region24: #{tpu_custom_call.1} parent=1 // pred_region
      %s69 = ssub.s32 512, 512
      %70 = vsyncadd [#allocation9], %s69
      %s71 = sshll.u32 [#allocation10], 4
      %s72 = int_to_ptr.vmem [resolvable:$true] %s71
      %77 = dma.hbm_to_vmem [thread:$0]  %s5, 512, %s72, [#allocation9], 128, 128, 8
    $region25: #{tpu_custom_call.1} parent=1 // pred_fallthru
      _
    // Predicated region
    $region26: #{tpu_custom_call.1} parent=1 // pred_check
      _
    $region27: #{tpu_custom_call.1} parent=1 // pred_check_branch
      %79 = sbr.rel (0) target = $region29
    $region28: #{tpu_custom_call.1} parent=1 // pred_region
      _
    $region29: #{tpu_custom_call.1} parent=1 // pred_fallthru
      _
    // Predicated region
    $region30: #{tpu_custom_call.1} parent=1 // pred_check
      _
    $region31: #{tpu_custom_call.1} parent=1 // pred_check_branch
      %81 = sbr.rel (0) target = $region33
    $region32: #{tpu_custom_call.1} parent=1 // pred_region
      %82 = dma.done [#allocation3], 256
    $region33: #{tpu_custom_call.1} parent=1 // pred_fallthru
      _
    // Predicated region
    $region34: #{tpu_custom_call.1} parent=1 // pred_check
      _
    $region35: #{tpu_custom_call.1} parent=1 // pred_check_branch
      %84 = sbr.rel (0) target = $region37
    $region36: #{tpu_custom_call.1} parent=1 // pred_region
      %85 = dma.done [#allocation6], 256
    $region37: #{tpu_custom_call.1} parent=1 // pred_fallthru
      _
    // Predicated region
    $region38: #{tpu_custom_call.1} parent=1 // pred_check
      _
    $region39: #{tpu_custom_call.1} parent=1 // pred_check_branch
      %87 = sbr.rel (0) target = $region41
    $region40: #{tpu_custom_call.1} parent=1 // pred_region
      %88 = dma.done [#allocation6], 512
    $region41: #{tpu_custom_call.1} parent=1 // pred_fallthru
      _
    // Predicated region
    $region42: #{tpu_custom_call.1} parent=1 // pred_check
      _
    $region43: #{tpu_custom_call.1} parent=1 // pred_check_branch
      %90 = sbr.rel (0) target = $region45
    $region44: #{tpu_custom_call.1} parent=1 // pred_region
      %91 = dma.done [#allocation9], 256
    $region45: #{tpu_custom_call.1} parent=1 // pred_fallthru
      _
    // Predicated region
    $region46: #{tpu_custom_call.1} parent=1 // pred_check
      _
    $region47: #{tpu_custom_call.1} parent=1 // pred_check_branch
      %93 = sbr.rel (0) target = $region49
    $region48: #{tpu_custom_call.1} parent=1 // pred_region
      %94 = dma.done [#allocation9], 512
    $region49: #{tpu_custom_call.1} parent=1 // pred_fallthru
      _
    %v95 = vld [vmem:[#allocation2] sm:$0xff]
    %v96 = vld [vmem:[#allocation2 + $0x8] sm:$0xff]
    %v97 = vld [vmem:[#allocation5] sm:$0xff]
    %v98 = vld [vmem:[#allocation5 + $0x8] sm:$0xff]
    %v99 = vld [vmem:[#allocation7] sm:$0xff]
    %v100 = vld [vmem:[#allocation7 + $0x8] sm:$0xff]
    %v101 = vld [vmem:[#allocation7 + $0x10] sm:$0xff]
    %v102 = vld [vmem:[#allocation7 + $0x18] sm:$0xff]
    %v103 = vld [vmem:[#allocation8] sm:$0xff]
    %v104 = vld [vmem:[#allocation8 + $0x8] sm:$0xff]
    %vm105 = vcmask 130048
    %v107 = vsel %vm105, %v97, 0
    %v110 = vsel %vm105, %v98, 0
    %112 = vmatprep.subr.mxu0 0.0
    %113 = vmatpush1.msra.mxu0 %v103
    %114 = vmatprep.subr.mxu0 0.0
    %115 = vmatpush1.msra.mxu0 %v104
    %116 = vmatprep.subr.mxu0 0.0
    %117 = vmatpush1.msra.mxu0 0.0
    %118 = vmatprep.subr.mxu0 0.0
    %119 = vmatpush1.msra.mxu0 0.0
    %120 = vmatprep.subr.mxu0 0.0
    %121 = vmatpush1.msra.mxu0 0.0
    %122 = vmatprep.subr.mxu0 0.0
    %123 = vmatpush1.msra.mxu0 0.0
    %124 = vmatprep.subr.mxu0 0.0
    %125 = vmatpush1.msra.mxu0 0.0
    %126 = vmatprep.subr.mxu0 0.0
    %127 = vmatpush1.msra.mxu0 0.0
    %128 = vmatprep.subr.mxu0 0.0
    %129 = vmatpush1.msra.mxu0 0.0
    %130 = vmatprep.subr.mxu0 0.0
    %131 = vmatpush1.msra.mxu0 0.0
    %132 = vmatprep.subr.mxu0 0.0
    %133 = vmatpush1.msra.mxu0 0.0
    %134 = vmatprep.subr.mxu0 0.0
    %135 = vmatpush1.msra.mxu0 0.0
    %136 = vmatprep.subr.mxu0 0.0
    %137 = vmatpush1.msra.mxu0 0.0
    %138 = vmatprep.subr.mxu0 0.0
    %139 = vmatpush1.msra.mxu0 0.0
    %140 = vmatprep.subr.mxu0 0.0
    %141 = vmatpush1.msra.mxu0 0.0
    %142 = vmatprep.subr.mxu0 0.0
    %143 = vmatpush1.msra.mxu0 0.0
    %144 = vmatprep.subr.mxu0 0.0
    %145 = vmatpush1.msra.mxu0 0.0
    %146 = vmatprep.subr.mxu0 0.0
    %147 = vmatpush1.msra.mxu0 0.0
    %148 = vmatprep.subr.mxu0 0.0
    %149 = vmatpush1.msra.mxu0 0.0
    %150 = vmatprep.subr.mxu0 0.0
    %151 = vmatpush1.msra.mxu0 0.0
    %152 = vmatprep.subr.mxu0 0.0
    %153 = vmatpush1.msra.mxu0 0.0
    %154 = vmatprep.subr.mxu0 0.0
    %155 = vmatpush1.msra.mxu0 0.0
    %156 = vmatprep.subr.mxu0 0.0
    %157 = vmatpush1.msra.mxu0 0.0
    %158 = vmatprep.subr.mxu0 0.0
    %159 = vmatpush1.msra.mxu0 0.0
    %160 = vmatprep.subr.mxu0 0.0
    %161 = vmatpush1.msra.mxu0 0.0
    %162 = vmatprep.subr.mxu0 0.0
    %163 = vmatpush1.msra.mxu0 0.0
    %164 = vmatprep.subr.mxu0 0.0
    %165 = vmatpush1.msra.mxu0 0.0
    %166 = vmatprep.subr.mxu0 0.0
    %167 = vmatpush1.msra.mxu0 0.0
    %168 = vmatprep.subr.mxu0 0.0
    %169 = vmatpush1.msra.mxu0 0.0
    %170 = vmatprep.subr.mxu0 0.0
    %171 = vmatpush1.msra.mxu0 0.0
    %172 = vmatprep.subr.mxu0 0.0
    %173 = vmatpush1.msra.mxu0 0.0
    %174 = vmatprep.subr.mxu0 0.0
    %175 = vmatpush1.msra.mxu0 0.0
    %176 = vmatprep.mubr.f32.mxu0 0.0
    %177 = vmatmul.mubr.f32.gmra.mrb[0].mxu0 %v107
    %v178 = vpop.f32.mrb[0].mxu0
    %v179 = vadd.f32 0.0, %v178
    %v180 = vpop.f32.mrb[0].mxu0
    %181 = vmatprep.mubr.f32.mxu0 0.0
    %182 = vmatmul.mubr.f32.gmra.mrb[0].mxu0 %v110
    %v183 = vpop.f32.mrb[0].mxu0
    %v184 = vadd.f32 0.0, %v183
    %v185 = vpop.f32.mrb[0].mxu0
    %186 = vdwg.mxu0
    %vm187 = vcmask 261120
    %v189 = vsel %vm187, %v95, 0
    %v192 = vsel %vm187, %v96, 0
    %194 = vmatprep.subr.mxu0 0.0
    %195 = vmatpush1.msra.mxu0 %v99
    %196 = vmatprep.subr.mxu0 0.0
    %197 = vmatpush1.msra.mxu0 %v100
    %198 = vmatprep.subr.mxu0 0.0
    %199 = vmatpush1.msra.mxu0 %v101
    %200 = vmatprep.subr.mxu0 0.0
    %201 = vmatpush1.msra.mxu0 %v102
    %202 = vmatprep.subr.mxu0 0.0
    %203 = vmatpush1.msra.mxu0 0.0
    %204 = vmatprep.subr.mxu0 0.0
    %205 = vmatpush1.msra.mxu0 0.0
    %206 = vmatprep.subr.mxu0 0.0
    %207 = vmatpush1.msra.mxu0 0.0
    %208 = vmatprep.subr.mxu0 0.0
    %209 = vmatpush1.msra.mxu0 0.0
    %210 = vmatprep.subr.mxu0 0.0
    %211 = vmatpush1.msra.mxu0 0.0
    %212 = vmatprep.subr.mxu0 0.0
    %213 = vmatpush1.msra.mxu0 0.0
    %214 = vmatprep.subr.mxu0 0.0
    %215 = vmatpush1.msra.mxu0 0.0
    %216 = vmatprep.subr.mxu0 0.0
    %217 = vmatpush1.msra.mxu0 0.0
    %218 = vmatprep.subr.mxu0 0.0
    %219 = vmatpush1.msra.mxu0 0.0
    %220 = vmatprep.subr.mxu0 0.0
    %221 = vmatpush1.msra.mxu0 0.0
    %222 = vmatprep.subr.mxu0 0.0
    %223 = vmatpush1.msra.mxu0 0.0
    %224 = vmatprep.subr.mxu0 0.0
    %225 = vmatpush1.msra.mxu0 0.0
    %226 = vmatprep.subr.mxu0 0.0
    %227 = vmatpush1.msra.mxu0 0.0
    %228 = vmatprep.subr.mxu0 0.0
    %229 = vmatpush1.msra.mxu0 0.0
    %230 = vmatprep.subr.mxu0 0.0
    %231 = vmatpush1.msra.mxu0 0.0
    %232 = vmatprep.subr.mxu0 0.0
    %233 = vmatpush1.msra.mxu0 0.0
    %234 = vmatprep.subr.mxu0 0.0
    %235 = vmatpush1.msra.mxu0 0.0
    %236 = vmatprep.subr.mxu0 0.0
    %237 = vmatpush1.msra.mxu0 0.0
    %238 = vmatprep.subr.mxu0 0.0
    %239 = vmatpush1.msra.mxu0 0.0
    %240 = vmatprep.subr.mxu0 0.0
    %241 = vmatpush1.msra.mxu0 0.0
    %242 = vmatprep.subr.mxu0 0.0
    %243 = vmatpush1.msra.mxu0 0.0
    %244 = vmatprep.subr.mxu0 0.0
    %245 = vmatpush1.msra.mxu0 0.0
    %246 = vmatprep.subr.mxu0 0.0
    %247 = vmatpush1.msra.mxu0 0.0
    %248 = vmatprep.subr.mxu0 0.0
    %249 = vmatpush1.msra.mxu0 0.0
    %250 = vmatprep.subr.mxu0 0.0
    %251 = vmatpush1.msra.mxu0 0.0
    %252 = vmatprep.subr.mxu0 0.0
    %253 = vmatpush1.msra.mxu0 0.0
    %254 = vmatprep.subr.mxu0 0.0
    %255 = vmatpush1.msra.mxu0 0.0
    %256 = vmatprep.subr.mxu0 0.0
    %257 = vmatpush1.msra.mxu0 0.0
    %258 = vmatprep.mubr.f32.mxu0 0.0
    %259 = vmatmul.mubr.f32.gmra.mrb[0].mxu0 %v189
    %v260 = vpop.f32.mrb[0].mxu0
    %v261 = vadd.f32 %v179, %v260
    %v262 = vpop.f32.mrb[0].mxu0
    %263 = vmatprep.mubr.f32.mxu0 0.0
    %264 = vmatmul.mubr.f32.gmra.mrb[0].mxu0 %v192
    %v265 = vpop.f32.mrb[0].mxu0
    %v266 = vadd.f32 %v184, %v265
    %v267 = vpop.f32.mrb[0].mxu0
    %268 = vdwg.mxu0
    %v269 = vld [vmem:[%s4] sm:$0x1]
    %v271 = vlaneseq
    %v272 = vshrl.u32 %v271, 7
    %v273 = vsub.s32 0, %v272
    %v274 = vrot.slane %v269, %v273
    %v276 = vadd.f32 %v261, %v274
    %v277 = vadd.f32 %v266, %v274
    %280 = vrot.lane.b32.xlu0 %v276, 124
    %v281 = vpop.permute.xlu0 %280
    %282 = vrot.lane.b32.xlu0 %v277, 124
    %v283 = vpop.permute.xlu0 %282
    %284 = vrot.lane.b32.xlu0 %v276, 120
    %v285 = vpop.permute.xlu0 %284
    %286 = vrot.lane.b32.xlu0 %v277, 120
    %v287 = vpop.permute.xlu0 %286
    %288 = vrot.lane.b32.xlu0 %v276, 116
    %v289 = vpop.permute.xlu0 %288
    %290 = vrot.lane.b32.xlu0 %v277, 116
    %v291 = vpop.permute.xlu0 %290
    %292 = vrot.lane.b32.xlu0 %v276, 112
    %v293 = vpop.permute.xlu0 %292
    %294 = vrot.lane.b32.xlu0 %v277, 112
    %v295 = vpop.permute.xlu0 %294
    %296 = vrot.lane.b32.xlu0 %v276, 108
    %v297 = vpop.permute.xlu0 %296
    %298 = vrot.lane.b32.xlu0 %v277, 108
    %v299 = vpop.permute.xlu0 %298
    %300 = vrot.lane.b32.xlu0 %v276, 104
    %v301 = vpop.permute.xlu0 %300
    %302 = vrot.lane.b32.xlu0 %v277, 104
    %v303 = vpop.permute.xlu0 %302
    %304 = vrot.lane.b32.xlu0 %v276, 100
    %v305 = vpop.permute.xlu0 %304
    %306 = vrot.lane.b32.xlu0 %v277, 100
    %v307 = vpop.permute.xlu0 %306
    %308 = vrot.lane.b32.xlu0 %v276, 96
    %v309 = vpop.permute.xlu0 %308
    %vm310 = vcmask 31744
    %v311 = vsel %vm310, %v276, 0
    %v313 = vsel %vm310, %v309, 0
    %315 = vmatprep.subr.mxu0 0.0
    %316 = vmatpush1.xpose.msra.mxu0 %v313
    %317 = vmatprep.subr.mxu0 0.0
    %318 = vmatpush1.xpose.msra.mxu0 0.0
    %319 = vmatprep.subr.mxu0 0.0
    %320 = vmatpush1.xpose.msra.mxu0 0.0
    %321 = vmatprep.subr.mxu0 0.0
    %322 = vmatpush1.xpose.msra.mxu0 0.0
    %323 = vmatprep.subr.mxu0 0.0
    %324 = vmatpush1.xpose.msra.mxu0 0.0
    %325 = vmatprep.subr.mxu0 0.0
    %326 = vmatpush1.xpose.msra.mxu0 0.0
    %327 = vmatprep.subr.mxu0 0.0
    %328 = vmatpush1.xpose.msra.mxu0 0.0
    %329 = vmatprep.subr.mxu0 0.0
    %330 = vmatpush1.xpose.msra.mxu0 0.0
    %331 = vmatprep.subr.mxu0 0.0
    %332 = vmatpush1.xpose.msra.mxu0 0.0
    %333 = vmatprep.subr.mxu0 0.0
    %334 = vmatpush1.xpose.msra.mxu0 0.0
    %335 = vmatprep.subr.mxu0 0.0
    %336 = vmatpush1.xpose.msra.mxu0 0.0
    %337 = vmatprep.subr.mxu0 0.0
    %338 = vmatpush1.xpose.msra.mxu0 0.0
    %339 = vmatprep.subr.mxu0 0.0
    %340 = vmatpush1.xpose.msra.mxu0 0.0
    %341 = vmatprep.subr.mxu0 0.0
    %342 = vmatpush1.xpose.msra.mxu0 0.0
    %343 = vmatprep.subr.mxu0 0.0
    %344 = vmatpush1.xpose.msra.mxu0 0.0
    %345 = vmatprep.subr.mxu0 0.0
    %346 = vmatpush1.xpose.msra.mxu0 0.0
    %347 = vmatprep.subr.mxu0 0.0
    %348 = vmatpush1.xpose.msra.mxu0 0.0
    %349 = vmatprep.subr.mxu0 0.0
    %350 = vmatpush1.xpose.msra.mxu0 0.0
    %351 = vmatprep.subr.mxu0 0.0
    %352 = vmatpush1.xpose.msra.mxu0 0.0
    %353 = vmatprep.subr.mxu0 0.0
    %354 = vmatpush1.xpose.msra.mxu0 0.0
    %355 = vmatprep.subr.mxu0 0.0
    %356 = vmatpush1.xpose.msra.mxu0 0.0
    %357 = vmatprep.subr.mxu0 0.0
    %358 = vmatpush1.xpose.msra.mxu0 0.0
    %359 = vmatprep.subr.mxu0 0.0
    %360 = vmatpush1.xpose.msra.mxu0 0.0
    %361 = vmatprep.subr.mxu0 0.0
    %362 = vmatpush1.xpose.msra.mxu0 0.0
    %363 = vmatprep.subr.mxu0 0.0
    %364 = vmatpush1.xpose.msra.mxu0 0.0
    %365 = vmatprep.subr.mxu0 0.0
    %366 = vmatpush1.xpose.msra.mxu0 0.0
    %367 = vmatprep.subr.mxu0 0.0
    %368 = vmatpush1.xpose.msra.mxu0 0.0
    %369 = vmatprep.subr.mxu0 0.0
    %370 = vmatpush1.xpose.msra.mxu0 0.0
    %371 = vmatprep.subr.mxu0 0.0
    %372 = vmatpush1.xpose.msra.mxu0 0.0
    %373 = vmatprep.subr.mxu0 0.0
    %374 = vmatpush1.xpose.msra.mxu0 0.0
    %375 = vmatprep.subr.mxu0 0.0
    %376 = vmatpush1.xpose.msra.mxu0 0.0
    %377 = vmatprep.subr.mxu0 0.0
    %378 = vmatpush1.xpose.msra.mxu0 0.0
    %379 = vmatprep.mubr.f32.mxu0 0.0
    %380 = vmatmul.mubr.f32.gmra.mrb[0].mxu0 %v311
    %v381 = vpop.f32.mrb[0].mxu0
    %v382 = vadd.f32 0.0, %v381
    %v383 = vpop.f32.mrb[0].mxu0
    %384 = vdwg.mxu0
    %385 = vrot.lane.b32.xlu0 %v277, 96
    %v386 = vpop.permute.xlu0 %385
    %v387 = vsel %vm310, %v277, 0
    %v389 = vsel %vm310, %v386, 0
    %391 = vmatprep.subr.mxu0 0.0
    %392 = vmatpush1.xpose.msra.mxu0 %v389
    %393 = vmatprep.subr.mxu0 0.0
    %394 = vmatpush1.xpose.msra.mxu0 0.0
    %395 = vmatprep.subr.mxu0 0.0
    %396 = vmatpush1.xpose.msra.mxu0 0.0
    %397 = vmatprep.subr.mxu0 0.0
    %398 = vmatpush1.xpose.msra.mxu0 0.0
    %399 = vmatprep.subr.mxu0 0.0
    %400 = vmatpush1.xpose.msra.mxu0 0.0
    %401 = vmatprep.subr.mxu0 0.0
    %402 = vmatpush1.xpose.msra.mxu0 0.0
    %403 = vmatprep.subr.mxu0 0.0
    %404 = vmatpush1.xpose.msra.mxu0 0.0
    %405 = vmatprep.subr.mxu0 0.0
    %406 = vmatpush1.xpose.msra.mxu0 0.0
    %407 = vmatprep.subr.mxu0 0.0
    %408 = vmatpush1.xpose.msra.mxu0 0.0
    %409 = vmatprep.subr.mxu0 0.0
    %410 = vmatpush1.xpose.msra.mxu0 0.0
    %411 = vmatprep.subr.mxu0 0.0
    %412 = vmatpush1.xpose.msra.mxu0 0.0
    %413 = vmatprep.subr.mxu0 0.0
    %414 = vmatpush1.xpose.msra.mxu0 0.0
    %415 = vmatprep.subr.mxu0 0.0
    %416 = vmatpush1.xpose.msra.mxu0 0.0
    %417 = vmatprep.subr.mxu0 0.0
    %418 = vmatpush1.xpose.msra.mxu0 0.0
    %419 = vmatprep.subr.mxu0 0.0
    %420 = vmatpush1.xpose.msra.mxu0 0.0
    %421 = vmatprep.subr.mxu0 0.0
    %422 = vmatpush1.xpose.msra.mxu0 0.0
    %423 = vmatprep.subr.mxu0 0.0
    %424 = vmatpush1.xpose.msra.mxu0 0.0
    %425 = vmatprep.subr.mxu0 0.0
    %426 = vmatpush1.xpose.msra.mxu0 0.0
    %427 = vmatprep.subr.mxu0 0.0
    %428 = vmatpush1.xpose.msra.mxu0 0.0
    %429 = vmatprep.subr.mxu0 0.0
    %430 = vmatpush1.xpose.msra.mxu0 0.0
    %431 = vmatprep.subr.mxu0 0.0
    %432 = vmatpush1.xpose.msra.mxu0 0.0
    %433 = vmatprep.subr.mxu0 0.0
    %434 = vmatpush1.xpose.msra.mxu0 0.0
    %435 = vmatprep.subr.mxu0 0.0
    %436 = vmatpush1.xpose.msra.mxu0 0.0
    %437 = vmatprep.subr.mxu0 0.0
    %438 = vmatpush1.xpose.msra.mxu0 0.0
    %439 = vmatprep.subr.mxu0 0.0
    %440 = vmatpush1.xpose.msra.mxu0 0.0
    %441 = vmatprep.subr.mxu0 0.0
    %442 = vmatpush1.xpose.msra.mxu0 0.0
    %443 = vmatprep.subr.mxu0 0.0
    %444 = vmatpush1.xpose.msra.mxu0 0.0
    %445 = vmatprep.subr.mxu0 0.0
    %446 = vmatpush1.xpose.msra.mxu0 0.0
    %447 = vmatprep.subr.mxu0 0.0
    %448 = vmatpush1.xpose.msra.mxu0 0.0
    %449 = vmatprep.subr.mxu0 0.0
    %450 = vmatpush1.xpose.msra.mxu0 0.0
    %451 = vmatprep.subr.mxu0 0.0
    %452 = vmatpush1.xpose.msra.mxu0 0.0
    %453 = vmatprep.subr.mxu0 0.0
    %454 = vmatpush1.xpose.msra.mxu0 0.0
    %455 = vmatprep.mubr.f32.mxu0 0.0
    %456 = vmatmul.mubr.f32.gmra.mrb[0].mxu0 %v387
    %v457 = vpop.f32.mrb[0].mxu0
    %v458 = vadd.f32 0.0, %v457
    %v459 = vpop.f32.mrb[0].mxu0
    %460 = vdwg.mxu0
    %461 = vrot.lane.b32.xlu0 %v281, 96
    %v462 = vpop.permute.xlu0 %461
    %v463 = vsel %vm310, %v281, 0
    %v465 = vsel %vm310, %v462, 0
    %467 = vmatprep.subr.mxu0 0.0
    %468 = vmatpush1.xpose.msra.mxu0 %v465
    %469 = vmatprep.subr.mxu0 0.0
    %470 = vmatpush1.xpose.msra.mxu0 0.0
    %471 = vmatprep.subr.mxu0 0.0
    %472 = vmatpush1.xpose.msra.mxu0 0.0
    %473 = vmatprep.subr.mxu0 0.0
    %474 = vmatpush1.xpose.msra.mxu0 0.0
    %475 = vmatprep.subr.mxu0 0.0
    %476 = vmatpush1.xpose.msra.mxu0 0.0
    %477 = vmatprep.subr.mxu0 0.0
    %478 = vmatpush1.xpose.msra.mxu0 0.0
    %479 = vmatprep.subr.mxu0 0.0
    %480 = vmatpush1.xpose.msra.mxu0 0.0
    %481 = vmatprep.subr.mxu0 0.0
    %482 = vmatpush1.xpose.msra.mxu0 0.0
    %483 = vmatprep.subr.mxu0 0.0
    %484 = vmatpush1.xpose.msra.mxu0 0.0
    %485 = vmatprep.subr.mxu0 0.0
    %486 = vmatpush1.xpose.msra.mxu0 0.0
    %487 = vmatprep.subr.mxu0 0.0
    %488 = vmatpush1.xpose.msra.mxu0 0.0
    %489 = vmatprep.subr.mxu0 0.0
    %490 = vmatpush1.xpose.msra.mxu0 0.0
    %491 = vmatprep.subr.mxu0 0.0
    %492 = vmatpush1.xpose.msra.mxu0 0.0
    %493 = vmatprep.subr.mxu0 0.0
    %494 = vmatpush1.xpose.msra.mxu0 0.0
    %495 = vmatprep.subr.mxu0 0.0
    %496 = vmatpush1.xpose.msra.mxu0 0.0
    %497 = vmatprep.subr.mxu0 0.0
    %498 = vmatpush1.xpose.msra.mxu0 0.0
    %499 = vmatprep.subr.mxu0 0.0
    %500 = vmatpush1.xpose.msra.mxu0 0.0
    %501 = vmatprep.subr.mxu0 0.0
    %502 = vmatpush1.xpose.msra.mxu0 0.0
    %503 = vmatprep.subr.mxu0 0.0
    %504 = vmatpush1.xpose.msra.mxu0 0.0
    %505 = vmatprep.subr.mxu0 0.0
    %506 = vmatpush1.xpose.msra.mxu0 0.0
    %507 = vmatprep.subr.mxu0 0.0
    %508 = vmatpush1.xpose.msra.mxu0 0.0
    %509 = vmatprep.subr.mxu0 0.0
    %510 = vmatpush1.xpose.msra.mxu0 0.0
    %511 = vmatprep.subr.mxu0 0.0
    %512 = vmatpush1.xpose.msra.mxu0 0.0
    %513 = vmatprep.subr.mxu0 0.0
    %514 = vmatpush1.xpose.msra.mxu0 0.0
    %515 = vmatprep.subr.mxu0 0.0
    %516 = vmatpush1.xpose.msra.mxu0 0.0
    %517 = vmatprep.subr.mxu0 0.0
    %518 = vmatpush1.xpose.msra.mxu0 0.0
    %519 = vmatprep.subr.mxu0 0.0
    %520 = vmatpush1.xpose.msra.mxu0 0.0
    %521 = vmatprep.subr.mxu0 0.0
    %522 = vmatpush1.xpose.msra.mxu0 0.0
    %523 = vmatprep.subr.mxu0 0.0
    %524 = vmatpush1.xpose.msra.mxu0 0.0
    %525 = vmatprep.subr.mxu0 0.0
    %526 = vmatpush1.xpose.msra.mxu0 0.0
    %527 = vmatprep.subr.mxu0 0.0
    %528 = vmatpush1.xpose.msra.mxu0 0.0
    %529 = vmatprep.subr.mxu0 0.0
    %530 = vmatpush1.xpose.msra.mxu0 0.0
    %531 = vmatprep.mubr.f32.mxu0 0.0
    %532 = vmatmul.mubr.f32.gmra.mrb[0].mxu0 %v463
    %v533 = vpop.f32.mrb[0].mxu0
    %v534 = vadd.f32 0.0, %v533
    %v535 = vpop.f32.mrb[0].mxu0
    %536 = vdwg.mxu0
    %537 = vrot.lane.b32.xlu0 %v283, 96
    %v538 = vpop.permute.xlu0 %537
    %v539 = vsel %vm310, %v283, 0
    %v541 = vsel %vm310, %v538, 0
    %543 = vmatprep.subr.mxu0 0.0
    %544 = vmatpush1.xpose.msra.mxu0 %v541
    %545 = vmatprep.subr.mxu0 0.0
    %546 = vmatpush1.xpose.msra.mxu0 0.0
    %547 = vmatprep.subr.mxu0 0.0
    %548 = vmatpush1.xpose.msra.mxu0 0.0
    %549 = vmatprep.subr.mxu0 0.0
    %550 = vmatpush1.xpose.msra.mxu0 0.0
    %551 = vmatprep.subr.mxu0 0.0
    %552 = vmatpush1.xpose.msra.mxu0 0.0
    %553 = vmatprep.subr.mxu0 0.0
    %554 = vmatpush1.xpose.msra.mxu0 0.0
    %555 = vmatprep.subr.mxu0 0.0
    %556 = vmatpush1.xpose.msra.mxu0 0.0
    %557 = vmatprep.subr.mxu0 0.0
    %558 = vmatpush1.xpose.msra.mxu0 0.0
    %559 = vmatprep.subr.mxu0 0.0
    %560 = vmatpush1.xpose.msra.mxu0 0.0
    %561 = vmatprep.subr.mxu0 0.0
    %562 = vmatpush1.xpose.msra.mxu0 0.0
    %563 = vmatprep.subr.mxu0 0.0
    %564 = vmatpush1.xpose.msra.mxu0 0.0
    %565 = vmatprep.subr.mxu0 0.0
    %566 = vmatpush1.xpose.msra.mxu0 0.0
    %567 = vmatprep.subr.mxu0 0.0
    %568 = vmatpush1.xpose.msra.mxu0 0.0
    %569 = vmatprep.subr.mxu0 0.0
    %570 = vmatpush1.xpose.msra.mxu0 0.0
    %571 = vmatprep.subr.mxu0 0.0
    %572 = vmatpush1.xpose.msra.mxu0 0.0
    %573 = vmatprep.subr.mxu0 0.0
    %574 = vmatpush1.xpose.msra.mxu0 0.0
    %575 = vmatprep.subr.mxu0 0.0
    %576 = vmatpush1.xpose.msra.mxu0 0.0
    %577 = vmatprep.subr.mxu0 0.0
    %578 = vmatpush1.xpose.msra.mxu0 0.0
    %579 = vmatprep.subr.mxu0 0.0
    %580 = vmatpush1.xpose.msra.mxu0 0.0
    %581 = vmatprep.subr.mxu0 0.0
    %582 = vmatpush1.xpose.msra.mxu0 0.0
    %583 = vmatprep.subr.mxu0 0.0
    %584 = vmatpush1.xpose.msra.mxu0 0.0
    %585 = vmatprep.subr.mxu0 0.0
    %586 = vmatpush1.xpose.msra.mxu0 0.0
    %587 = vmatprep.subr.mxu0 0.0
    %588 = vmatpush1.xpose.msra.mxu0 0.0
    %589 = vmatprep.subr.mxu0 0.0
    %590 = vmatpush1.xpose.msra.mxu0 0.0
    %591 = vmatprep.subr.mxu0 0.0
    %592 = vmatpush1.xpose.msra.mxu0 0.0
    %593 = vmatprep.subr.mxu0 0.0
    %594 = vmatpush1.xpose.msra.mxu0 0.0
    %595 = vmatprep.subr.mxu0 0.0
    %596 = vmatpush1.xpose.msra.mxu0 0.0
    %597 = vmatprep.subr.mxu0 0.0
    %598 = vmatpush1.xpose.msra.mxu0 0.0
    %599 = vmatprep.subr.mxu0 0.0
    %600 = vmatpush1.xpose.msra.mxu0 0.0
    %601 = vmatprep.subr.mxu0 0.0
    %602 = vmatpush1.xpose.msra.mxu0 0.0
    %603 = vmatprep.subr.mxu0 0.0
    %604 = vmatpush1.xpose.msra.mxu0 0.0
    %605 = vmatprep.subr.mxu0 0.0
    %606 = vmatpush1.xpose.msra.mxu0 0.0
    %607 = vmatprep.mubr.f32.mxu0 0.0
    %608 = vmatmul.mubr.f32.gmra.mrb[0].mxu0 %v539
    %v609 = vpop.f32.mrb[0].mxu0
    %v610 = vadd.f32 0.0, %v609
    %v611 = vpop.f32.mrb[0].mxu0
    %612 = vdwg.mxu0
    %613 = vrot.lane.b32.xlu0 %v285, 96
    %v614 = vpop.permute.xlu0 %613
    %v615 = vsel %vm310, %v285, 0
    %v617 = vsel %vm310, %v614, 0
    %619 = vmatprep.subr.mxu0 0.0
    %620 = vmatpush1.xpose.msra.mxu0 %v617
    %621 = vmatprep.subr.mxu0 0.0
    %622 = vmatpush1.xpose.msra.mxu0 0.0
    %623 = vmatprep.subr.mxu0 0.0
    %624 = vmatpush1.xpose.msra.mxu0 0.0
    %625 = vmatprep.subr.mxu0 0.0
    %626 = vmatpush1.xpose.msra.mxu0 0.0
    %627 = vmatprep.subr.mxu0 0.0
    %628 = vmatpush1.xpose.msra.mxu0 0.0
    %629 = vmatprep.subr.mxu0 0.0
    %630 = vmatpush1.xpose.msra.mxu0 0.0
    %631 = vmatprep.subr.mxu0 0.0
    %632 = vmatpush1.xpose.msra.mxu0 0.0
    %633 = vmatprep.subr.mxu0 0.0
    %634 = vmatpush1.xpose.msra.mxu0 0.0
    %635 = vmatprep.subr.mxu0 0.0
    %636 = vmatpush1.xpose.msra.mxu0 0.0
    %637 = vmatprep.subr.mxu0 0.0
    %638 = vmatpush1.xpose.msra.mxu0 0.0
    %639 = vmatprep.subr.mxu0 0.0
    %640 = vmatpush1.xpose.msra.mxu0 0.0
    %641 = vmatprep.subr.mxu0 0.0
    %642 = vmatpush1.xpose.msra.mxu0 0.0
    %643 = vmatprep.subr.mxu0 0.0
    %644 = vmatpush1.xpose.msra.mxu0 0.0
    %645 = vmatprep.subr.mxu0 0.0
    %646 = vmatpush1.xpose.msra.mxu0 0.0
    %647 = vmatprep.subr.mxu0 0.0
    %648 = vmatpush1.xpose.msra.mxu0 0.0
    %649 = vmatprep.subr.mxu0 0.0
    %650 = vmatpush1.xpose.msra.mxu0 0.0
    %651 = vmatprep.subr.mxu0 0.0
    %652 = vmatpush1.xpose.msra.mxu0 0.0
    %653 = vmatprep.subr.mxu0 0.0
    %654 = vmatpush1.xpose.msra.mxu0 0.0
    %655 = vmatprep.subr.mxu0 0.0
    %656 = vmatpush1.xpose.msra.mxu0 0.0
    %657 = vmatprep.subr.mxu0 0.0
    %658 = vmatpush1.xpose.msra.mxu0 0.0
    %659 = vmatprep.subr.mxu0 0.0
    %660 = vmatpush1.xpose.msra.mxu0 0.0
    %661 = vmatprep.subr.mxu0 0.0
    %662 = vmatpush1.xpose.msra.mxu0 0.0
    %663 = vmatprep.subr.mxu0 0.0
    %664 = vmatpush1.xpose.msra.mxu0 0.0
    %665 = vmatprep.subr.mxu0 0.0
    %666 = vmatpush1.xpose.msra.mxu0 0.0
    %667 = vmatprep.subr.mxu0 0.0
    %668 = vmatpush1.xpose.msra.mxu0 0.0
    %669 = vmatprep.subr.mxu0 0.0
    %670 = vmatpush1.xpose.msra.mxu0 0.0
    %671 = vmatprep.subr.mxu0 0.0
    %672 = vmatpush1.xpose.msra.mxu0 0.0
    %673 = vmatprep.subr.mxu0 0.0
    %674 = vmatpush1.xpose.msra.mxu0 0.0
    %675 = vmatprep.subr.mxu0 0.0
    %676 = vmatpush1.xpose.msra.mxu0 0.0
    %677 = vmatprep.subr.mxu0 0.0
    %678 = vmatpush1.xpose.msra.mxu0 0.0
    %679 = vmatprep.subr.mxu0 0.0
    %680 = vmatpush1.xpose.msra.mxu0 0.0
    %681 = vmatprep.subr.mxu0 0.0
    %682 = vmatpush1.xpose.msra.mxu0 0.0
    %683 = vmatprep.mubr.f32.mxu0 0.0
    %684 = vmatmul.mubr.f32.gmra.mrb[0].mxu0 %v615
    %v685 = vpop.f32.mrb[0].mxu0
    %v686 = vadd.f32 0.0, %v685
    %v687 = vpop.f32.mrb[0].mxu0
    %688 = vdwg.mxu0
    %689 = vrot.lane.b32.xlu0 %v287, 96
    %v690 = vpop.permute.xlu0 %689
    %v691 = vsel %vm310, %v287, 0
    %v693 = vsel %vm310, %v690, 0
    %695 = vmatprep.subr.mxu0 0.0
    %696 = vmatpush1.xpose.msra.mxu0 %v693
    %697 = vmatprep.subr.mxu0 0.0
    %698 = vmatpush1.xpose.msra.mxu0 0.0
    %699 = vmatprep.subr.mxu0 0.0
    %700 = vmatpush1.xpose.msra.mxu0 0.0
    %701 = vmatprep.subr.mxu0 0.0
    %702 = vmatpush1.xpose.msra.mxu0 0.0
    %703 = vmatprep.subr.mxu0 0.0
    %704 = vmatpush1.xpose.msra.mxu0 0.0
    %705 = vmatprep.subr.mxu0 0.0
    %706 = vmatpush1.xpose.msra.mxu0 0.0
    %707 = vmatprep.subr.mxu0 0.0
    %708 = vmatpush1.xpose.msra.mxu0 0.0
    %709 = vmatprep.subr.mxu0 0.0
    %710 = vmatpush1.xpose.msra.mxu0 0.0
    %711 = vmatprep.subr.mxu0 0.0
    %712 = vmatpush1.xpose.msra.mxu0 0.0
    %713 = vmatprep.subr.mxu0 0.0
    %714 = vmatpush1.xpose.msra.mxu0 0.0
    %715 = vmatprep.subr.mxu0 0.0
    %716 = vmatpush1.xpose.msra.mxu0 0.0
    %717 = vmatprep.subr.mxu0 0.0
    %718 = vmatpush1.xpose.msra.mxu0 0.0
    %719 = vmatprep.subr.mxu0 0.0
    %720 = vmatpush1.xpose.msra.mxu0 0.0
    %721 = vmatprep.subr.mxu0 0.0
    %722 = vmatpush1.xpose.msra.mxu0 0.0
    %723 = vmatprep.subr.mxu0 0.0
    %724 = vmatpush1.xpose.msra.mxu0 0.0
    %725 = vmatprep.subr.mxu0 0.0
    %726 = vmatpush1.xpose.msra.mxu0 0.0
    %727 = vmatprep.subr.mxu0 0.0
    %728 = vmatpush1.xpose.msra.mxu0 0.0
    %729 = vmatprep.subr.mxu0 0.0
    %730 = vmatpush1.xpose.msra.mxu0 0.0
    %731 = vmatprep.subr.mxu0 0.0
    %732 = vmatpush1.xpose.msra.mxu0 0.0
    %733 = vmatprep.subr.mxu0 0.0
    %734 = vmatpush1.xpose.msra.mxu0 0.0
    %735 = vmatprep.subr.mxu0 0.0
    %736 = vmatpush1.xpose.msra.mxu0 0.0
    %737 = vmatprep.subr.mxu0 0.0
    %738 = vmatpush1.xpose.msra.mxu0 0.0
    %739 = vmatprep.subr.mxu0 0.0
    %740 = vmatpush1.xpose.msra.mxu0 0.0
    %741 = vmatprep.subr.mxu0 0.0
    %742 = vmatpush1.xpose.msra.mxu0 0.0
    %743 = vmatprep.subr.mxu0 0.0
    %744 = vmatpush1.xpose.msra.mxu0 0.0
    %745 = vmatprep.subr.mxu0 0.0
    %746 = vmatpush1.xpose.msra.mxu0 0.0
    %747 = vmatprep.subr.mxu0 0.0
    %748 = vmatpush1.xpose.msra.mxu0 0.0
    %749 = vmatprep.subr.mxu0 0.0
    %750 = vmatpush1.xpose.msra.mxu0 0.0
    %751 = vmatprep.subr.mxu0 0.0
    %752 = vmatpush1.xpose.msra.mxu0 0.0
    %753 = vmatprep.subr.mxu0 0.0
    %754 = vmatpush1.xpose.msra.mxu0 0.0
    %755 = vmatprep.subr.mxu0 0.0
    %756 = vmatpush1.xpose.msra.mxu0 0.0
    %757 = vmatprep.subr.mxu0 0.0
    %758 = vmatpush1.xpose.msra.mxu0 0.0
    %759 = vmatprep.mubr.f32.mxu0 0.0
    %760 = vmatmul.mubr.f32.gmra.mrb[0].mxu0 %v691
    %v761 = vpop.f32.mrb[0].mxu0
    %v762 = vadd.f32 0.0, %v761
    %v763 = vpop.f32.mrb[0].mxu0
    %764 = vdwg.mxu0
    %765 = vrot.lane.b32.xlu0 %v289, 96
    %v766 = vpop.permute.xlu0 %765
    %v767 = vsel %vm310, %v289, 0
    %v769 = vsel %vm310, %v766, 0
    %771 = vmatprep.subr.mxu0 0.0
    %772 = vmatpush1.xpose.msra.mxu0 %v769
    %773 = vmatprep.subr.mxu0 0.0
    %774 = vmatpush1.xpose.msra.mxu0 0.0
    %775 = vmatprep.subr.mxu0 0.0
    %776 = vmatpush1.xpose.msra.mxu0 0.0
    %777 = vmatprep.subr.mxu0 0.0
    %778 = vmatpush1.xpose.msra.mxu0 0.0
    %779 = vmatprep.subr.mxu0 0.0
    %780 = vmatpush1.xpose.msra.mxu0 0.0
    %781 = vmatprep.subr.mxu0 0.0
    %782 = vmatpush1.xpose.msra.mxu0 0.0
    %783 = vmatprep.subr.mxu0 0.0
    %784 = vmatpush1.xpose.msra.mxu0 0.0
    %785 = vmatprep.subr.mxu0 0.0
    %786 = vmatpush1.xpose.msra.mxu0 0.0
    %787 = vmatprep.subr.mxu0 0.0
    %788 = vmatpush1.xpose.msra.mxu0 0.0
    %789 = vmatprep.subr.mxu0 0.0
    %790 = vmatpush1.xpose.msra.mxu0 0.0
    %791 = vmatprep.subr.mxu0 0.0
    %792 = vmatpush1.xpose.msra.mxu0 0.0
    %793 = vmatprep.subr.mxu0 0.0
    %794 = vmatpush1.xpose.msra.mxu0 0.0
    %795 = vmatprep.subr.mxu0 0.0
    %796 = vmatpush1.xpose.msra.mxu0 0.0
    %797 = vmatprep.subr.mxu0 0.0
    %798 = vmatpush1.xpose.msra.mxu0 0.0
    %799 = vmatprep.subr.mxu0 0.0
    %800 = vmatpush1.xpose.msra.mxu0 0.0
    %801 = vmatprep.subr.mxu0 0.0
    %802 = vmatpush1.xpose.msra.mxu0 0.0
    %803 = vmatprep.subr.mxu0 0.0
    %804 = vmatpush1.xpose.msra.mxu0 0.0
    %805 = vmatprep.subr.mxu0 0.0
    %806 = vmatpush1.xpose.msra.mxu0 0.0
    %807 = vmatprep.subr.mxu0 0.0
    %808 = vmatpush1.xpose.msra.mxu0 0.0
    %809 = vmatprep.subr.mxu0 0.0
    %810 = vmatpush1.xpose.msra.mxu0 0.0
    %811 = vmatprep.subr.mxu0 0.0
    %812 = vmatpush1.xpose.msra.mxu0 0.0
    %813 = vmatprep.subr.mxu0 0.0
    %814 = vmatpush1.xpose.msra.mxu0 0.0
    %815 = vmatprep.subr.mxu0 0.0
    %816 = vmatpush1.xpose.msra.mxu0 0.0
    %817 = vmatprep.subr.mxu0 0.0
    %818 = vmatpush1.xpose.msra.mxu0 0.0
    %819 = vmatprep.subr.mxu0 0.0
    %820 = vmatpush1.xpose.msra.mxu0 0.0
    %821 = vmatprep.subr.mxu0 0.0
    %822 = vmatpush1.xpose.msra.mxu0 0.0
    %823 = vmatprep.subr.mxu0 0.0
    %824 = vmatpush1.xpose.msra.mxu0 0.0
    %825 = vmatprep.subr.mxu0 0.0
    %826 = vmatpush1.xpose.msra.mxu0 0.0
    %827 = vmatprep.subr.mxu0 0.0
    %828 = vmatpush1.xpose.msra.mxu0 0.0
    %829 = vmatprep.subr.mxu0 0.0
    %830 = vmatpush1.xpose.msra.mxu0 0.0
    %831 = vmatprep.subr.mxu0 0.0
    %832 = vmatpush1.xpose.msra.mxu0 0.0
    %833 = vmatprep.subr.mxu0 0.0
    %834 = vmatpush1.xpose.msra.mxu0 0.0
    %835 = vmatprep.mubr.f32.mxu0 0.0
    %836 = vmatmul.mubr.f32.gmra.mrb[0].mxu0 %v767
    %v837 = vpop.f32.mrb[0].mxu0
    %v838 = vadd.f32 0.0, %v837
    %v839 = vpop.f32.mrb[0].mxu0
    %840 = vdwg.mxu0
    %841 = vrot.lane.b32.xlu0 %v291, 96
    %v842 = vpop.permute.xlu0 %841
    %v843 = vsel %vm310, %v291, 0
    %v845 = vsel %vm310, %v842, 0
    %847 = vmatprep.subr.mxu0 0.0
    %848 = vmatpush1.xpose.msra.mxu0 %v845
    %849 = vmatprep.subr.mxu0 0.0
    %850 = vmatpush1.xpose.msra.mxu0 0.0
    %851 = vmatprep.subr.mxu0 0.0
    %852 = vmatpush1.xpose.msra.mxu0 0.0
    %853 = vmatprep.subr.mxu0 0.0
    %854 = vmatpush1.xpose.msra.mxu0 0.0
    %855 = vmatprep.subr.mxu0 0.0
    %856 = vmatpush1.xpose.msra.mxu0 0.0
    %857 = vmatprep.subr.mxu0 0.0
    %858 = vmatpush1.xpose.msra.mxu0 0.0
    %859 = vmatprep.subr.mxu0 0.0
    %860 = vmatpush1.xpose.msra.mxu0 0.0
    %861 = vmatprep.subr.mxu0 0.0
    %862 = vmatpush1.xpose.msra.mxu0 0.0
    %863 = vmatprep.subr.mxu0 0.0
    %864 = vmatpush1.xpose.msra.mxu0 0.0
    %865 = vmatprep.subr.mxu0 0.0
    %866 = vmatpush1.xpose.msra.mxu0 0.0
    %867 = vmatprep.subr.mxu0 0.0
    %868 = vmatpush1.xpose.msra.mxu0 0.0
    %869 = vmatprep.subr.mxu0 0.0
    %870 = vmatpush1.xpose.msra.mxu0 0.0
    %871 = vmatprep.subr.mxu0 0.0
    %872 = vmatpush1.xpose.msra.mxu0 0.0
    %873 = vmatprep.subr.mxu0 0.0
    %874 = vmatpush1.xpose.msra.mxu0 0.0
    %875 = vmatprep.subr.mxu0 0.0
    %876 = vmatpush1.xpose.msra.mxu0 0.0
    %877 = vmatprep.subr.mxu0 0.0
    %878 = vmatpush1.xpose.msra.mxu0 0.0
    %879 = vmatprep.subr.mxu0 0.0
    %880 = vmatpush1.xpose.msra.mxu0 0.0
    %881 = vmatprep.subr.mxu0 0.0
    %882 = vmatpush1.xpose.msra.mxu0 0.0
    %883 = vmatprep.subr.mxu0 0.0
    %884 = vmatpush1.xpose.msra.mxu0 0.0
    %885 = vmatprep.subr.mxu0 0.0
    %886 = vmatpush1.xpose.msra.mxu0 0.0
    %887 = vmatprep.subr.mxu0 0.0
    %888 = vmatpush1.xpose.msra.mxu0 0.0
    %889 = vmatprep.subr.mxu0 0.0
    %890 = vmatpush1.xpose.msra.mxu0 0.0
    %891 = vmatprep.subr.mxu0 0.0
    %892 = vmatpush1.xpose.msra.mxu0 0.0
    %893 = vmatprep.subr.mxu0 0.0
    %894 = vmatpush1.xpose.msra.mxu0 0.0
    %895 = vmatprep.subr.mxu0 0.0
    %896 = vmatpush1.xpose.msra.mxu0 0.0
    %897 = vmatprep.subr.mxu0 0.0
    %898 = vmatpush1.xpose.msra.mxu0 0.0
    %899 = vmatprep.subr.mxu0 0.0
    %900 = vmatpush1.xpose.msra.mxu0 0.0
    %901 = vmatprep.subr.mxu0 0.0
    %902 = vmatpush1.xpose.msra.mxu0 0.0
    %903 = vmatprep.subr.mxu0 0.0
    %904 = vmatpush1.xpose.msra.mxu0 0.0
    %905 = vmatprep.subr.mxu0 0.0
    %906 = vmatpush1.xpose.msra.mxu0 0.0
    %907 = vmatprep.subr.mxu0 0.0
    %908 = vmatpush1.xpose.msra.mxu0 0.0
    %909 = vmatprep.subr.mxu0 0.0
    %910 = vmatpush1.xpose.msra.mxu0 0.0
    %911 = vmatprep.mubr.f32.mxu0 0.0
    %912 = vmatmul.mubr.f32.gmra.mrb[0].mxu0 %v843
    %v913 = vpop.f32.mrb[0].mxu0
    %v914 = vadd.f32 0.0, %v913
    %v915 = vpop.f32.mrb[0].mxu0
    %916 = vdwg.mxu0
    %917 = vrot.lane.b32.xlu0 %v293, 96
    %v918 = vpop.permute.xlu0 %917
    %v919 = vsel %vm310, %v293, 0
    %v921 = vsel %vm310, %v918, 0
    %923 = vmatprep.subr.mxu0 0.0
    %924 = vmatpush1.xpose.msra.mxu0 %v921
    %925 = vmatprep.subr.mxu0 0.0
    %926 = vmatpush1.xpose.msra.mxu0 0.0
    %927 = vmatprep.subr.mxu0 0.0
    %928 = vmatpush1.xpose.msra.mxu0 0.0
    %929 = vmatprep.subr.mxu0 0.0
    %930 = vmatpush1.xpose.msra.mxu0 0.0
    %931 = vmatprep.subr.mxu0 0.0
    %932 = vmatpush1.xpose.msra.mxu0 0.0
    %933 = vmatprep.subr.mxu0 0.0
    %934 = vmatpush1.xpose.msra.mxu0 0.0
    %935 = vmatprep.subr.mxu0 0.0
    %936 = vmatpush1.xpose.msra.mxu0 0.0
    %937 = vmatprep.subr.mxu0 0.0
    %938 = vmatpush1.xpose.msra.mxu0 0.0
    %939 = vmatprep.subr.mxu0 0.0
    %940 = vmatpush1.xpose.msra.mxu0 0.0
    %941 = vmatprep.subr.mxu0 0.0
    %942 = vmatpush1.xpose.msra.mxu0 0.0
    %943 = vmatprep.subr.mxu0 0.0
    %944 = vmatpush1.xpose.msra.mxu0 0.0
    %945 = vmatprep.subr.mxu0 0.0
    %946 = vmatpush1.xpose.msra.mxu0 0.0
    %947 = vmatprep.subr.mxu0 0.0
    %948 = vmatpush1.xpose.msra.mxu0 0.0
    %949 = vmatprep.subr.mxu0 0.0
    %950 = vmatpush1.xpose.msra.mxu0 0.0
    %951 = vmatprep.subr.mxu0 0.0
    %952 = vmatpush1.xpose.msra.mxu0 0.0
    %953 = vmatprep.subr.mxu0 0.0
    %954 = vmatpush1.xpose.msra.mxu0 0.0
    %955 = vmatprep.subr.mxu0 0.0
    %956 = vmatpush1.xpose.msra.mxu0 0.0
    %957 = vmatprep.subr.mxu0 0.0
    %958 = vmatpush1.xpose.msra.mxu0 0.0
    %959 = vmatprep.subr.mxu0 0.0
    %960 = vmatpush1.xpose.msra.mxu0 0.0
    %961 = vmatprep.subr.mxu0 0.0
    %962 = vmatpush1.xpose.msra.mxu0 0.0
    %963 = vmatprep.subr.mxu0 0.0
    %964 = vmatpush1.xpose.msra.mxu0 0.0
    %965 = vmatprep.subr.mxu0 0.0
    %966 = vmatpush1.xpose.msra.mxu0 0.0
    %967 = vmatprep.subr.mxu0 0.0
    %968 = vmatpush1.xpose.msra.mxu0 0.0
    %969 = vmatprep.subr.mxu0 0.0
    %970 = vmatpush1.xpose.msra.mxu0 0.0
    %971 = vmatprep.subr.mxu0 0.0
    %972 = vmatpush1.xpose.msra.mxu0 0.0
    %973 = vmatprep.subr.mxu0 0.0
    %974 = vmatpush1.xpose.msra.mxu0 0.0
    %975 = vmatprep.subr.mxu0 0.0
    %976 = vmatpush1.xpose.msra.mxu0 0.0
    %977 = vmatprep.subr.mxu0 0.0
    %978 = vmatpush1.xpose.msra.mxu0 0.0
    %979 = vmatprep.subr.mxu0 0.0
    %980 = vmatpush1.xpose.msra.mxu0 0.0
    %981 = vmatprep.subr.mxu0 0.0
    %982 = vmatpush1.xpose.msra.mxu0 0.0
    %983 = vmatprep.subr.mxu0 0.0
    %984 = vmatpush1.xpose.msra.mxu0 0.0
    %985 = vmatprep.subr.mxu0 0.0
    %986 = vmatpush1.xpose.msra.mxu0 0.0
    %987 = vmatprep.mubr.f32.mxu0 0.0
    %988 = vmatmul.mubr.f32.gmra.mrb[0].mxu0 %v919
    %v989 = vpop.f32.mrb[0].mxu0
    %v990 = vadd.f32 0.0, %v989
    %v991 = vpop.f32.mrb[0].mxu0
    %992 = vdwg.mxu0
    %993 = vrot.lane.b32.xlu0 %v295, 96
    %v994 = vpop.permute.xlu0 %993
    %v995 = vsel %vm310, %v295, 0
    %v997 = vsel %vm310, %v994, 0
    %999 = vmatprep.subr.mxu0 0.0
    %1000 = vmatpush1.xpose.msra.mxu0 %v997
    %1001 = vmatprep.subr.mxu0 0.0
    %1002 = vmatpush1.xpose.msra.mxu0 0.0
    %1003 = vmatprep.subr.mxu0 0.0
    %1004 = vmatpush1.xpose.msra.mxu0 0.0
    %1005 = vmatprep.subr.mxu0 0.0
    %1006 = vmatpush1.xpose.msra.mxu0 0.0
    %1007 = vmatprep.subr.mxu0 0.0
    %1008 = vmatpush1.xpose.msra.mxu0 0.0
    %1009 = vmatprep.subr.mxu0 0.0
    %1010 = vmatpush1.xpose.msra.mxu0 0.0
    %1011 = vmatprep.subr.mxu0 0.0
    %1012 = vmatpush1.xpose.msra.mxu0 0.0
    %1013 = vmatprep.subr.mxu0 0.0
    %1014 = vmatpush1.xpose.msra.mxu0 0.0
    %1015 = vmatprep.subr.mxu0 0.0
    %1016 = vmatpush1.xpose.msra.mxu0 0.0
    %1017 = vmatprep.subr.mxu0 0.0
    %1018 = vmatpush1.xpose.msra.mxu0 0.0
    %1019 = vmatprep.subr.mxu0 0.0
    %1020 = vmatpush1.xpose.msra.mxu0 0.0
    %1021 = vmatprep.subr.mxu0 0.0
    %1022 = vmatpush1.xpose.msra.mxu0 0.0
    %1023 = vmatprep.subr.mxu0 0.0
    %1024 = vmatpush1.xpose.msra.mxu0 0.0
    %1025 = vmatprep.subr.mxu0 0.0
    %1026 = vmatpush1.xpose.msra.mxu0 0.0
    %1027 = vmatprep.subr.mxu0 0.0
    %1028 = vmatpush1.xpose.msra.mxu0 0.0
    %1029 = vmatprep.subr.mxu0 0.0
    %1030 = vmatpush1.xpose.msra.mxu0 0.0
    %1031 = vmatprep.subr.mxu0 0.0
    %1032 = vmatpush1.xpose.msra.mxu0 0.0
    %1033 = vmatprep.subr.mxu0 0.0
    %1034 = vmatpush1.xpose.msra.mxu0 0.0
    %1035 = vmatprep.subr.mxu0 0.0
    %1036 = vmatpush1.xpose.msra.mxu0 0.0
    %1037 = vmatprep.subr.mxu0 0.0
    %1038 = vmatpush1.xpose.msra.mxu0 0.0
    %1039 = vmatprep.subr.mxu0 0.0
    %1040 = vmatpush1.xpose.msra.mxu0 0.0
    %1041 = vmatprep.subr.mxu0 0.0
    %1042 = vmatpush1.xpose.msra.mxu0 0.0
    %1043 = vmatprep.subr.mxu0 0.0
    %1044 = vmatpush1.xpose.msra.mxu0 0.0
    %1045 = vmatprep.subr.mxu0 0.0
    %1046 = vmatpush1.xpose.msra.mxu0 0.0
    %1047 = vmatprep.subr.mxu0 0.0
    %1048 = vmatpush1.xpose.msra.mxu0 0.0
    %1049 = vmatprep.subr.mxu0 0.0
    %1050 = vmatpush1.xpose.msra.mxu0 0.0
    %1051 = vmatprep.subr.mxu0 0.0
    %1052 = vmatpush1.xpose.msra.mxu0 0.0
    %1053 = vmatprep.subr.mxu0 0.0
    %1054 = vmatpush1.xpose.msra.mxu0 0.0
    %1055 = vmatprep.subr.mxu0 0.0
    %1056 = vmatpush1.xpose.msra.mxu0 0.0
    %1057 = vmatprep.subr.mxu0 0.0
    %1058 = vmatpush1.xpose.msra.mxu0 0.0
    %1059 = vmatprep.subr.mxu0 0.0
    %1060 = vmatpush1.xpose.msra.mxu0 0.0
    %1061 = vmatprep.subr.mxu0 0.0
    %1062 = vmatpush1.xpose.msra.mxu0 0.0
    %1063 = vmatprep.mubr.f32.mxu0 0.0
    %1064 = vmatmul.mubr.f32.gmra.mrb[0].mxu0 %v995
    %v1065 = vpop.f32.mrb[0].mxu0
    %v1066 = vadd.f32 0.0, %v1065
    %v1067 = vpop.f32.mrb[0].mxu0
    %1068 = vdwg.mxu0
    %1069 = vrot.lane.b32.xlu0 %v297, 96
    %v1070 = vpop.permute.xlu0 %1069
    %v1071 = vsel %vm310, %v297, 0
    %v1073 = vsel %vm310, %v1070, 0
    %1075 = vmatprep.subr.mxu0 0.0
    %1076 = vmatpush1.xpose.msra.mxu0 %v1073
    %1077 = vmatprep.subr.mxu0 0.0
    %1078 = vmatpush1.xpose.msra.mxu0 0.0
    %1079 = vmatprep.subr.mxu0 0.0
    %1080 = vmatpush1.xpose.msra.mxu0 0.0
    %1081 = vmatprep.subr.mxu0 0.0
    %1082 = vmatpush1.xpose.msra.mxu0 0.0
    %1083 = vmatprep.subr.mxu0 0.0
    %1084 = vmatpush1.xpose.msra.mxu0 0.0
    %1085 = vmatprep.subr.mxu0 0.0
    %1086 = vmatpush1.xpose.msra.mxu0 0.0
    %1087 = vmatprep.subr.mxu0 0.0
    %1088 = vmatpush1.xpose.msra.mxu0 0.0
    %1089 = vmatprep.subr.mxu0 0.0
    %1090 = vmatpush1.xpose.msra.mxu0 0.0
    %1091 = vmatprep.subr.mxu0 0.0
    %1092 = vmatpush1.xpose.msra.mxu0 0.0
    %1093 = vmatprep.subr.mxu0 0.0
    %1094 = vmatpush1.xpose.msra.mxu0 0.0
    %1095 = vmatprep.subr.mxu0 0.0
    %1096 = vmatpush1.xpose.msra.mxu0 0.0
    %1097 = vmatprep.subr.mxu0 0.0
    %1098 = vmatpush1.xpose.msra.mxu0 0.0
    %1099 = vmatprep.subr.mxu0 0.0
    %1100 = vmatpush1.xpose.msra.mxu0 0.0
    %1101 = vmatprep.subr.mxu0 0.0
    %1102 = vmatpush1.xpose.msra.mxu0 0.0
    %1103 = vmatprep.subr.mxu0 0.0
    %1104 = vmatpush1.xpose.msra.mxu0 0.0
    %1105 = vmatprep.subr.mxu0 0.0
    %1106 = vmatpush1.xpose.msra.mxu0 0.0
    %1107 = vmatprep.subr.mxu0 0.0
    %1108 = vmatpush1.xpose.msra.mxu0 0.0
    %1109 = vmatprep.subr.mxu0 0.0
    %1110 = vmatpush1.xpose.msra.mxu0 0.0
    %1111 = vmatprep.subr.mxu0 0.0
    %1112 = vmatpush1.xpose.msra.mxu0 0.0
    %1113 = vmatprep.subr.mxu0 0.0
    %1114 = vmatpush1.xpose.msra.mxu0 0.0
    %1115 = vmatprep.subr.mxu0 0.0
    %1116 = vmatpush1.xpose.msra.mxu0 0.0
    %1117 = vmatprep.subr.mxu0 0.0
    %1118 = vmatpush1.xpose.msra.mxu0 0.0
    %1119 = vmatprep.subr.mxu0 0.0
    %1120 = vmatpush1.xpose.msra.mxu0 0.0
    %1121 = vmatprep.subr.mxu0 0.0
    %1122 = vmatpush1.xpose.msra.mxu0 0.0
    %1123 = vmatprep.subr.mxu0 0.0
    %1124 = vmatpush1.xpose.msra.mxu0 0.0
    %1125 = vmatprep.subr.mxu0 0.0
    %1126 = vmatpush1.xpose.msra.mxu0 0.0
    %1127 = vmatprep.subr.mxu0 0.0
    %1128 = vmatpush1.xpose.msra.mxu0 0.0
    %1129 = vmatprep.subr.mxu0 0.0
    %1130 = vmatpush1.xpose.msra.mxu0 0.0
    %1131 = vmatprep.subr.mxu0 0.0
    %1132 = vmatpush1.xpose.msra.mxu0 0.0
    %1133 = vmatprep.subr.mxu0 0.0
    %1134 = vmatpush1.xpose.msra.mxu0 0.0
    %1135 = vmatprep.subr.mxu0 0.0
    %1136 = vmatpush1.xpose.msra.mxu0 0.0
    %1137 = vmatprep.subr.mxu0 0.0
    %1138 = vmatpush1.xpose.msra.mxu0 0.0
    %1139 = vmatprep.mubr.f32.mxu0 0.0
    %1140 = vmatmul.mubr.f32.gmra.mrb[0].mxu0 %v1071
    %v1141 = vpop.f32.mrb[0].mxu0
    %v1142 = vadd.f32 0.0, %v1141
    %v1143 = vpop.f32.mrb[0].mxu0
    %1144 = vdwg.mxu0
    %1145 = vrot.lane.b32.xlu0 %v299, 96
    %v1146 = vpop.permute.xlu0 %1145
    %v1147 = vsel %vm310, %v299, 0
    %v1149 = vsel %vm310, %v1146, 0
    %1151 = vmatprep.subr.mxu0 0.0
    %1152 = vmatpush1.xpose.msra.mxu0 %v1149
    %1153 = vmatprep.subr.mxu0 0.0
    %1154 = vmatpush1.xpose.msra.mxu0 0.0
    %1155 = vmatprep.subr.mxu0 0.0
    %1156 = vmatpush1.xpose.msra.mxu0 0.0
    %1157 = vmatprep.subr.mxu0 0.0
    %1158 = vmatpush1.xpose.msra.mxu0 0.0
    %1159 = vmatprep.subr.mxu0 0.0
    %1160 = vmatpush1.xpose.msra.mxu0 0.0
    %1161 = vmatprep.subr.mxu0 0.0
    %1162 = vmatpush1.xpose.msra.mxu0 0.0
    %1163 = vmatprep.subr.mxu0 0.0
    %1164 = vmatpush1.xpose.msra.mxu0 0.0
    %1165 = vmatprep.subr.mxu0 0.0
    %1166 = vmatpush1.xpose.msra.mxu0 0.0
    %1167 = vmatprep.subr.mxu0 0.0
    %1168 = vmatpush1.xpose.msra.mxu0 0.0
    %1169 = vmatprep.subr.mxu0 0.0
    %1170 = vmatpush1.xpose.msra.mxu0 0.0
    %1171 = vmatprep.subr.mxu0 0.0
    %1172 = vmatpush1.xpose.msra.mxu0 0.0
    %1173 = vmatprep.subr.mxu0 0.0
    %1174 = vmatpush1.xpose.msra.mxu0 0.0
    %1175 = vmatprep.subr.mxu0 0.0
    %1176 = vmatpush1.xpose.msra.mxu0 0.0
    %1177 = vmatprep.subr.mxu0 0.0
    %1178 = vmatpush1.xpose.msra.mxu0 0.0
    %1179 = vmatprep.subr.mxu0 0.0
    %1180 = vmatpush1.xpose.msra.mxu0 0.0
    %1181 = vmatprep.subr.mxu0 0.0
    %1182 = vmatpush1.xpose.msra.mxu0 0.0
    %1183 = vmatprep.subr.mxu0 0.0
    %1184 = vmatpush1.xpose.msra.mxu0 0.0
    %1185 = vmatprep.subr.mxu0 0.0
    %1186 = vmatpush1.xpose.msra.mxu0 0.0
    %1187 = vmatprep.subr.mxu0 0.0
    %1188 = vmatpush1.xpose.msra.mxu0 0.0
    %1189 = vmatprep.subr.mxu0 0.0
    %1190 = vmatpush1.xpose.msra.mxu0 0.0
    %1191 = vmatprep.subr.mxu0 0.0
    %1192 = vmatpush1.xpose.msra.mxu0 0.0
    %1193 = vmatprep.subr.mxu0 0.0
    %1194 = vmatpush1.xpose.msra.mxu0 0.0
    %1195 = vmatprep.subr.mxu0 0.0
    %1196 = vmatpush1.xpose.msra.mxu0 0.0
    %1197 = vmatprep.subr.mxu0 0.0
    %1198 = vmatpush1.xpose.msra.mxu0 0.0
    %1199 = vmatprep.subr.mxu0 0.0
    %1200 = vmatpush1.xpose.msra.mxu0 0.0
    %1201 = vmatprep.subr.mxu0 0.0
    %1202 = vmatpush1.xpose.msra.mxu0 0.0
    %1203 = vmatprep.subr.mxu0 0.0
    %1204 = vmatpush1.xpose.msra.mxu0 0.0
    %1205 = vmatprep.subr.mxu0 0.0
    %1206 = vmatpush1.xpose.msra.mxu0 0.0
    %1207 = vmatprep.subr.mxu0 0.0
    %1208 = vmatpush1.xpose.msra.mxu0 0.0
    %1209 = vmatprep.subr.mxu0 0.0
    %1210 = vmatpush1.xpose.msra.mxu0 0.0
    %1211 = vmatprep.subr.mxu0 0.0
    %1212 = vmatpush1.xpose.msra.mxu0 0.0
    %1213 = vmatprep.subr.mxu0 0.0
    %1214 = vmatpush1.xpose.msra.mxu0 0.0
    %1215 = vmatprep.mubr.f32.mxu0 0.0
    %1216 = vmatmul.mubr.f32.gmra.mrb[0].mxu0 %v1147
    %v1217 = vpop.f32.mrb[0].mxu0
    %v1218 = vadd.f32 0.0, %v1217
    %v1219 = vpop.f32.mrb[0].mxu0
    %1220 = vdwg.mxu0
    %1221 = vrot.lane.b32.xlu0 %v301, 96
    %v1222 = vpop.permute.xlu0 %1221
    %v1223 = vsel %vm310, %v301, 0
    %v1225 = vsel %vm310, %v1222, 0
    %1227 = vmatprep.subr.mxu0 0.0
    %1228 = vmatpush1.xpose.msra.mxu0 %v1225
    %1229 = vmatprep.subr.mxu0 0.0
    %1230 = vmatpush1.xpose.msra.mxu0 0.0
    %1231 = vmatprep.subr.mxu0 0.0
    %1232 = vmatpush1.xpose.msra.mxu0 0.0
    %1233 = vmatprep.subr.mxu0 0.0
    %1234 = vmatpush1.xpose.msra.mxu0 0.0
    %1235 = vmatprep.subr.mxu0 0.0
    %1236 = vmatpush1.xpose.msra.mxu0 0.0
    %1237 = vmatprep.subr.mxu0 0.0
    %1238 = vmatpush1.xpose.msra.mxu0 0.0
    %1239 = vmatprep.subr.mxu0 0.0
    %1240 = vmatpush1.xpose.msra.mxu0 0.0
    %1241 = vmatprep.subr.mxu0 0.0
    %1242 = vmatpush1.xpose.msra.mxu0 0.0
    %1243 = vmatprep.subr.mxu0 0.0
    %1244 = vmatpush1.xpose.msra.mxu0 0.0
    %1245 = vmatprep.subr.mxu0 0.0
    %1246 = vmatpush1.xpose.msra.mxu0 0.0
    %1247 = vmatprep.subr.mxu0 0.0
    %1248 = vmatpush1.xpose.msra.mxu0 0.0
    %1249 = vmatprep.subr.mxu0 0.0
    %1250 = vmatpush1.xpose.msra.mxu0 0.0
    %1251 = vmatprep.subr.mxu0 0.0
    %1252 = vmatpush1.xpose.msra.mxu0 0.0
    %1253 = vmatprep.subr.mxu0 0.0
    %1254 = vmatpush1.xpose.msra.mxu0 0.0
    %1255 = vmatprep.subr.mxu0 0.0
    %1256 = vmatpush1.xpose.msra.mxu0 0.0
    %1257 = vmatprep.subr.mxu0 0.0
    %1258 = vmatpush1.xpose.msra.mxu0 0.0
    %1259 = vmatprep.subr.mxu0 0.0
    %1260 = vmatpush1.xpose.msra.mxu0 0.0
    %1261 = vmatprep.subr.mxu0 0.0
    %1262 = vmatpush1.xpose.msra.mxu0 0.0
    %1263 = vmatprep.subr.mxu0 0.0
    %1264 = vmatpush1.xpose.msra.mxu0 0.0
    %1265 = vmatprep.subr.mxu0 0.0
    %1266 = vmatpush1.xpose.msra.mxu0 0.0
    %1267 = vmatprep.subr.mxu0 0.0
    %1268 = vmatpush1.xpose.msra.mxu0 0.0
    %1269 = vmatprep.subr.mxu0 0.0
    %1270 = vmatpush1.xpose.msra.mxu0 0.0
    %1271 = vmatprep.subr.mxu0 0.0
    %1272 = vmatpush1.xpose.msra.mxu0 0.0
    %1273 = vmatprep.subr.mxu0 0.0
    %1274 = vmatpush1.xpose.msra.mxu0 0.0
    %1275 = vmatprep.subr.mxu0 0.0
    %1276 = vmatpush1.xpose.msra.mxu0 0.0
    %1277 = vmatprep.subr.mxu0 0.0
    %1278 = vmatpush1.xpose.msra.mxu0 0.0
    %1279 = vmatprep.subr.mxu0 0.0
    %1280 = vmatpush1.xpose.msra.mxu0 0.0
    %1281 = vmatprep.subr.mxu0 0.0
    %1282 = vmatpush1.xpose.msra.mxu0 0.0
    %1283 = vmatprep.subr.mxu0 0.0
    %1284 = vmatpush1.xpose.msra.mxu0 0.0
    %1285 = vmatprep.subr.mxu0 0.0
    %1286 = vmatpush1.xpose.msra.mxu0 0.0
    %1287 = vmatprep.subr.mxu0 0.0
    %1288 = vmatpush1.xpose.msra.mxu0 0.0
    %1289 = vmatprep.subr.mxu0 0.0
    %1290 = vmatpush1.xpose.msra.mxu0 0.0
    %1291 = vmatprep.mubr.f32.mxu0 0.0
    %1292 = vmatmul.mubr.f32.gmra.mrb[0].mxu0 %v1223
    %v1293 = vpop.f32.mrb[0].mxu0
    %v1294 = vadd.f32 0.0, %v1293
    %v1295 = vpop.f32.mrb[0].mxu0
    %1296 = vdwg.mxu0
    %1297 = vrot.lane.b32.xlu0 %v303, 96
    %v1298 = vpop.permute.xlu0 %1297
    %v1299 = vsel %vm310, %v303, 0
    %v1301 = vsel %vm310, %v1298, 0
    %1303 = vmatprep.subr.mxu0 0.0
    %1304 = vmatpush1.xpose.msra.mxu0 %v1301
    %1305 = vmatprep.subr.mxu0 0.0
    %1306 = vmatpush1.xpose.msra.mxu0 0.0
    %1307 = vmatprep.subr.mxu0 0.0
    %1308 = vmatpush1.xpose.msra.mxu0 0.0
    %1309 = vmatprep.subr.mxu0 0.0
    %1310 = vmatpush1.xpose.msra.mxu0 0.0
    %1311 = vmatprep.subr.mxu0 0.0
    %1312 = vmatpush1.xpose.msra.mxu0 0.0
    %1313 = vmatprep.subr.mxu0 0.0
    %1314 = vmatpush1.xpose.msra.mxu0 0.0
    %1315 = vmatprep.subr.mxu0 0.0
    %1316 = vmatpush1.xpose.msra.mxu0 0.0
    %1317 = vmatprep.subr.mxu0 0.0
    %1318 = vmatpush1.xpose.msra.mxu0 0.0
    %1319 = vmatprep.subr.mxu0 0.0
    %1320 = vmatpush1.xpose.msra.mxu0 0.0
    %1321 = vmatprep.subr.mxu0 0.0
    %1322 = vmatpush1.xpose.msra.mxu0 0.0
    %1323 = vmatprep.subr.mxu0 0.0
    %1324 = vmatpush1.xpose.msra.mxu0 0.0
    %1325 = vmatprep.subr.mxu0 0.0
    %1326 = vmatpush1.xpose.msra.mxu0 0.0
    %1327 = vmatprep.subr.mxu0 0.0
    %1328 = vmatpush1.xpose.msra.mxu0 0.0
    %1329 = vmatprep.subr.mxu0 0.0
    %1330 = vmatpush1.xpose.msra.mxu0 0.0
    %1331 = vmatprep.subr.mxu0 0.0
    %1332 = vmatpush1.xpose.msra.mxu0 0.0
    %1333 = vmatprep.subr.mxu0 0.0
    %1334 = vmatpush1.xpose.msra.mxu0 0.0
    %1335 = vmatprep.subr.mxu0 0.0
    %1336 = vmatpush1.xpose.msra.mxu0 0.0
    %1337 = vmatprep.subr.mxu0 0.0
    %1338 = vmatpush1.xpose.msra.mxu0 0.0
    %1339 = vmatprep.subr.mxu0 0.0
    %1340 = vmatpush1.xpose.msra.mxu0 0.0
    %1341 = vmatprep.subr.mxu0 0.0
    %1342 = vmatpush1.xpose.msra.mxu0 0.0
    %1343 = vmatprep.subr.mxu0 0.0
    %1344 = vmatpush1.xpose.msra.mxu0 0.0
    %1345 = vmatprep.subr.mxu0 0.0
    %1346 = vmatpush1.xpose.msra.mxu0 0.0
    %1347 = vmatprep.subr.mxu0 0.0
    %1348 = vmatpush1.xpose.msra.mxu0 0.0
    %1349 = vmatprep.subr.mxu0 0.0
    %1350 = vmatpush1.xpose.msra.mxu0 0.0
    %1351 = vmatprep.subr.mxu0 0.0
    %1352 = vmatpush1.xpose.msra.mxu0 0.0
    %1353 = vmatprep.subr.mxu0 0.0
    %1354 = vmatpush1.xpose.msra.mxu0 0.0
    %1355 = vmatprep.subr.mxu0 0.0
    %1356 = vmatpush1.xpose.msra.mxu0 0.0
    %1357 = vmatprep.subr.mxu0 0.0
    %1358 = vmatpush1.xpose.msra.mxu0 0.0
    %1359 = vmatprep.subr.mxu0 0.0
    %1360 = vmatpush1.xpose.msra.mxu0 0.0
    %1361 = vmatprep.subr.mxu0 0.0
    %1362 = vmatpush1.xpose.msra.mxu0 0.0
    %1363 = vmatprep.subr.mxu0 0.0
    %1364 = vmatpush1.xpose.msra.mxu0 0.0
    %1365 = vmatprep.subr.mxu0 0.0
    %1366 = vmatpush1.xpose.msra.mxu0 0.0
    %1367 = vmatprep.mubr.f32.mxu0 0.0
    %1368 = vmatmul.mubr.f32.gmra.mrb[0].mxu0 %v1299
    %v1369 = vpop.f32.mrb[0].mxu0
    %v1370 = vadd.f32 0.0, %v1369
    %v1371 = vpop.f32.mrb[0].mxu0
    %1372 = vdwg.mxu0
    %1373 = vrot.lane.b32.xlu0 %v305, 96
    %v1374 = vpop.permute.xlu0 %1373
    %v1375 = vsel %vm310, %v305, 0
    %v1377 = vsel %vm310, %v1374, 0
    %1379 = vmatprep.subr.mxu0 0.0
    %1380 = vmatpush1.xpose.msra.mxu0 %v1377
    %1381 = vmatprep.subr.mxu0 0.0
    %1382 = vmatpush1.xpose.msra.mxu0 0.0
    %1383 = vmatprep.subr.mxu0 0.0
    %1384 = vmatpush1.xpose.msra.mxu0 0.0
    %1385 = vmatprep.subr.mxu0 0.0
    %1386 = vmatpush1.xpose.msra.mxu0 0.0
    %1387 = vmatprep.subr.mxu0 0.0
    %1388 = vmatpush1.xpose.msra.mxu0 0.0
    %1389 = vmatprep.subr.mxu0 0.0
    %1390 = vmatpush1.xpose.msra.mxu0 0.0
    %1391 = vmatprep.subr.mxu0 0.0
    %1392 = vmatpush1.xpose.msra.mxu0 0.0
    %1393 = vmatprep.subr.mxu0 0.0
    %1394 = vmatpush1.xpose.msra.mxu0 0.0
    %1395 = vmatprep.subr.mxu0 0.0
    %1396 = vmatpush1.xpose.msra.mxu0 0.0
    %1397 = vmatprep.subr.mxu0 0.0
    %1398 = vmatpush1.xpose.msra.mxu0 0.0
    %1399 = vmatprep.subr.mxu0 0.0
    %1400 = vmatpush1.xpose.msra.mxu0 0.0
    %1401 = vmatprep.subr.mxu0 0.0
    %1402 = vmatpush1.xpose.msra.mxu0 0.0
    %1403 = vmatprep.subr.mxu0 0.0
    %1404 = vmatpush1.xpose.msra.mxu0 0.0
    %1405 = vmatprep.subr.mxu0 0.0
    %1406 = vmatpush1.xpose.msra.mxu0 0.0
    %1407 = vmatprep.subr.mxu0 0.0
    %1408 = vmatpush1.xpose.msra.mxu0 0.0
    %1409 = vmatprep.subr.mxu0 0.0
    %1410 = vmatpush1.xpose.msra.mxu0 0.0
    %1411 = vmatprep.subr.mxu0 0.0
    %1412 = vmatpush1.xpose.msra.mxu0 0.0
    %1413 = vmatprep.subr.mxu0 0.0
    %1414 = vmatpush1.xpose.msra.mxu0 0.0
    %1415 = vmatprep.subr.mxu0 0.0
    %1416 = vmatpush1.xpose.msra.mxu0 0.0
    %1417 = vmatprep.subr.mxu0 0.0
    %1418 = vmatpush1.xpose.msra.mxu0 0.0
    %1419 = vmatprep.subr.mxu0 0.0
    %1420 = vmatpush1.xpose.msra.mxu0 0.0
    %1421 = vmatprep.subr.mxu0 0.0
    %1422 = vmatpush1.xpose.msra.mxu0 0.0
    %1423 = vmatprep.subr.mxu0 0.0
    %1424 = vmatpush1.xpose.msra.mxu0 0.0
    %1425 = vmatprep.subr.mxu0 0.0
    %1426 = vmatpush1.xpose.msra.mxu0 0.0
    %1427 = vmatprep.subr.mxu0 0.0
    %1428 = vmatpush1.xpose.msra.mxu0 0.0
    %1429 = vmatprep.subr.mxu0 0.0
    %1430 = vmatpush1.xpose.msra.mxu0 0.0
    %1431 = vmatprep.subr.mxu0 0.0
    %1432 = vmatpush1.xpose.msra.mxu0 0.0
    %1433 = vmatprep.subr.mxu0 0.0
    %1434 = vmatpush1.xpose.msra.mxu0 0.0
    %1435 = vmatprep.subr.mxu0 0.0
    %1436 = vmatpush1.xpose.msra.mxu0 0.0
    %1437 = vmatprep.subr.mxu0 0.0
    %1438 = vmatpush1.xpose.msra.mxu0 0.0
    %1439 = vmatprep.subr.mxu0 0.0
    %1440 = vmatpush1.xpose.msra.mxu0 0.0
    %1441 = vmatprep.subr.mxu0 0.0
    %1442 = vmatpush1.xpose.msra.mxu0 0.0
    %1443 = vmatprep.mubr.f32.mxu0 0.0
    %1444 = vmatmul.mubr.f32.gmra.mrb[0].mxu0 %v1375
    %v1445 = vpop.f32.mrb[0].mxu0
    %v1446 = vadd.f32 0.0, %v1445
    %v1447 = vpop.f32.mrb[0].mxu0
    %1448 = vdwg.mxu0
    %1449 = vrot.lane.b32.xlu0 %v307, 96
    %v1450 = vpop.permute.xlu0 %1449
    %v1451 = vsel %vm310, %v307, 0
    %v1453 = vsel %vm310, %v1450, 0
    %1455 = vmatprep.subr.mxu0 0.0
    %1456 = vmatpush1.xpose.msra.mxu0 %v1453
    %1457 = vmatprep.subr.mxu0 0.0
    %1458 = vmatpush1.xpose.msra.mxu0 0.0
    %1459 = vmatprep.subr.mxu0 0.0
    %1460 = vmatpush1.xpose.msra.mxu0 0.0
    %1461 = vmatprep.subr.mxu0 0.0
    %1462 = vmatpush1.xpose.msra.mxu0 0.0
    %1463 = vmatprep.subr.mxu0 0.0
    %1464 = vmatpush1.xpose.msra.mxu0 0.0
    %1465 = vmatprep.subr.mxu0 0.0
    %1466 = vmatpush1.xpose.msra.mxu0 0.0
    %1467 = vmatprep.subr.mxu0 0.0
    %1468 = vmatpush1.xpose.msra.mxu0 0.0
    %1469 = vmatprep.subr.mxu0 0.0
    %1470 = vmatpush1.xpose.msra.mxu0 0.0
    %1471 = vmatprep.subr.mxu0 0.0
    %1472 = vmatpush1.xpose.msra.mxu0 0.0
    %1473 = vmatprep.subr.mxu0 0.0
    %1474 = vmatpush1.xpose.msra.mxu0 0.0
    %1475 = vmatprep.subr.mxu0 0.0
    %1476 = vmatpush1.xpose.msra.mxu0 0.0
    %1477 = vmatprep.subr.mxu0 0.0
    %1478 = vmatpush1.xpose.msra.mxu0 0.0
    %1479 = vmatprep.subr.mxu0 0.0
    %1480 = vmatpush1.xpose.msra.mxu0 0.0
    %1481 = vmatprep.subr.mxu0 0.0
    %1482 = vmatpush1.xpose.msra.mxu0 0.0
    %1483 = vmatprep.subr.mxu0 0.0
    %1484 = vmatpush1.xpose.msra.mxu0 0.0
    %1485 = vmatprep.subr.mxu0 0.0
    %1486 = vmatpush1.xpose.msra.mxu0 0.0
    %1487 = vmatprep.subr.mxu0 0.0
    %1488 = vmatpush1.xpose.msra.mxu0 0.0
    %1489 = vmatprep.subr.mxu0 0.0
    %1490 = vmatpush1.xpose.msra.mxu0 0.0
    %1491 = vmatprep.subr.mxu0 0.0
    %1492 = vmatpush1.xpose.msra.mxu0 0.0
    %1493 = vmatprep.subr.mxu0 0.0
    %1494 = vmatpush1.xpose.msra.mxu0 0.0
    %1495 = vmatprep.subr.mxu0 0.0
    %1496 = vmatpush1.xpose.msra.mxu0 0.0
    %1497 = vmatprep.subr.mxu0 0.0
    %1498 = vmatpush1.xpose.msra.mxu0 0.0
    %1499 = vmatprep.subr.mxu0 0.0
    %1500 = vmatpush1.xpose.msra.mxu0 0.0
    %1501 = vmatprep.subr.mxu0 0.0
    %1502 = vmatpush1.xpose.msra.mxu0 0.0
    %1503 = vmatprep.subr.mxu0 0.0
    %1504 = vmatpush1.xpose.msra.mxu0 0.0
    %1505 = vmatprep.subr.mxu0 0.0
    %1506 = vmatpush1.xpose.msra.mxu0 0.0
    %1507 = vmatprep.subr.mxu0 0.0
    %1508 = vmatpush1.xpose.msra.mxu0 0.0
    %1509 = vmatprep.subr.mxu0 0.0
    %1510 = vmatpush1.xpose.msra.mxu0 0.0
    %1511 = vmatprep.subr.mxu0 0.0
    %1512 = vmatpush1.xpose.msra.mxu0 0.0
    %1513 = vmatprep.subr.mxu0 0.0
    %1514 = vmatpush1.xpose.msra.mxu0 0.0
    %1515 = vmatprep.subr.mxu0 0.0
    %1516 = vmatpush1.xpose.msra.mxu0 0.0
    %1517 = vmatprep.subr.mxu0 0.0
    %1518 = vmatpush1.xpose.msra.mxu0 0.0
    %1519 = vmatprep.mubr.f32.mxu0 0.0
    %1520 = vmatmul.mubr.f32.gmra.mrb[0].mxu0 %v1451
    %v1521 = vpop.f32.mrb[0].mxu0
    %v1522 = vadd.f32 0.0, %v1521
    %v1523 = vpop.f32.mrb[0].mxu0
    %1524 = vdwg.mxu0
    %vm1525 = vcmask 64512
    %v1526 = vsel %vm1525, %v382, -inf
    %1527 = vmax.xlane.f32.xlu0 %v1526
    %v1528 = vpop.xlane.xlu0 %1527
    %v1529 = vsel %vm1525, %v458, -inf
    %1530 = vmax.xlane.f32.xlu0 %v1529
    %v1531 = vpop.xlane.xlu0 %1530
    %v1532 = vsel %vm1525, %v534, -inf
    %1533 = vmax.xlane.f32.xlu0 %v1532
    %v1534 = vpop.xlane.xlu0 %1533
    %v1535 = vsel %vm1525, %v610, -inf
    %1536 = vmax.xlane.f32.xlu0 %v1535
    %v1537 = vpop.xlane.xlu0 %1536
    %v1538 = vsel %vm1525, %v686, -inf
    %1539 = vmax.xlane.f32.xlu0 %v1538
    %v1540 = vpop.xlane.xlu0 %1539
    %v1541 = vsel %vm1525, %v762, -inf
    %1542 = vmax.xlane.f32.xlu0 %v1541
    %v1543 = vpop.xlane.xlu0 %1542
    %v1544 = vsel %vm1525, %v838, -inf
    %1545 = vmax.xlane.f32.xlu0 %v1544
    %v1546 = vpop.xlane.xlu0 %1545
    %v1547 = vsel %vm1525, %v914, -inf
    %1548 = vmax.xlane.f32.xlu0 %v1547
    %v1549 = vpop.xlane.xlu0 %1548
    %v1550 = vsel %vm1525, %v990, -inf
    %1551 = vmax.xlane.f32.xlu0 %v1550
    %v1552 = vpop.xlane.xlu0 %1551
    %v1553 = vsel %vm1525, %v1066, -inf
    %1554 = vmax.xlane.f32.xlu0 %v1553
    %v1555 = vpop.xlane.xlu0 %1554
    %v1556 = vsel %vm1525, %v1142, -inf
    %1557 = vmax.xlane.f32.xlu0 %v1556
    %v1558 = vpop.xlane.xlu0 %1557
    %v1559 = vsel %vm1525, %v1218, -inf
    %1560 = vmax.xlane.f32.xlu0 %v1559
    %v1561 = vpop.xlane.xlu0 %1560
    %v1562 = vsel %vm1525, %v1294, -inf
    %1563 = vmax.xlane.f32.xlu0 %v1562
    %v1564 = vpop.xlane.xlu0 %1563
    %v1565 = vsel %vm1525, %v1370, -inf
    %1566 = vmax.xlane.f32.xlu0 %v1565
    %v1567 = vpop.xlane.xlu0 %1566
    %v1568 = vsel %vm1525, %v1446, -inf
    %1569 = vmax.xlane.f32.xlu0 %v1568
    %v1570 = vpop.xlane.xlu0 %1569
    %v1571 = vsel %vm1525, %v1522, -inf
    %1572 = vmax.xlane.f32.xlu0 %v1571
    %v1573 = vpop.xlane.xlu0 %1572
    %v1574 = vsub.f32 %v382, %v1528
    %v1575 = vsub.f32 %v458, %v1531
    %v1576 = vsub.f32 %v534, %v1534
    %v1577 = vsub.f32 %v610, %v1537
    %v1578 = vsub.f32 %v686, %v1540
    %v1579 = vsub.f32 %v762, %v1543
    %v1580 = vsub.f32 %v838, %v1546
    %v1581 = vsub.f32 %v914, %v1549
    %v1582 = vsub.f32 %v990, %v1552
    %v1583 = vsub.f32 %v1066, %v1555
    %v1584 = vsub.f32 %v1142, %v1558
    %v1585 = vsub.f32 %v1218, %v1561
    %v1586 = vsub.f32 %v1294, %v1564
    %v1587 = vsub.f32 %v1370, %v1567
    %v1588 = vsub.f32 %v1446, %v1570
    %v1589 = vsub.f32 %v1522, %v1573
    %v1590 = vmul.f32 %v1574, 1.442695
    %v1591 = vpow.pop %v1590
    %v1592 = vmul.f32 %v1575, 1.442695
    %v1593 = vpow.pop %v1592
    %v1594 = vmul.f32 %v1576, 1.442695
    %v1595 = vpow.pop %v1594
    %v1596 = vmul.f32 %v1577, 1.442695
    %v1597 = vpow.pop %v1596
    %v1598 = vmul.f32 %v1578, 1.442695
    %v1599 = vpow.pop %v1598
    %v1600 = vmul.f32 %v1579, 1.442695
    %v1601 = vpow.pop %v1600
    %v1602 = vmul.f32 %v1580, 1.442695
    %v1603 = vpow.pop %v1602
    %v1604 = vmul.f32 %v1581, 1.442695
    %v1605 = vpow.pop %v1604
    %v1606 = vmul.f32 %v1582, 1.442695
    %v1607 = vpow.pop %v1606
    %v1608 = vmul.f32 %v1583, 1.442695
    %v1609 = vpow.pop %v1608
    %v1610 = vmul.f32 %v1584, 1.442695
    %v1611 = vpow.pop %v1610
    %v1612 = vmul.f32 %v1585, 1.442695
    %v1613 = vpow.pop %v1612
    %v1614 = vmul.f32 %v1586, 1.442695
    %v1615 = vpow.pop %v1614
    %v1616 = vmul.f32 %v1587, 1.442695
    %v1617 = vpow.pop %v1616
    %v1618 = vmul.f32 %v1588, 1.442695
    %v1619 = vpow.pop %v1618
    %v1620 = vmul.f32 %v1589, 1.442695
    %v1621 = vpow.pop %v1620
    %v1622 = vsel %vm1525, %v1591, 0.0
    %1623 = vadd.xlane.f32.xlu0 %v1622
    %v1624 = vpop.xlane.xlu0 %1623
    %v1625 = vsel %vm1525, %v1593, 0.0
    %1626 = vadd.xlane.f32.xlu0 %v1625
    %v1627 = vpop.xlane.xlu0 %1626
    %v1628 = vsel %vm1525, %v1595, 0.0
    %1629 = vadd.xlane.f32.xlu0 %v1628
    %v1630 = vpop.xlane.xlu0 %1629
    %v1631 = vsel %vm1525, %v1597, 0.0
    %1632 = vadd.xlane.f32.xlu0 %v1631
    %v1633 = vpop.xlane.xlu0 %1632
    %v1634 = vsel %vm1525, %v1599, 0.0
    %1635 = vadd.xlane.f32.xlu0 %v1634
    %v1636 = vpop.xlane.xlu0 %1635
    %v1637 = vsel %vm1525, %v1601, 0.0
    %1638 = vadd.xlane.f32.xlu0 %v1637
    %v1639 = vpop.xlane.xlu0 %1638
    %v1640 = vsel %vm1525, %v1603, 0.0
    %1641 = vadd.xlane.f32.xlu0 %v1640
    %v1642 = vpop.xlane.xlu0 %1641
    %v1643 = vsel %vm1525, %v1605, 0.0
    %1644 = vadd.xlane.f32.xlu0 %v1643
    %v1645 = vpop.xlane.xlu0 %1644
    %v1646 = vsel %vm1525, %v1607, 0.0
    %1647 = vadd.xlane.f32.xlu0 %v1646
    %v1648 = vpop.xlane.xlu0 %1647
    %v1649 = vsel %vm1525, %v1609, 0.0
    %1650 = vadd.xlane.f32.xlu0 %v1649
    %v1651 = vpop.xlane.xlu0 %1650
    %v1652 = vsel %vm1525, %v1611, 0.0
    %1653 = vadd.xlane.f32.xlu0 %v1652
    %v1654 = vpop.xlane.xlu0 %1653
    %v1655 = vsel %vm1525, %v1613, 0.0
    %1656 = vadd.xlane.f32.xlu0 %v1655
    %v1657 = vpop.xlane.xlu0 %1656
    %v1658 = vsel %vm1525, %v1615, 0.0
    %1659 = vadd.xlane.f32.xlu0 %v1658
    %v1660 = vpop.xlane.xlu0 %1659
    %v1661 = vsel %vm1525, %v1617, 0.0
    %1662 = vadd.xlane.f32.xlu0 %v1661
    %v1663 = vpop.xlane.xlu0 %1662
    %v1664 = vsel %vm1525, %v1619, 0.0
    %1665 = vadd.xlane.f32.xlu0 %v1664
    %v1666 = vpop.xlane.xlu0 %1665
    %v1667 = vsel %vm1525, %v1621, 0.0
    %1668 = vadd.xlane.f32.xlu0 %v1667
    %v1669 = vpop.xlane.xlu0 %1668
    %1670 = vrot.lane.b32.xlu0 %v276, 64
    %v1671 = vpop.permute.xlu0 %1670
    %v1674 = vsel %vm1525, %v1591, 0
    %1676 = vmatprep.subr.mxu0 0.0
    %1677 = vmatpush1.msra.mxu0 %v1671
    %1678 = vmatprep.subr.mxu0 0.0
    %1679 = vmatpush1.msra.mxu0 0.0
    %1680 = vmatprep.subr.mxu0 0.0
    %1681 = vmatpush1.msra.mxu0 0.0
    %1682 = vmatprep.subr.mxu0 0.0
    %1683 = vmatpush1.msra.mxu0 0.0
    %1684 = vmatprep.subr.mxu0 0.0
    %1685 = vmatpush1.msra.mxu0 0.0
    %1686 = vmatprep.subr.mxu0 0.0
    %1687 = vmatpush1.msra.mxu0 0.0
    %1688 = vmatprep.subr.mxu0 0.0
    %1689 = vmatpush1.msra.mxu0 0.0
    %1690 = vmatprep.subr.mxu0 0.0
    %1691 = vmatpush1.msra.mxu0 0.0
    %1692 = vmatprep.subr.mxu0 0.0
    %1693 = vmatpush1.msra.mxu0 0.0
    %1694 = vmatprep.subr.mxu0 0.0
    %1695 = vmatpush1.msra.mxu0 0.0
    %1696 = vmatprep.subr.mxu0 0.0
    %1697 = vmatpush1.msra.mxu0 0.0
    %1698 = vmatprep.subr.mxu0 0.0
    %1699 = vmatpush1.msra.mxu0 0.0
    %1700 = vmatprep.subr.mxu0 0.0
    %1701 = vmatpush1.msra.mxu0 0.0
    %1702 = vmatprep.subr.mxu0 0.0
    %1703 = vmatpush1.msra.mxu0 0.0
    %1704 = vmatprep.subr.mxu0 0.0
    %1705 = vmatpush1.msra.mxu0 0.0
    %1706 = vmatprep.subr.mxu0 0.0
    %1707 = vmatpush1.msra.mxu0 0.0
    %1708 = vmatprep.subr.mxu0 0.0
    %1709 = vmatpush1.msra.mxu0 0.0
    %1710 = vmatprep.subr.mxu0 0.0
    %1711 = vmatpush1.msra.mxu0 0.0
    %1712 = vmatprep.subr.mxu0 0.0
    %1713 = vmatpush1.msra.mxu0 0.0
    %1714 = vmatprep.subr.mxu0 0.0
    %1715 = vmatpush1.msra.mxu0 0.0
    %1716 = vmatprep.subr.mxu0 0.0
    %1717 = vmatpush1.msra.mxu0 0.0
    %1718 = vmatprep.subr.mxu0 0.0
    %1719 = vmatpush1.msra.mxu0 0.0
    %1720 = vmatprep.subr.mxu0 0.0
    %1721 = vmatpush1.msra.mxu0 0.0
    %1722 = vmatprep.subr.mxu0 0.0
    %1723 = vmatpush1.msra.mxu0 0.0
    %1724 = vmatprep.subr.mxu0 0.0
    %1725 = vmatpush1.msra.mxu0 0.0
    %1726 = vmatprep.subr.mxu0 0.0
    %1727 = vmatpush1.msra.mxu0 0.0
    %1728 = vmatprep.subr.mxu0 0.0
    %1729 = vmatpush1.msra.mxu0 0.0
    %1730 = vmatprep.subr.mxu0 0.0
    %1731 = vmatpush1.msra.mxu0 0.0
    %1732 = vmatprep.subr.mxu0 0.0
    %1733 = vmatpush1.msra.mxu0 0.0
    %1734 = vmatprep.subr.mxu0 0.0
    %1735 = vmatpush1.msra.mxu0 0.0
    %1736 = vmatprep.subr.mxu0 0.0
    %1737 = vmatpush1.msra.mxu0 0.0
    %1738 = vmatprep.subr.mxu0 0.0
    %1739 = vmatpush1.msra.mxu0 0.0
    %1740 = vmatprep.mubr.f32.mxu0 0.0
    %1741 = vmatmul.mubr.f32.gmra.mrb[0].mxu0 %v1674
    %v1742 = vpop.f32.mrb[0].mxu0
    %v1743 = vadd.f32 0.0, %v1742
    %v1744 = vpop.f32.mrb[0].mxu0
    %1745 = vdwg.mxu0
    %1746 = vrot.lane.b32.xlu0 %v277, 64
    %v1747 = vpop.permute.xlu0 %1746
    %v1750 = vsel %vm1525, %v1593, 0
    %1752 = vmatprep.subr.mxu0 0.0
    %1753 = vmatpush1.msra.mxu0 %v1747
    %1754 = vmatprep.subr.mxu0 0.0
    %1755 = vmatpush1.msra.mxu0 0.0
    %1756 = vmatprep.subr.mxu0 0.0
    %1757 = vmatpush1.msra.mxu0 0.0
    %1758 = vmatprep.subr.mxu0 0.0
    %1759 = vmatpush1.msra.mxu0 0.0
    %1760 = vmatprep.subr.mxu0 0.0
    %1761 = vmatpush1.msra.mxu0 0.0
    %1762 = vmatprep.subr.mxu0 0.0
    %1763 = vmatpush1.msra.mxu0 0.0
    %1764 = vmatprep.subr.mxu0 0.0
    %1765 = vmatpush1.msra.mxu0 0.0
    %1766 = vmatprep.subr.mxu0 0.0
    %1767 = vmatpush1.msra.mxu0 0.0
    %1768 = vmatprep.subr.mxu0 0.0
    %1769 = vmatpush1.msra.mxu0 0.0
    %1770 = vmatprep.subr.mxu0 0.0
    %1771 = vmatpush1.msra.mxu0 0.0
    %1772 = vmatprep.subr.mxu0 0.0
    %1773 = vmatpush1.msra.mxu0 0.0
    %1774 = vmatprep.subr.mxu0 0.0
    %1775 = vmatpush1.msra.mxu0 0.0
    %1776 = vmatprep.subr.mxu0 0.0
    %1777 = vmatpush1.msra.mxu0 0.0
    %1778 = vmatprep.subr.mxu0 0.0
    %1779 = vmatpush1.msra.mxu0 0.0
    %1780 = vmatprep.subr.mxu0 0.0
    %1781 = vmatpush1.msra.mxu0 0.0
    %1782 = vmatprep.subr.mxu0 0.0
    %1783 = vmatpush1.msra.mxu0 0.0
    %1784 = vmatprep.subr.mxu0 0.0
    %1785 = vmatpush1.msra.mxu0 0.0
    %1786 = vmatprep.subr.mxu0 0.0
    %1787 = vmatpush1.msra.mxu0 0.0
    %1788 = vmatprep.subr.mxu0 0.0
    %1789 = vmatpush1.msra.mxu0 0.0
    %1790 = vmatprep.subr.mxu0 0.0
    %1791 = vmatpush1.msra.mxu0 0.0
    %1792 = vmatprep.subr.mxu0 0.0
    %1793 = vmatpush1.msra.mxu0 0.0
    %1794 = vmatprep.subr.mxu0 0.0
    %1795 = vmatpush1.msra.mxu0 0.0
    %1796 = vmatprep.subr.mxu0 0.0
    %1797 = vmatpush1.msra.mxu0 0.0
    %1798 = vmatprep.subr.mxu0 0.0
    %1799 = vmatpush1.msra.mxu0 0.0
    %1800 = vmatprep.subr.mxu0 0.0
    %1801 = vmatpush1.msra.mxu0 0.0
    %1802 = vmatprep.subr.mxu0 0.0
    %1803 = vmatpush1.msra.mxu0 0.0
    %1804 = vmatprep.subr.mxu0 0.0
    %1805 = vmatpush1.msra.mxu0 0.0
    %1806 = vmatprep.subr.mxu0 0.0
    %1807 = vmatpush1.msra.mxu0 0.0
    %1808 = vmatprep.subr.mxu0 0.0
    %1809 = vmatpush1.msra.mxu0 0.0
    %1810 = vmatprep.subr.mxu0 0.0
    %1811 = vmatpush1.msra.mxu0 0.0
    %1812 = vmatprep.subr.mxu0 0.0
    %1813 = vmatpush1.msra.mxu0 0.0
    %1814 = vmatprep.subr.mxu0 0.0
    %1815 = vmatpush1.msra.mxu0 0.0
    %1816 = vmatprep.mubr.f32.mxu0 0.0
    %1817 = vmatmul.mubr.f32.gmra.mrb[0].mxu0 %v1750
    %v1818 = vpop.f32.mrb[0].mxu0
    %v1819 = vadd.f32 0.0, %v1818
    %v1820 = vpop.f32.mrb[0].mxu0
    %1821 = vdwg.mxu0
    %1822 = vrot.lane.b32.xlu0 %v281, 64
    %v1823 = vpop.permute.xlu0 %1822
    %v1826 = vsel %vm1525, %v1595, 0
    %1828 = vmatprep.subr.mxu0 0.0
    %1829 = vmatpush1.msra.mxu0 %v1823
    %1830 = vmatprep.subr.mxu0 0.0
    %1831 = vmatpush1.msra.mxu0 0.0
    %1832 = vmatprep.subr.mxu0 0.0
    %1833 = vmatpush1.msra.mxu0 0.0
    %1834 = vmatprep.subr.mxu0 0.0
    %1835 = vmatpush1.msra.mxu0 0.0
    %1836 = vmatprep.subr.mxu0 0.0
    %1837 = vmatpush1.msra.mxu0 0.0
    %1838 = vmatprep.subr.mxu0 0.0
    %1839 = vmatpush1.msra.mxu0 0.0
    %1840 = vmatprep.subr.mxu0 0.0
    %1841 = vmatpush1.msra.mxu0 0.0
    %1842 = vmatprep.subr.mxu0 0.0
    %1843 = vmatpush1.msra.mxu0 0.0
    %1844 = vmatprep.subr.mxu0 0.0
    %1845 = vmatpush1.msra.mxu0 0.0
    %1846 = vmatprep.subr.mxu0 0.0
    %1847 = vmatpush1.msra.mxu0 0.0
    %1848 = vmatprep.subr.mxu0 0.0
    %1849 = vmatpush1.msra.mxu0 0.0
    %1850 = vmatprep.subr.mxu0 0.0
    %1851 = vmatpush1.msra.mxu0 0.0
    %1852 = vmatprep.subr.mxu0 0.0
    %1853 = vmatpush1.msra.mxu0 0.0
    %1854 = vmatprep.subr.mxu0 0.0
    %1855 = vmatpush1.msra.mxu0 0.0
    %1856 = vmatprep.subr.mxu0 0.0
    %1857 = vmatpush1.msra.mxu0 0.0
    %1858 = vmatprep.subr.mxu0 0.0
    %1859 = vmatpush1.msra.mxu0 0.0
    %1860 = vmatprep.subr.mxu0 0.0
    %1861 = vmatpush1.msra.mxu0 0.0
    %1862 = vmatprep.subr.mxu0 0.0
    %1863 = vmatpush1.msra.mxu0 0.0
    %1864 = vmatprep.subr.mxu0 0.0
    %1865 = vmatpush1.msra.mxu0 0.0
    %1866 = vmatprep.subr.mxu0 0.0
    %1867 = vmatpush1.msra.mxu0 0.0
    %1868 = vmatprep.subr.mxu0 0.0
    %1869 = vmatpush1.msra.mxu0 0.0
    %1870 = vmatprep.subr.mxu0 0.0
    %1871 = vmatpush1.msra.mxu0 0.0
    %1872 = vmatprep.subr.mxu0 0.0
    %1873 = vmatpush1.msra.mxu0 0.0
    %1874 = vmatprep.subr.mxu0 0.0
    %1875 = vmatpush1.msra.mxu0 0.0
    %1876 = vmatprep.subr.mxu0 0.0
    %1877 = vmatpush1.msra.mxu0 0.0
    %1878 = vmatprep.subr.mxu0 0.0
    %1879 = vmatpush1.msra.mxu0 0.0
    %1880 = vmatprep.subr.mxu0 0.0
    %1881 = vmatpush1.msra.mxu0 0.0
    %1882 = vmatprep.subr.mxu0 0.0
    %1883 = vmatpush1.msra.mxu0 0.0
    %1884 = vmatprep.subr.mxu0 0.0
    %1885 = vmatpush1.msra.mxu0 0.0
    %1886 = vmatprep.subr.mxu0 0.0
    %1887 = vmatpush1.msra.mxu0 0.0
    %1888 = vmatprep.subr.mxu0 0.0
    %1889 = vmatpush1.msra.mxu0 0.0
    %1890 = vmatprep.subr.mxu0 0.0
    %1891 = vmatpush1.msra.mxu0 0.0
    %1892 = vmatprep.mubr.f32.mxu0 0.0
    %1893 = vmatmul.mubr.f32.gmra.mrb[0].mxu0 %v1826
    %v1894 = vpop.f32.mrb[0].mxu0
    %v1895 = vadd.f32 0.0, %v1894
    %v1896 = vpop.f32.mrb[0].mxu0
    %1897 = vdwg.mxu0
    %1898 = vrot.lane.b32.xlu0 %v283, 64
    %v1899 = vpop.permute.xlu0 %1898
    %v1902 = vsel %vm1525, %v1597, 0
    %1904 = vmatprep.subr.mxu0 0.0
    %1905 = vmatpush1.msra.mxu0 %v1899
    %1906 = vmatprep.subr.mxu0 0.0
    %1907 = vmatpush1.msra.mxu0 0.0
    %1908 = vmatprep.subr.mxu0 0.0
    %1909 = vmatpush1.msra.mxu0 0.0
    %1910 = vmatprep.subr.mxu0 0.0
    %1911 = vmatpush1.msra.mxu0 0.0
    %1912 = vmatprep.subr.mxu0 0.0
    %1913 = vmatpush1.msra.mxu0 0.0
    %1914 = vmatprep.subr.mxu0 0.0
    %1915 = vmatpush1.msra.mxu0 0.0
    %1916 = vmatprep.subr.mxu0 0.0
    %1917 = vmatpush1.msra.mxu0 0.0
    %1918 = vmatprep.subr.mxu0 0.0
    %1919 = vmatpush1.msra.mxu0 0.0
    %1920 = vmatprep.subr.mxu0 0.0
    %1921 = vmatpush1.msra.mxu0 0.0
    %1922 = vmatprep.subr.mxu0 0.0
    %1923 = vmatpush1.msra.mxu0 0.0
    %1924 = vmatprep.subr.mxu0 0.0
    %1925 = vmatpush1.msra.mxu0 0.0
    %1926 = vmatprep.subr.mxu0 0.0
    %1927 = vmatpush1.msra.mxu0 0.0
    %1928 = vmatprep.subr.mxu0 0.0
    %1929 = vmatpush1.msra.mxu0 0.0
    %1930 = vmatprep.subr.mxu0 0.0
    %1931 = vmatpush1.msra.mxu0 0.0
    %1932 = vmatprep.subr.mxu0 0.0
    %1933 = vmatpush1.msra.mxu0 0.0
    %1934 = vmatprep.subr.mxu0 0.0
    %1935 = vmatpush1.msra.mxu0 0.0
    %1936 = vmatprep.subr.mxu0 0.0
    %1937 = vmatpush1.msra.mxu0 0.0
    %1938 = vmatprep.subr.mxu0 0.0
    %1939 = vmatpush1.msra.mxu0 0.0
    %1940 = vmatprep.subr.mxu0 0.0
    %1941 = vmatpush1.msra.mxu0 0.0
    %1942 = vmatprep.subr.mxu0 0.0
    %1943 = vmatpush1.msra.mxu0 0.0
    %1944 = vmatprep.subr.mxu0 0.0
    %1945 = vmatpush1.msra.mxu0 0.0
    %1946 = vmatprep.subr.mxu0 0.0
    %1947 = vmatpush1.msra.mxu0 0.0
    %1948 = vmatprep.subr.mxu0 0.0
    %1949 = vmatpush1.msra.mxu0 0.0
    %1950 = vmatprep.subr.mxu0 0.0
    %1951 = vmatpush1.msra.mxu0 0.0
    %1952 = vmatprep.subr.mxu0 0.0
    %1953 = vmatpush1.msra.mxu0 0.0
    %1954 = vmatprep.subr.mxu0 0.0
    %1955 = vmatpush1.msra.mxu0 0.0
    %1956 = vmatprep.subr.mxu0 0.0
    %1957 = vmatpush1.msra.mxu0 0.0
    %1958 = vmatprep.subr.mxu0 0.0
    %1959 = vmatpush1.msra.mxu0 0.0
    %1960 = vmatprep.subr.mxu0 0.0
    %1961 = vmatpush1.msra.mxu0 0.0
    %1962 = vmatprep.subr.mxu0 0.0
    %1963 = vmatpush1.msra.mxu0 0.0
    %1964 = vmatprep.subr.mxu0 0.0
    %1965 = vmatpush1.msra.mxu0 0.0
    %1966 = vmatprep.subr.mxu0 0.0
    %1967 = vmatpush1.msra.mxu0 0.0
    %1968 = vmatprep.mubr.f32.mxu0 0.0
    %1969 = vmatmul.mubr.f32.gmra.mrb[0].mxu0 %v1902
    %v1970 = vpop.f32.mrb[0].mxu0
    %v1971 = vadd.f32 0.0, %v1970
    %v1972 = vpop.f32.mrb[0].mxu0
    %1973 = vdwg.mxu0
    %1974 = vrot.lane.b32.xlu0 %v285, 64
    %v1975 = vpop.permute.xlu0 %1974
    %v1978 = vsel %vm1525, %v1599, 0
    %1980 = vmatprep.subr.mxu0 0.0
    %1981 = vmatpush1.msra.mxu0 %v1975
    %1982 = vmatprep.subr.mxu0 0.0
    %1983 = vmatpush1.msra.mxu0 0.0
    %1984 = vmatprep.subr.mxu0 0.0
    %1985 = vmatpush1.msra.mxu0 0.0
    %1986 = vmatprep.subr.mxu0 0.0
    %1987 = vmatpush1.msra.mxu0 0.0
    %1988 = vmatprep.subr.mxu0 0.0
    %1989 = vmatpush1.msra.mxu0 0.0
    %1990 = vmatprep.subr.mxu0 0.0
    %1991 = vmatpush1.msra.mxu0 0.0
    %1992 = vmatprep.subr.mxu0 0.0
    %1993 = vmatpush1.msra.mxu0 0.0
    %1994 = vmatprep.subr.mxu0 0.0
    %1995 = vmatpush1.msra.mxu0 0.0
    %1996 = vmatprep.subr.mxu0 0.0
    %1997 = vmatpush1.msra.mxu0 0.0
    %1998 = vmatprep.subr.mxu0 0.0
    %1999 = vmatpush1.msra.mxu0 0.0
    %2000 = vmatprep.subr.mxu0 0.0
    %2001 = vmatpush1.msra.mxu0 0.0
    %2002 = vmatprep.subr.mxu0 0.0
    %2003 = vmatpush1.msra.mxu0 0.0
    %2004 = vmatprep.subr.mxu0 0.0
    %2005 = vmatpush1.msra.mxu0 0.0
    %2006 = vmatprep.subr.mxu0 0.0
    %2007 = vmatpush1.msra.mxu0 0.0
    %2008 = vmatprep.subr.mxu0 0.0
    %2009 = vmatpush1.msra.mxu0 0.0
    %2010 = vmatprep.subr.mxu0 0.0
    %2011 = vmatpush1.msra.mxu0 0.0
    %2012 = vmatprep.subr.mxu0 0.0
    %2013 = vmatpush1.msra.mxu0 0.0
    %2014 = vmatprep.subr.mxu0 0.0
    %2015 = vmatpush1.msra.mxu0 0.0
    %2016 = vmatprep.subr.mxu0 0.0
    %2017 = vmatpush1.msra.mxu0 0.0
    %2018 = vmatprep.subr.mxu0 0.0
    %2019 = vmatpush1.msra.mxu0 0.0
    %2020 = vmatprep.subr.mxu0 0.0
    %2021 = vmatpush1.msra.mxu0 0.0
    %2022 = vmatprep.subr.mxu0 0.0
    %2023 = vmatpush1.msra.mxu0 0.0
    %2024 = vmatprep.subr.mxu0 0.0
    %2025 = vmatpush1.msra.mxu0 0.0
    %2026 = vmatprep.subr.mxu0 0.0
    %2027 = vmatpush1.msra.mxu0 0.0
    %2028 = vmatprep.subr.mxu0 0.0
    %2029 = vmatpush1.msra.mxu0 0.0
    %2030 = vmatprep.subr.mxu0 0.0
    %2031 = vmatpush1.msra.mxu0 0.0
    %2032 = vmatprep.subr.mxu0 0.0
    %2033 = vmatpush1.msra.mxu0 0.0
    %2034 = vmatprep.subr.mxu0 0.0
    %2035 = vmatpush1.msra.mxu0 0.0
    %2036 = vmatprep.subr.mxu0 0.0
    %2037 = vmatpush1.msra.mxu0 0.0
    %2038 = vmatprep.subr.mxu0 0.0
    %2039 = vmatpush1.msra.mxu0 0.0
    %2040 = vmatprep.subr.mxu0 0.0
    %2041 = vmatpush1.msra.mxu0 0.0
    %2042 = vmatprep.subr.mxu0 0.0
    %2043 = vmatpush1.msra.mxu0 0.0
    %2044 = vmatprep.mubr.f32.mxu0 0.0
    %2045 = vmatmul.mubr.f32.gmra.mrb[0].mxu0 %v1978
    %v2046 = vpop.f32.mrb[0].mxu0
    %v2047 = vadd.f32 0.0, %v2046
    %v2048 = vpop.f32.mrb[0].mxu0
    %2049 = vdwg.mxu0
    %2050 = vrot.lane.b32.xlu0 %v287, 64
    %v2051 = vpop.permute.xlu0 %2050
    %v2054 = vsel %vm1525, %v1601, 0
    %2056 = vmatprep.subr.mxu0 0.0
    %2057 = vmatpush1.msra.mxu0 %v2051
    %2058 = vmatprep.subr.mxu0 0.0
    %2059 = vmatpush1.msra.mxu0 0.0
    %2060 = vmatprep.subr.mxu0 0.0
    %2061 = vmatpush1.msra.mxu0 0.0
    %2062 = vmatprep.subr.mxu0 0.0
    %2063 = vmatpush1.msra.mxu0 0.0
    %2064 = vmatprep.subr.mxu0 0.0
    %2065 = vmatpush1.msra.mxu0 0.0
    %2066 = vmatprep.subr.mxu0 0.0
    %2067 = vmatpush1.msra.mxu0 0.0
    %2068 = vmatprep.subr.mxu0 0.0
    %2069 = vmatpush1.msra.mxu0 0.0
    %2070 = vmatprep.subr.mxu0 0.0
    %2071 = vmatpush1.msra.mxu0 0.0
    %2072 = vmatprep.subr.mxu0 0.0
    %2073 = vmatpush1.msra.mxu0 0.0
    %2074 = vmatprep.subr.mxu0 0.0
    %2075 = vmatpush1.msra.mxu0 0.0
    %2076 = vmatprep.subr.mxu0 0.0
    %2077 = vmatpush1.msra.mxu0 0.0
    %2078 = vmatprep.subr.mxu0 0.0
    %2079 = vmatpush1.msra.mxu0 0.0
    %2080 = vmatprep.subr.mxu0 0.0
    %2081 = vmatpush1.msra.mxu0 0.0
    %2082 = vmatprep.subr.mxu0 0.0
    %2083 = vmatpush1.msra.mxu0 0.0
    %2084 = vmatprep.subr.mxu0 0.0
    %2085 = vmatpush1.msra.mxu0 0.0
    %2086 = vmatprep.subr.mxu0 0.0
    %2087 = vmatpush1.msra.mxu0 0.0
    %2088 = vmatprep.subr.mxu0 0.0
    %2089 = vmatpush1.msra.mxu0 0.0
    %2090 = vmatprep.subr.mxu0 0.0
    %2091 = vmatpush1.msra.mxu0 0.0
    %2092 = vmatprep.subr.mxu0 0.0
    %2093 = vmatpush1.msra.mxu0 0.0
    %2094 = vmatprep.subr.mxu0 0.0
    %2095 = vmatpush1.msra.mxu0 0.0
    %2096 = vmatprep.subr.mxu0 0.0
    %2097 = vmatpush1.msra.mxu0 0.0
    %2098 = vmatprep.subr.mxu0 0.0
    %2099 = vmatpush1.msra.mxu0 0.0
    %2100 = vmatprep.subr.mxu0 0.0
    %2101 = vmatpush1.msra.mxu0 0.0
    %2102 = vmatprep.subr.mxu0 0.0
    %2103 = vmatpush1.msra.mxu0 0.0
    %2104 = vmatprep.subr.mxu0 0.0
    %2105 = vmatpush1.msra.mxu0 0.0
    %2106 = vmatprep.subr.mxu0 0.0
    %2107 = vmatpush1.msra.mxu0 0.0
    %2108 = vmatprep.subr.mxu0 0.0
    %2109 = vmatpush1.msra.mxu0 0.0
    %2110 = vmatprep.subr.mxu0 0.0
    %2111 = vmatpush1.msra.mxu0 0.0
    %2112 = vmatprep.subr.mxu0 0.0
    %2113 = vmatpush1.msra.mxu0 0.0
    %2114 = vmatprep.subr.mxu0 0.0
    %2115 = vmatpush1.msra.mxu0 0.0
    %2116 = vmatprep.subr.mxu0 0.0
    %2117 = vmatpush1.msra.mxu0 0.0
    %2118 = vmatprep.subr.mxu0 0.0
    %2119 = vmatpush1.msra.mxu0 0.0
    %2120 = vmatprep.mubr.f32.mxu0 0.0
    %2121 = vmatmul.mubr.f32.gmra.mrb[0].mxu0 %v2054
    %v2122 = vpop.f32.mrb[0].mxu0
    %v2123 = vadd.f32 0.0, %v2122
    %v2124 = vpop.f32.mrb[0].mxu0
    %2125 = vdwg.mxu0
    %2126 = vrot.lane.b32.xlu0 %v289, 64
    %v2127 = vpop.permute.xlu0 %2126
    %v2130 = vsel %vm1525, %v1603, 0
    %2132 = vmatprep.subr.mxu0 0.0
    %2133 = vmatpush1.msra.mxu0 %v2127
    %2134 = vmatprep.subr.mxu0 0.0
    %2135 = vmatpush1.msra.mxu0 0.0
    %2136 = vmatprep.subr.mxu0 0.0
    %2137 = vmatpush1.msra.mxu0 0.0
    %2138 = vmatprep.subr.mxu0 0.0
    %2139 = vmatpush1.msra.mxu0 0.0
    %2140 = vmatprep.subr.mxu0 0.0
    %2141 = vmatpush1.msra.mxu0 0.0
    %2142 = vmatprep.subr.mxu0 0.0
    %2143 = vmatpush1.msra.mxu0 0.0
    %2144 = vmatprep.subr.mxu0 0.0
    %2145 = vmatpush1.msra.mxu0 0.0
    %2146 = vmatprep.subr.mxu0 0.0
    %2147 = vmatpush1.msra.mxu0 0.0
    %2148 = vmatprep.subr.mxu0 0.0
    %2149 = vmatpush1.msra.mxu0 0.0
    %2150 = vmatprep.subr.mxu0 0.0
    %2151 = vmatpush1.msra.mxu0 0.0
    %2152 = vmatprep.subr.mxu0 0.0
    %2153 = vmatpush1.msra.mxu0 0.0
    %2154 = vmatprep.subr.mxu0 0.0
    %2155 = vmatpush1.msra.mxu0 0.0
    %2156 = vmatprep.subr.mxu0 0.0
    %2157 = vmatpush1.msra.mxu0 0.0
    %2158 = vmatprep.subr.mxu0 0.0
    %2159 = vmatpush1.msra.mxu0 0.0
    %2160 = vmatprep.subr.mxu0 0.0
    %2161 = vmatpush1.msra.mxu0 0.0
    %2162 = vmatprep.subr.mxu0 0.0
    %2163 = vmatpush1.msra.mxu0 0.0
    %2164 = vmatprep.subr.mxu0 0.0
    %2165 = vmatpush1.msra.mxu0 0.0
    %2166 = vmatprep.subr.mxu0 0.0
    %2167 = vmatpush1.msra.mxu0 0.0
    %2168 = vmatprep.subr.mxu0 0.0
    %2169 = vmatpush1.msra.mxu0 0.0
    %2170 = vmatprep.subr.mxu0 0.0
    %2171 = vmatpush1.msra.mxu0 0.0
    %2172 = vmatprep.subr.mxu0 0.0
    %2173 = vmatpush1.msra.mxu0 0.0
    %2174 = vmatprep.subr.mxu0 0.0
    %2175 = vmatpush1.msra.mxu0 0.0
    %2176 = vmatprep.subr.mxu0 0.0
    %2177 = vmatpush1.msra.mxu0 0.0
    %2178 = vmatprep.subr.mxu0 0.0
    %2179 = vmatpush1.msra.mxu0 0.0
    %2180 = vmatprep.subr.mxu0 0.0
    %2181 = vmatpush1.msra.mxu0 0.0
    %2182 = vmatprep.subr.mxu0 0.0
    %2183 = vmatpush1.msra.mxu0 0.0
    %2184 = vmatprep.subr.mxu0 0.0
    %2185 = vmatpush1.msra.mxu0 0.0
    %2186 = vmatprep.subr.mxu0 0.0
    %2187 = vmatpush1.msra.mxu0 0.0
    %2188 = vmatprep.subr.mxu0 0.0
    %2189 = vmatpush1.msra.mxu0 0.0
    %2190 = vmatprep.subr.mxu0 0.0
    %2191 = vmatpush1.msra.mxu0 0.0
    %2192 = vmatprep.subr.mxu0 0.0
    %2193 = vmatpush1.msra.mxu0 0.0
    %2194 = vmatprep.subr.mxu0 0.0
    %2195 = vmatpush1.msra.mxu0 0.0
    %2196 = vmatprep.mubr.f32.mxu0 0.0
    %2197 = vmatmul.mubr.f32.gmra.mrb[0].mxu0 %v2130
    %v2198 = vpop.f32.mrb[0].mxu0
    %v2199 = vadd.f32 0.0, %v2198
    %v2200 = vpop.f32.mrb[0].mxu0
    %2201 = vdwg.mxu0
    %2202 = vrot.lane.b32.xlu0 %v291, 64
    %v2203 = vpop.permute.xlu0 %2202
    %v2206 = vsel %vm1525, %v1605, 0
    %2208 = vmatprep.subr.mxu0 0.0
    %2209 = vmatpush1.msra.mxu0 %v2203
    %2210 = vmatprep.subr.mxu0 0.0
    %2211 = vmatpush1.msra.mxu0 0.0
    %2212 = vmatprep.subr.mxu0 0.0
    %2213 = vmatpush1.msra.mxu0 0.0
    %2214 = vmatprep.subr.mxu0 0.0
    %2215 = vmatpush1.msra.mxu0 0.0
    %2216 = vmatprep.subr.mxu0 0.0
    %2217 = vmatpush1.msra.mxu0 0.0
    %2218 = vmatprep.subr.mxu0 0.0
    %2219 = vmatpush1.msra.mxu0 0.0
    %2220 = vmatprep.subr.mxu0 0.0
    %2221 = vmatpush1.msra.mxu0 0.0
    %2222 = vmatprep.subr.mxu0 0.0
    %2223 = vmatpush1.msra.mxu0 0.0
    %2224 = vmatprep.subr.mxu0 0.0
    %2225 = vmatpush1.msra.mxu0 0.0
    %2226 = vmatprep.subr.mxu0 0.0
    %2227 = vmatpush1.msra.mxu0 0.0
    %2228 = vmatprep.subr.mxu0 0.0
    %2229 = vmatpush1.msra.mxu0 0.0
    %2230 = vmatprep.subr.mxu0 0.0
    %2231 = vmatpush1.msra.mxu0 0.0
    %2232 = vmatprep.subr.mxu0 0.0
    %2233 = vmatpush1.msra.mxu0 0.0
    %2234 = vmatprep.subr.mxu0 0.0
    %2235 = vmatpush1.msra.mxu0 0.0
    %2236 = vmatprep.subr.mxu0 0.0
    %2237 = vmatpush1.msra.mxu0 0.0
    %2238 = vmatprep.subr.mxu0 0.0
    %2239 = vmatpush1.msra.mxu0 0.0
    %2240 = vmatprep.subr.mxu0 0.0
    %2241 = vmatpush1.msra.mxu0 0.0
    %2242 = vmatprep.subr.mxu0 0.0
    %2243 = vmatpush1.msra.mxu0 0.0
    %2244 = vmatprep.subr.mxu0 0.0
    %2245 = vmatpush1.msra.mxu0 0.0
    %2246 = vmatprep.subr.mxu0 0.0
    %2247 = vmatpush1.msra.mxu0 0.0
    %2248 = vmatprep.subr.mxu0 0.0
    %2249 = vmatpush1.msra.mxu0 0.0
    %2250 = vmatprep.subr.mxu0 0.0
    %2251 = vmatpush1.msra.mxu0 0.0
    %2252 = vmatprep.subr.mxu0 0.0
    %2253 = vmatpush1.msra.mxu0 0.0
    %2254 = vmatprep.subr.mxu0 0.0
    %2255 = vmatpush1.msra.mxu0 0.0
    %2256 = vmatprep.subr.mxu0 0.0
    %2257 = vmatpush1.msra.mxu0 0.0
    %2258 = vmatprep.subr.mxu0 0.0
    %2259 = vmatpush1.msra.mxu0 0.0
    %2260 = vmatprep.subr.mxu0 0.0
    %2261 = vmatpush1.msra.mxu0 0.0
    %2262 = vmatprep.subr.mxu0 0.0
    %2263 = vmatpush1.msra.mxu0 0.0
    %2264 = vmatprep.subr.mxu0 0.0
    %2265 = vmatpush1.msra.mxu0 0.0
    %2266 = vmatprep.subr.mxu0 0.0
    %2267 = vmatpush1.msra.mxu0 0.0
    %2268 = vmatprep.subr.mxu0 0.0
    %2269 = vmatpush1.msra.mxu0 0.0
    %2270 = vmatprep.subr.mxu0 0.0
    %2271 = vmatpush1.msra.mxu0 0.0
    %2272 = vmatprep.mubr.f32.mxu0 0.0
    %2273 = vmatmul.mubr.f32.gmra.mrb[0].mxu0 %v2206
    %v2274 = vpop.f32.mrb[0].mxu0
    %v2275 = vadd.f32 0.0, %v2274
    %v2276 = vpop.f32.mrb[0].mxu0
    %2277 = vdwg.mxu0
    %2278 = vrot.lane.b32.xlu0 %v293, 64
    %v2279 = vpop.permute.xlu0 %2278
    %v2282 = vsel %vm1525, %v1607, 0
    %2284 = vmatprep.subr.mxu0 0.0
    %2285 = vmatpush1.msra.mxu0 %v2279
    %2286 = vmatprep.subr.mxu0 0.0
    %2287 = vmatpush1.msra.mxu0 0.0
    %2288 = vmatprep.subr.mxu0 0.0
    %2289 = vmatpush1.msra.mxu0 0.0
    %2290 = vmatprep.subr.mxu0 0.0
    %2291 = vmatpush1.msra.mxu0 0.0
    %2292 = vmatprep.subr.mxu0 0.0
    %2293 = vmatpush1.msra.mxu0 0.0
    %2294 = vmatprep.subr.mxu0 0.0
    %2295 = vmatpush1.msra.mxu0 0.0
    %2296 = vmatprep.subr.mxu0 0.0
    %2297 = vmatpush1.msra.mxu0 0.0
    %2298 = vmatprep.subr.mxu0 0.0
    %2299 = vmatpush1.msra.mxu0 0.0
    %2300 = vmatprep.subr.mxu0 0.0
    %2301 = vmatpush1.msra.mxu0 0.0
    %2302 = vmatprep.subr.mxu0 0.0
    %2303 = vmatpush1.msra.mxu0 0.0
    %2304 = vmatprep.subr.mxu0 0.0
    %2305 = vmatpush1.msra.mxu0 0.0
    %2306 = vmatprep.subr.mxu0 0.0
    %2307 = vmatpush1.msra.mxu0 0.0
    %2308 = vmatprep.subr.mxu0 0.0
    %2309 = vmatpush1.msra.mxu0 0.0
    %2310 = vmatprep.subr.mxu0 0.0
    %2311 = vmatpush1.msra.mxu0 0.0
    %2312 = vmatprep.subr.mxu0 0.0
    %2313 = vmatpush1.msra.mxu0 0.0
    %2314 = vmatprep.subr.mxu0 0.0
    %2315 = vmatpush1.msra.mxu0 0.0
    %2316 = vmatprep.subr.mxu0 0.0
    %2317 = vmatpush1.msra.mxu0 0.0
    %2318 = vmatprep.subr.mxu0 0.0
    %2319 = vmatpush1.msra.mxu0 0.0
    %2320 = vmatprep.subr.mxu0 0.0
    %2321 = vmatpush1.msra.mxu0 0.0
    %2322 = vmatprep.subr.mxu0 0.0
    %2323 = vmatpush1.msra.mxu0 0.0
    %2324 = vmatprep.subr.mxu0 0.0
    %2325 = vmatpush1.msra.mxu0 0.0
    %2326 = vmatprep.subr.mxu0 0.0
    %2327 = vmatpush1.msra.mxu0 0.0
    %2328 = vmatprep.subr.mxu0 0.0
    %2329 = vmatpush1.msra.mxu0 0.0
    %2330 = vmatprep.subr.mxu0 0.0
    %2331 = vmatpush1.msra.mxu0 0.0
    %2332 = vmatprep.subr.mxu0 0.0
    %2333 = vmatpush1.msra.mxu0 0.0
    %2334 = vmatprep.subr.mxu0 0.0
    %2335 = vmatpush1.msra.mxu0 0.0
    %2336 = vmatprep.subr.mxu0 0.0
    %2337 = vmatpush1.msra.mxu0 0.0
    %2338 = vmatprep.subr.mxu0 0.0
    %2339 = vmatpush1.msra.mxu0 0.0
    %2340 = vmatprep.subr.mxu0 0.0
    %2341 = vmatpush1.msra.mxu0 0.0
    %2342 = vmatprep.subr.mxu0 0.0
    %2343 = vmatpush1.msra.mxu0 0.0
    %2344 = vmatprep.subr.mxu0 0.0
    %2345 = vmatpush1.msra.mxu0 0.0
    %2346 = vmatprep.subr.mxu0 0.0
    %2347 = vmatpush1.msra.mxu0 0.0
    %2348 = vmatprep.mubr.f32.mxu0 0.0
    %2349 = vmatmul.mubr.f32.gmra.mrb[0].mxu0 %v2282
    %v2350 = vpop.f32.mrb[0].mxu0
    %v2351 = vadd.f32 0.0, %v2350
    %v2352 = vpop.f32.mrb[0].mxu0
    %2353 = vdwg.mxu0
    %2354 = vrot.lane.b32.xlu0 %v295, 64
    %v2355 = vpop.permute.xlu0 %2354
    %v2358 = vsel %vm1525, %v1609, 0
    %2360 = vmatprep.subr.mxu0 0.0
    %2361 = vmatpush1.msra.mxu0 %v2355
    %2362 = vmatprep.subr.mxu0 0.0
    %2363 = vmatpush1.msra.mxu0 0.0
    %2364 = vmatprep.subr.mxu0 0.0
    %2365 = vmatpush1.msra.mxu0 0.0
    %2366 = vmatprep.subr.mxu0 0.0
    %2367 = vmatpush1.msra.mxu0 0.0
    %2368 = vmatprep.subr.mxu0 0.0
    %2369 = vmatpush1.msra.mxu0 0.0
    %2370 = vmatprep.subr.mxu0 0.0
    %2371 = vmatpush1.msra.mxu0 0.0
    %2372 = vmatprep.subr.mxu0 0.0
    %2373 = vmatpush1.msra.mxu0 0.0
    %2374 = vmatprep.subr.mxu0 0.0
    %2375 = vmatpush1.msra.mxu0 0.0
    %2376 = vmatprep.subr.mxu0 0.0
    %2377 = vmatpush1.msra.mxu0 0.0
    %2378 = vmatprep.subr.mxu0 0.0
    %2379 = vmatpush1.msra.mxu0 0.0
    %2380 = vmatprep.subr.mxu0 0.0
    %2381 = vmatpush1.msra.mxu0 0.0
    %2382 = vmatprep.subr.mxu0 0.0
    %2383 = vmatpush1.msra.mxu0 0.0
    %2384 = vmatprep.subr.mxu0 0.0
    %2385 = vmatpush1.msra.mxu0 0.0
    %2386 = vmatprep.subr.mxu0 0.0
    %2387 = vmatpush1.msra.mxu0 0.0
    %2388 = vmatprep.subr.mxu0 0.0
    %2389 = vmatpush1.msra.mxu0 0.0
    %2390 = vmatprep.subr.mxu0 0.0
    %2391 = vmatpush1.msra.mxu0 0.0
    %2392 = vmatprep.subr.mxu0 0.0
    %2393 = vmatpush1.msra.mxu0 0.0
    %2394 = vmatprep.subr.mxu0 0.0
    %2395 = vmatpush1.msra.mxu0 0.0
    %2396 = vmatprep.subr.mxu0 0.0
    %2397 = vmatpush1.msra.mxu0 0.0
    %2398 = vmatprep.subr.mxu0 0.0
    %2399 = vmatpush1.msra.mxu0 0.0
    %2400 = vmatprep.subr.mxu0 0.0
    %2401 = vmatpush1.msra.mxu0 0.0
    %2402 = vmatprep.subr.mxu0 0.0
    %2403 = vmatpush1.msra.mxu0 0.0
    %2404 = vmatprep.subr.mxu0 0.0
    %2405 = vmatpush1.msra.mxu0 0.0
    %2406 = vmatprep.subr.mxu0 0.0
    %2407 = vmatpush1.msra.mxu0 0.0
    %2408 = vmatprep.subr.mxu0 0.0
    %2409 = vmatpush1.msra.mxu0 0.0
    %2410 = vmatprep.subr.mxu0 0.0
    %2411 = vmatpush1.msra.mxu0 0.0
    %2412 = vmatprep.subr.mxu0 0.0
    %2413 = vmatpush1.msra.mxu0 0.0
    %2414 = vmatprep.subr.mxu0 0.0
    %2415 = vmatpush1.msra.mxu0 0.0
    %2416 = vmatprep.subr.mxu0 0.0
    %2417 = vmatpush1.msra.mxu0 0.0
    %2418 = vmatprep.subr.mxu0 0.0
    %2419 = vmatpush1.msra.mxu0 0.0
    %2420 = vmatprep.subr.mxu0 0.0
    %2421 = vmatpush1.msra.mxu0 0.0
    %2422 = vmatprep.subr.mxu0 0.0
    %2423 = vmatpush1.msra.mxu0 0.0
    %2424 = vmatprep.mubr.f32.mxu0 0.0
    %2425 = vmatmul.mubr.f32.gmra.mrb[0].mxu0 %v2358
    %v2426 = vpop.f32.mrb[0].mxu0
    %v2427 = vadd.f32 0.0, %v2426
    %v2428 = vpop.f32.mrb[0].mxu0
    %2429 = vdwg.mxu0
    %2430 = vrot.lane.b32.xlu0 %v297, 64
    %v2431 = vpop.permute.xlu0 %2430
    %v2434 = vsel %vm1525, %v1611, 0
    %2436 = vmatprep.subr.mxu0 0.0
    %2437 = vmatpush1.msra.mxu0 %v2431
    %2438 = vmatprep.subr.mxu0 0.0
    %2439 = vmatpush1.msra.mxu0 0.0
    %2440 = vmatprep.subr.mxu0 0.0
    %2441 = vmatpush1.msra.mxu0 0.0
    %2442 = vmatprep.subr.mxu0 0.0
    %2443 = vmatpush1.msra.mxu0 0.0
    %2444 = vmatprep.subr.mxu0 0.0
    %2445 = vmatpush1.msra.mxu0 0.0
    %2446 = vmatprep.subr.mxu0 0.0
    %2447 = vmatpush1.msra.mxu0 0.0
    %2448 = vmatprep.subr.mxu0 0.0
    %2449 = vmatpush1.msra.mxu0 0.0
    %2450 = vmatprep.subr.mxu0 0.0
    %2451 = vmatpush1.msra.mxu0 0.0
    %2452 = vmatprep.subr.mxu0 0.0
    %2453 = vmatpush1.msra.mxu0 0.0
    %2454 = vmatprep.subr.mxu0 0.0
    %2455 = vmatpush1.msra.mxu0 0.0
    %2456 = vmatprep.subr.mxu0 0.0
    %2457 = vmatpush1.msra.mxu0 0.0
    %2458 = vmatprep.subr.mxu0 0.0
    %2459 = vmatpush1.msra.mxu0 0.0
    %2460 = vmatprep.subr.mxu0 0.0
    %2461 = vmatpush1.msra.mxu0 0.0
    %2462 = vmatprep.subr.mxu0 0.0
    %2463 = vmatpush1.msra.mxu0 0.0
    %2464 = vmatprep.subr.mxu0 0.0
    %2465 = vmatpush1.msra.mxu0 0.0
    %2466 = vmatprep.subr.mxu0 0.0
    %2467 = vmatpush1.msra.mxu0 0.0
    %2468 = vmatprep.subr.mxu0 0.0
    %2469 = vmatpush1.msra.mxu0 0.0
    %2470 = vmatprep.subr.mxu0 0.0
    %2471 = vmatpush1.msra.mxu0 0.0
    %2472 = vmatprep.subr.mxu0 0.0
    %2473 = vmatpush1.msra.mxu0 0.0
    %2474 = vmatprep.subr.mxu0 0.0
    %2475 = vmatpush1.msra.mxu0 0.0
    %2476 = vmatprep.subr.mxu0 0.0
    %2477 = vmatpush1.msra.mxu0 0.0
    %2478 = vmatprep.subr.mxu0 0.0
    %2479 = vmatpush1.msra.mxu0 0.0
    %2480 = vmatprep.subr.mxu0 0.0
    %2481 = vmatpush1.msra.mxu0 0.0
    %2482 = vmatprep.subr.mxu0 0.0
    %2483 = vmatpush1.msra.mxu0 0.0
    %2484 = vmatprep.subr.mxu0 0.0
    %2485 = vmatpush1.msra.mxu0 0.0
    %2486 = vmatprep.subr.mxu0 0.0
    %2487 = vmatpush1.msra.mxu0 0.0
    %2488 = vmatprep.subr.mxu0 0.0
    %2489 = vmatpush1.msra.mxu0 0.0
    %2490 = vmatprep.subr.mxu0 0.0
    %2491 = vmatpush1.msra.mxu0 0.0
    %2492 = vmatprep.subr.mxu0 0.0
    %2493 = vmatpush1.msra.mxu0 0.0
    %2494 = vmatprep.subr.mxu0 0.0
    %2495 = vmatpush1.msra.mxu0 0.0
    %2496 = vmatprep.subr.mxu0 0.0
    %2497 = vmatpush1.msra.mxu0 0.0
    %2498 = vmatprep.subr.mxu0 0.0
    %2499 = vmatpush1.msra.mxu0 0.0
    %2500 = vmatprep.mubr.f32.mxu0 0.0
    %2501 = vmatmul.mubr.f32.gmra.mrb[0].mxu0 %v2434
    %v2502 = vpop.f32.mrb[0].mxu0
    %v2503 = vadd.f32 0.0, %v2502
    %v2504 = vpop.f32.mrb[0].mxu0
    %2505 = vdwg.mxu0
    %2506 = vrot.lane.b32.xlu0 %v299, 64
    %v2507 = vpop.permute.xlu0 %2506
    %v2510 = vsel %vm1525, %v1613, 0
    %2512 = vmatprep.subr.mxu0 0.0
    %2513 = vmatpush1.msra.mxu0 %v2507
    %2514 = vmatprep.subr.mxu0 0.0
    %2515 = vmatpush1.msra.mxu0 0.0
    %2516 = vmatprep.subr.mxu0 0.0
    %2517 = vmatpush1.msra.mxu0 0.0
    %2518 = vmatprep.subr.mxu0 0.0
    %2519 = vmatpush1.msra.mxu0 0.0
    %2520 = vmatprep.subr.mxu0 0.0
    %2521 = vmatpush1.msra.mxu0 0.0
    %2522 = vmatprep.subr.mxu0 0.0
    %2523 = vmatpush1.msra.mxu0 0.0
    %2524 = vmatprep.subr.mxu0 0.0
    %2525 = vmatpush1.msra.mxu0 0.0
    %2526 = vmatprep.subr.mxu0 0.0
    %2527 = vmatpush1.msra.mxu0 0.0
    %2528 = vmatprep.subr.mxu0 0.0
    %2529 = vmatpush1.msra.mxu0 0.0
    %2530 = vmatprep.subr.mxu0 0.0
    %2531 = vmatpush1.msra.mxu0 0.0
    %2532 = vmatprep.subr.mxu0 0.0
    %2533 = vmatpush1.msra.mxu0 0.0
    %2534 = vmatprep.subr.mxu0 0.0
    %2535 = vmatpush1.msra.mxu0 0.0
    %2536 = vmatprep.subr.mxu0 0.0
    %2537 = vmatpush1.msra.mxu0 0.0
    %2538 = vmatprep.subr.mxu0 0.0
    %2539 = vmatpush1.msra.mxu0 0.0
    %2540 = vmatprep.subr.mxu0 0.0
    %2541 = vmatpush1.msra.mxu0 0.0
    %2542 = vmatprep.subr.mxu0 0.0
    %2543 = vmatpush1.msra.mxu0 0.0
    %2544 = vmatprep.subr.mxu0 0.0
    %2545 = vmatpush1.msra.mxu0 0.0
    %2546 = vmatprep.subr.mxu0 0.0
    %2547 = vmatpush1.msra.mxu0 0.0
    %2548 = vmatprep.subr.mxu0 0.0
    %2549 = vmatpush1.msra.mxu0 0.0
    %2550 = vmatprep.subr.mxu0 0.0
    %2551 = vmatpush1.msra.mxu0 0.0
    %2552 = vmatprep.subr.mxu0 0.0
    %2553 = vmatpush1.msra.mxu0 0.0
    %2554 = vmatprep.subr.mxu0 0.0
    %2555 = vmatpush1.msra.mxu0 0.0
    %2556 = vmatprep.subr.mxu0 0.0
    %2557 = vmatpush1.msra.mxu0 0.0
    %2558 = vmatprep.subr.mxu0 0.0
    %2559 = vmatpush1.msra.mxu0 0.0
    %2560 = vmatprep.subr.mxu0 0.0
    %2561 = vmatpush1.msra.mxu0 0.0
    %2562 = vmatprep.subr.mxu0 0.0
    %2563 = vmatpush1.msra.mxu0 0.0
    %2564 = vmatprep.subr.mxu0 0.0
    %2565 = vmatpush1.msra.mxu0 0.0
    %2566 = vmatprep.subr.mxu0 0.0
    %2567 = vmatpush1.msra.mxu0 0.0
    %2568 = vmatprep.subr.mxu0 0.0
    %2569 = vmatpush1.msra.mxu0 0.0
    %2570 = vmatprep.subr.mxu0 0.0
    %2571 = vmatpush1.msra.mxu0 0.0
    %2572 = vmatprep.subr.mxu0 0.0
    %2573 = vmatpush1.msra.mxu0 0.0
    %2574 = vmatprep.subr.mxu0 0.0
    %2575 = vmatpush1.msra.mxu0 0.0
    %2576 = vmatprep.mubr.f32.mxu0 0.0
    %2577 = vmatmul.mubr.f32.gmra.mrb[0].mxu0 %v2510
    %v2578 = vpop.f32.mrb[0].mxu0
    %v2579 = vadd.f32 0.0, %v2578
    %v2580 = vpop.f32.mrb[0].mxu0
    %2581 = vdwg.mxu0
    %2582 = vrot.lane.b32.xlu0 %v301, 64
    %v2583 = vpop.permute.xlu0 %2582
    %v2586 = vsel %vm1525, %v1615, 0
    %2588 = vmatprep.subr.mxu0 0.0
    %2589 = vmatpush1.msra.mxu0 %v2583
    %2590 = vmatprep.subr.mxu0 0.0
    %2591 = vmatpush1.msra.mxu0 0.0
    %2592 = vmatprep.subr.mxu0 0.0
    %2593 = vmatpush1.msra.mxu0 0.0
    %2594 = vmatprep.subr.mxu0 0.0
    %2595 = vmatpush1.msra.mxu0 0.0
    %2596 = vmatprep.subr.mxu0 0.0
    %2597 = vmatpush1.msra.mxu0 0.0
    %2598 = vmatprep.subr.mxu0 0.0
    %2599 = vmatpush1.msra.mxu0 0.0
    %2600 = vmatprep.subr.mxu0 0.0
    %2601 = vmatpush1.msra.mxu0 0.0
    %2602 = vmatprep.subr.mxu0 0.0
    %2603 = vmatpush1.msra.mxu0 0.0
    %2604 = vmatprep.subr.mxu0 0.0
    %2605 = vmatpush1.msra.mxu0 0.0
    %2606 = vmatprep.subr.mxu0 0.0
    %2607 = vmatpush1.msra.mxu0 0.0
    %2608 = vmatprep.subr.mxu0 0.0
    %2609 = vmatpush1.msra.mxu0 0.0
    %2610 = vmatprep.subr.mxu0 0.0
    %2611 = vmatpush1.msra.mxu0 0.0
    %2612 = vmatprep.subr.mxu0 0.0
    %2613 = vmatpush1.msra.mxu0 0.0
    %2614 = vmatprep.subr.mxu0 0.0
    %2615 = vmatpush1.msra.mxu0 0.0
    %2616 = vmatprep.subr.mxu0 0.0
    %2617 = vmatpush1.msra.mxu0 0.0
    %2618 = vmatprep.subr.mxu0 0.0
    %2619 = vmatpush1.msra.mxu0 0.0
    %2620 = vmatprep.subr.mxu0 0.0
    %2621 = vmatpush1.msra.mxu0 0.0
    %2622 = vmatprep.subr.mxu0 0.0
    %2623 = vmatpush1.msra.mxu0 0.0
    %2624 = vmatprep.subr.mxu0 0.0
    %2625 = vmatpush1.msra.mxu0 0.0
    %2626 = vmatprep.subr.mxu0 0.0
    %2627 = vmatpush1.msra.mxu0 0.0
    %2628 = vmatprep.subr.mxu0 0.0
    %2629 = vmatpush1.msra.mxu0 0.0
    %2630 = vmatprep.subr.mxu0 0.0
    %2631 = vmatpush1.msra.mxu0 0.0
    %2632 = vmatprep.subr.mxu0 0.0
    %2633 = vmatpush1.msra.mxu0 0.0
    %2634 = vmatprep.subr.mxu0 0.0
    %2635 = vmatpush1.msra.mxu0 0.0
    %2636 = vmatprep.subr.mxu0 0.0
    %2637 = vmatpush1.msra.mxu0 0.0
    %2638 = vmatprep.subr.mxu0 0.0
    %2639 = vmatpush1.msra.mxu0 0.0
    %2640 = vmatprep.subr.mxu0 0.0
    %2641 = vmatpush1.msra.mxu0 0.0
    %2642 = vmatprep.subr.mxu0 0.0
    %2643 = vmatpush1.msra.mxu0 0.0
    %2644 = vmatprep.subr.mxu0 0.0
    %2645 = vmatpush1.msra.mxu0 0.0
    %2646 = vmatprep.subr.mxu0 0.0
    %2647 = vmatpush1.msra.mxu0 0.0
    %2648 = vmatprep.subr.mxu0 0.0
    %2649 = vmatpush1.msra.mxu0 0.0
    %2650 = vmatprep.subr.mxu0 0.0
    %2651 = vmatpush1.msra.mxu0 0.0
    %2652 = vmatprep.mubr.f32.mxu0 0.0
    %2653 = vmatmul.mubr.f32.gmra.mrb[0].mxu0 %v2586
    %v2654 = vpop.f32.mrb[0].mxu0
    %v2655 = vadd.f32 0.0, %v2654
    %v2656 = vpop.f32.mrb[0].mxu0
    %2657 = vdwg.mxu0
    %2658 = vrot.lane.b32.xlu0 %v303, 64
    %v2659 = vpop.permute.xlu0 %2658
    %v2662 = vsel %vm1525, %v1617, 0
    %2664 = vmatprep.subr.mxu0 0.0
    %2665 = vmatpush1.msra.mxu0 %v2659
    %2666 = vmatprep.subr.mxu0 0.0
    %2667 = vmatpush1.msra.mxu0 0.0
    %2668 = vmatprep.subr.mxu0 0.0
    %2669 = vmatpush1.msra.mxu0 0.0
    %2670 = vmatprep.subr.mxu0 0.0
    %2671 = vmatpush1.msra.mxu0 0.0
    %2672 = vmatprep.subr.mxu0 0.0
    %2673 = vmatpush1.msra.mxu0 0.0
    %2674 = vmatprep.subr.mxu0 0.0
    %2675 = vmatpush1.msra.mxu0 0.0
    %2676 = vmatprep.subr.mxu0 0.0
    %2677 = vmatpush1.msra.mxu0 0.0
    %2678 = vmatprep.subr.mxu0 0.0
    %2679 = vmatpush1.msra.mxu0 0.0
    %2680 = vmatprep.subr.mxu0 0.0
    %2681 = vmatpush1.msra.mxu0 0.0
    %2682 = vmatprep.subr.mxu0 0.0
    %2683 = vmatpush1.msra.mxu0 0.0
    %2684 = vmatprep.subr.mxu0 0.0
    %2685 = vmatpush1.msra.mxu0 0.0
    %2686 = vmatprep.subr.mxu0 0.0
    %2687 = vmatpush1.msra.mxu0 0.0
    %2688 = vmatprep.subr.mxu0 0.0
    %2689 = vmatpush1.msra.mxu0 0.0
    %2690 = vmatprep.subr.mxu0 0.0
    %2691 = vmatpush1.msra.mxu0 0.0
    %2692 = vmatprep.subr.mxu0 0.0
    %2693 = vmatpush1.msra.mxu0 0.0
    %2694 = vmatprep.subr.mxu0 0.0
    %2695 = vmatpush1.msra.mxu0 0.0
    %2696 = vmatprep.subr.mxu0 0.0
    %2697 = vmatpush1.msra.mxu0 0.0
    %2698 = vmatprep.subr.mxu0 0.0
    %2699 = vmatpush1.msra.mxu0 0.0
    %2700 = vmatprep.subr.mxu0 0.0
    %2701 = vmatpush1.msra.mxu0 0.0
    %2702 = vmatprep.subr.mxu0 0.0
    %2703 = vmatpush1.msra.mxu0 0.0
    %2704 = vmatprep.subr.mxu0 0.0
    %2705 = vmatpush1.msra.mxu0 0.0
    %2706 = vmatprep.subr.mxu0 0.0
    %2707 = vmatpush1.msra.mxu0 0.0
    %2708 = vmatprep.subr.mxu0 0.0
    %2709 = vmatpush1.msra.mxu0 0.0
    %2710 = vmatprep.subr.mxu0 0.0
    %2711 = vmatpush1.msra.mxu0 0.0
    %2712 = vmatprep.subr.mxu0 0.0
    %2713 = vmatpush1.msra.mxu0 0.0
    %2714 = vmatprep.subr.mxu0 0.0
    %2715 = vmatpush1.msra.mxu0 0.0
    %2716 = vmatprep.subr.mxu0 0.0
    %2717 = vmatpush1.msra.mxu0 0.0
    %2718 = vmatprep.subr.mxu0 0.0
    %2719 = vmatpush1.msra.mxu0 0.0
    %2720 = vmatprep.subr.mxu0 0.0
    %2721 = vmatpush1.msra.mxu0 0.0
    %2722 = vmatprep.subr.mxu0 0.0
    %2723 = vmatpush1.msra.mxu0 0.0
    %2724 = vmatprep.subr.mxu0 0.0
    %2725 = vmatpush1.msra.mxu0 0.0
    %2726 = vmatprep.subr.mxu0 0.0
    %2727 = vmatpush1.msra.mxu0 0.0
    %2728 = vmatprep.mubr.f32.mxu0 0.0
    %2729 = vmatmul.mubr.f32.gmra.mrb[0].mxu0 %v2662
    %v2730 = vpop.f32.mrb[0].mxu0
    %v2731 = vadd.f32 0.0, %v2730
    %v2732 = vpop.f32.mrb[0].mxu0
    %2733 = vdwg.mxu0
    %2734 = vrot.lane.b32.xlu0 %v305, 64
    %v2735 = vpop.permute.xlu0 %2734
    %v2738 = vsel %vm1525, %v1619, 0
    %2740 = vmatprep.subr.mxu0 0.0
    %2741 = vmatpush1.msra.mxu0 %v2735
    %2742 = vmatprep.subr.mxu0 0.0
    %2743 = vmatpush1.msra.mxu0 0.0
    %2744 = vmatprep.subr.mxu0 0.0
    %2745 = vmatpush1.msra.mxu0 0.0
    %2746 = vmatprep.subr.mxu0 0.0
    %2747 = vmatpush1.msra.mxu0 0.0
    %2748 = vmatprep.subr.mxu0 0.0
    %2749 = vmatpush1.msra.mxu0 0.0
    %2750 = vmatprep.subr.mxu0 0.0
    %2751 = vmatpush1.msra.mxu0 0.0
    %2752 = vmatprep.subr.mxu0 0.0
    %2753 = vmatpush1.msra.mxu0 0.0
    %2754 = vmatprep.subr.mxu0 0.0
    %2755 = vmatpush1.msra.mxu0 0.0
    %2756 = vmatprep.subr.mxu0 0.0
    %2757 = vmatpush1.msra.mxu0 0.0
    %2758 = vmatprep.subr.mxu0 0.0
    %2759 = vmatpush1.msra.mxu0 0.0
    %2760 = vmatprep.subr.mxu0 0.0
    %2761 = vmatpush1.msra.mxu0 0.0
    %2762 = vmatprep.subr.mxu0 0.0
    %2763 = vmatpush1.msra.mxu0 0.0
    %2764 = vmatprep.subr.mxu0 0.0
    %2765 = vmatpush1.msra.mxu0 0.0
    %2766 = vmatprep.subr.mxu0 0.0
    %2767 = vmatpush1.msra.mxu0 0.0
    %2768 = vmatprep.subr.mxu0 0.0
    %2769 = vmatpush1.msra.mxu0 0.0
    %2770 = vmatprep.subr.mxu0 0.0
    %2771 = vmatpush1.msra.mxu0 0.0
    %2772 = vmatprep.subr.mxu0 0.0
    %2773 = vmatpush1.msra.mxu0 0.0
    %2774 = vmatprep.subr.mxu0 0.0
    %2775 = vmatpush1.msra.mxu0 0.0
    %2776 = vmatprep.subr.mxu0 0.0
    %2777 = vmatpush1.msra.mxu0 0.0
    %2778 = vmatprep.subr.mxu0 0.0
    %2779 = vmatpush1.msra.mxu0 0.0
    %2780 = vmatprep.subr.mxu0 0.0
    %2781 = vmatpush1.msra.mxu0 0.0
    %2782 = vmatprep.subr.mxu0 0.0
    %2783 = vmatpush1.msra.mxu0 0.0
    %2784 = vmatprep.subr.mxu0 0.0
    %2785 = vmatpush1.msra.mxu0 0.0
    %2786 = vmatprep.subr.mxu0 0.0
    %2787 = vmatpush1.msra.mxu0 0.0
    %2788 = vmatprep.subr.mxu0 0.0
    %2789 = vmatpush1.msra.mxu0 0.0
    %2790 = vmatprep.subr.mxu0 0.0
    %2791 = vmatpush1.msra.mxu0 0.0
    %2792 = vmatprep.subr.mxu0 0.0
    %2793 = vmatpush1.msra.mxu0 0.0
    %2794 = vmatprep.subr.mxu0 0.0
    %2795 = vmatpush1.msra.mxu0 0.0
    %2796 = vmatprep.subr.mxu0 0.0
    %2797 = vmatpush1.msra.mxu0 0.0
    %2798 = vmatprep.subr.mxu0 0.0
    %2799 = vmatpush1.msra.mxu0 0.0
    %2800 = vmatprep.subr.mxu0 0.0
    %2801 = vmatpush1.msra.mxu0 0.0
    %2802 = vmatprep.subr.mxu0 0.0
    %2803 = vmatpush1.msra.mxu0 0.0
    %2804 = vmatprep.mubr.f32.mxu0 0.0
    %2805 = vmatmul.mubr.f32.gmra.mrb[0].mxu0 %v2738
    %v2806 = vpop.f32.mrb[0].mxu0
    %v2807 = vadd.f32 0.0, %v2806
    %v2808 = vpop.f32.mrb[0].mxu0
    %2809 = vdwg.mxu0
    %2810 = vrot.lane.b32.xlu0 %v307, 64
    %v2811 = vpop.permute.xlu0 %2810
    %v2814 = vsel %vm1525, %v1621, 0
    %2816 = vmatprep.subr.mxu0 0.0
    %2817 = vmatpush1.msra.mxu0 %v2811
    %2818 = vmatprep.subr.mxu0 0.0
    %2819 = vmatpush1.msra.mxu0 0.0
    %2820 = vmatprep.subr.mxu0 0.0
    %2821 = vmatpush1.msra.mxu0 0.0
    %2822 = vmatprep.subr.mxu0 0.0
    %2823 = vmatpush1.msra.mxu0 0.0
    %2824 = vmatprep.subr.mxu0 0.0
    %2825 = vmatpush1.msra.mxu0 0.0
    %2826 = vmatprep.subr.mxu0 0.0
    %2827 = vmatpush1.msra.mxu0 0.0
    %2828 = vmatprep.subr.mxu0 0.0
    %2829 = vmatpush1.msra.mxu0 0.0
    %2830 = vmatprep.subr.mxu0 0.0
    %2831 = vmatpush1.msra.mxu0 0.0
    %2832 = vmatprep.subr.mxu0 0.0
    %2833 = vmatpush1.msra.mxu0 0.0
    %2834 = vmatprep.subr.mxu0 0.0
    %2835 = vmatpush1.msra.mxu0 0.0
    %2836 = vmatprep.subr.mxu0 0.0
    %2837 = vmatpush1.msra.mxu0 0.0
    %2838 = vmatprep.subr.mxu0 0.0
    %2839 = vmatpush1.msra.mxu0 0.0
    %2840 = vmatprep.subr.mxu0 0.0
    %2841 = vmatpush1.msra.mxu0 0.0
    %2842 = vmatprep.subr.mxu0 0.0
    %2843 = vmatpush1.msra.mxu0 0.0
    %2844 = vmatprep.subr.mxu0 0.0
    %2845 = vmatpush1.msra.mxu0 0.0
    %2846 = vmatprep.subr.mxu0 0.0
    %2847 = vmatpush1.msra.mxu0 0.0
    %2848 = vmatprep.subr.mxu0 0.0
    %2849 = vmatpush1.msra.mxu0 0.0
    %2850 = vmatprep.subr.mxu0 0.0
    %2851 = vmatpush1.msra.mxu0 0.0
    %2852 = vmatprep.subr.mxu0 0.0
    %2853 = vmatpush1.msra.mxu0 0.0
    %2854 = vmatprep.subr.mxu0 0.0
    %2855 = vmatpush1.msra.mxu0 0.0
    %2856 = vmatprep.subr.mxu0 0.0
    %2857 = vmatpush1.msra.mxu0 0.0
    %2858 = vmatprep.subr.mxu0 0.0
    %2859 = vmatpush1.msra.mxu0 0.0
    %2860 = vmatprep.subr.mxu0 0.0
    %2861 = vmatpush1.msra.mxu0 0.0
    %2862 = vmatprep.subr.mxu0 0.0
    %2863 = vmatpush1.msra.mxu0 0.0
    %2864 = vmatprep.subr.mxu0 0.0
    %2865 = vmatpush1.msra.mxu0 0.0
    %2866 = vmatprep.subr.mxu0 0.0
    %2867 = vmatpush1.msra.mxu0 0.0
    %2868 = vmatprep.subr.mxu0 0.0
    %2869 = vmatpush1.msra.mxu0 0.0
    %2870 = vmatprep.subr.mxu0 0.0
    %2871 = vmatpush1.msra.mxu0 0.0
    %2872 = vmatprep.subr.mxu0 0.0
    %2873 = vmatpush1.msra.mxu0 0.0
    %2874 = vmatprep.subr.mxu0 0.0
    %2875 = vmatpush1.msra.mxu0 0.0
    %2876 = vmatprep.subr.mxu0 0.0
    %2877 = vmatpush1.msra.mxu0 0.0
    %2878 = vmatprep.subr.mxu0 0.0
    %2879 = vmatpush1.msra.mxu0 0.0
    %2880 = vmatprep.mubr.f32.mxu0 0.0
    %2881 = vmatmul.mubr.f32.gmra.mrb[0].mxu0 %v2814
    %v2882 = vpop.f32.mrb[0].mxu0
    %v2883 = vadd.f32 0.0, %v2882
    %v2884 = vpop.f32.mrb[0].mxu0
    %2885 = vdwg.mxu0
    %v2886 = vrcp.pop %v1624
    %v2887 = vrcp.pop %v1627
    %v2888 = vrcp.pop %v1630
    %v2889 = vrcp.pop %v1633
    %v2890 = vrcp.pop %v1636
    %v2891 = vrcp.pop %v1639
    %v2892 = vrcp.pop %v1642
    %v2893 = vrcp.pop %v1645
    %v2894 = vrcp.pop %v1648
    %v2895 = vrcp.pop %v1651
    %v2896 = vrcp.pop %v1654
    %v2897 = vrcp.pop %v1657
    %v2898 = vrcp.pop %v1660
    %v2899 = vrcp.pop %v1663
    %v2900 = vrcp.pop %v1666
    %v2901 = vrcp.pop %v1669
    %v2902 = vmul.f32 %v1743, %v2886
    %v2903 = vmul.f32 %v1819, %v2887
    %v2904 = vmul.f32 %v1895, %v2888
    %v2905 = vmul.f32 %v1971, %v2889
    %v2906 = vmul.f32 %v2047, %v2890
    %v2907 = vmul.f32 %v2123, %v2891
    %v2908 = vmul.f32 %v2199, %v2892
    %v2909 = vmul.f32 %v2275, %v2893
    %v2910 = vmul.f32 %v2351, %v2894
    %v2911 = vmul.f32 %v2427, %v2895
    %v2912 = vmul.f32 %v2503, %v2896
    %v2913 = vmul.f32 %v2579, %v2897
    %v2914 = vmul.f32 %v2655, %v2898
    %v2915 = vmul.f32 %v2731, %v2899
    %v2916 = vmul.f32 %v2807, %v2900
    %v2917 = vmul.f32 %v2883, %v2901
    %2920 = vrot.lane.b32.xlu0 %v2904, 4
    %v2921 = vpop.permute.xlu0 %2920
    %2922 = vrot.lane.b32.xlu0 %v2905, 4
    %v2923 = vpop.permute.xlu0 %2922
    %2928 = vrot.lane.b32.xlu0 %v2906, 8
    %v2929 = vpop.permute.xlu0 %2928
    %2930 = vrot.lane.b32.xlu0 %v2907, 8
    %v2931 = vpop.permute.xlu0 %2930
    %2936 = vrot.lane.b32.xlu0 %v2908, 12
    %v2937 = vpop.permute.xlu0 %2936
    %2938 = vrot.lane.b32.xlu0 %v2909, 12
    %v2939 = vpop.permute.xlu0 %2938
    %2944 = vrot.lane.b32.xlu0 %v2910, 16
    %v2945 = vpop.permute.xlu0 %2944
    %2946 = vrot.lane.b32.xlu0 %v2911, 16
    %v2947 = vpop.permute.xlu0 %2946
    %2952 = vrot.lane.b32.xlu0 %v2912, 20
    %v2953 = vpop.permute.xlu0 %2952
    %2954 = vrot.lane.b32.xlu0 %v2913, 20
    %v2955 = vpop.permute.xlu0 %2954
    %2960 = vrot.lane.b32.xlu0 %v2914, 24
    %v2961 = vpop.permute.xlu0 %2960
    %2962 = vrot.lane.b32.xlu0 %v2915, 24
    %v2963 = vpop.permute.xlu0 %2962
    %2968 = vrot.lane.b32.xlu0 %v2916, 28
    %v2969 = vpop.permute.xlu0 %2968
    %2970 = vrot.lane.b32.xlu0 %v2917, 28
    %v2971 = vpop.permute.xlu0 %2970
    %v2974 = vsel %vm310, %v2902, %v2921
    %v2975 = vsel %vm310, %v2903, %v2923
    %v2976 = vsel %vm1525, %v2974, %v2929
    %v2977 = vsel %vm1525, %v2975, %v2931
    %vm2978 = vcmask 97280
    %v2979 = vsel %vm2978, %v2976, %v2937
    %v2980 = vsel %vm2978, %v2977, %v2939
    %v2981 = vsel %vm105, %v2979, %v2945
    %v2982 = vsel %vm105, %v2980, %v2947
    %vm2983 = vcmask 162816
    %v2984 = vsel %vm2983, %v2981, %v2953
    %v2985 = vsel %vm2983, %v2982, %v2955
    %vm2986 = vcmask 195584
    %v2987 = vsel %vm2986, %v2984, %v2961
    %v2988 = vsel %vm2986, %v2985, %v2963
    %vm2989 = vcmask 228352
    %v2990 = vsel %vm2989, %v2987, %v2969
    %v2991 = vsel %vm2989, %v2988, %v2971
    %v2992 = vld [vmem:[%s6] sm:$0x7]
    %v2993 = vld [vmem:[#allocation10] sm:$0xff]
    %v2994 = vld [vmem:[#allocation10 + $0x8] sm:$0xff]
    %v2995 = vld [vmem:[#allocation10 + $0x10] sm:$0xff]
    %v2996 = vld [vmem:[#allocation10 + $0x18] sm:$0xff]
    %v2998 = vsel %vm187, %v2990, 0
    %v3001 = vsel %vm187, %v2991, 0
    %3003 = vmatprep.subr.mxu0 0.0
    %3004 = vmatpush1.msra.mxu0 %v2993
    %3005 = vmatprep.subr.mxu0 0.0
    %3006 = vmatpush1.msra.mxu0 %v2994
    %3007 = vmatprep.subr.mxu0 0.0
    %3008 = vmatpush1.msra.mxu0 %v2995
    %3009 = vmatprep.subr.mxu0 0.0
    %3010 = vmatpush1.msra.mxu0 %v2996
    %3011 = vmatprep.subr.mxu0 0.0
    %3012 = vmatpush1.msra.mxu0 0.0
    %3013 = vmatprep.subr.mxu0 0.0
    %3014 = vmatpush1.msra.mxu0 0.0
    %3015 = vmatprep.subr.mxu0 0.0
    %3016 = vmatpush1.msra.mxu0 0.0
    %3017 = vmatprep.subr.mxu0 0.0
    %3018 = vmatpush1.msra.mxu0 0.0
    %3019 = vmatprep.subr.mxu0 0.0
    %3020 = vmatpush1.msra.mxu0 0.0
    %3021 = vmatprep.subr.mxu0 0.0
    %3022 = vmatpush1.msra.mxu0 0.0
    %3023 = vmatprep.subr.mxu0 0.0
    %3024 = vmatpush1.msra.mxu0 0.0
    %3025 = vmatprep.subr.mxu0 0.0
    %3026 = vmatpush1.msra.mxu0 0.0
    %3027 = vmatprep.subr.mxu0 0.0
    %3028 = vmatpush1.msra.mxu0 0.0
    %3029 = vmatprep.subr.mxu0 0.0
    %3030 = vmatpush1.msra.mxu0 0.0
    %3031 = vmatprep.subr.mxu0 0.0
    %3032 = vmatpush1.msra.mxu0 0.0
    %3033 = vmatprep.subr.mxu0 0.0
    %3034 = vmatpush1.msra.mxu0 0.0
    %3035 = vmatprep.subr.mxu0 0.0
    %3036 = vmatpush1.msra.mxu0 0.0
    %3037 = vmatprep.subr.mxu0 0.0
    %3038 = vmatpush1.msra.mxu0 0.0
    %3039 = vmatprep.subr.mxu0 0.0
    %3040 = vmatpush1.msra.mxu0 0.0
    %3041 = vmatprep.subr.mxu0 0.0
    %3042 = vmatpush1.msra.mxu0 0.0
    %3043 = vmatprep.subr.mxu0 0.0
    %3044 = vmatpush1.msra.mxu0 0.0
    %3045 = vmatprep.subr.mxu0 0.0
    %3046 = vmatpush1.msra.mxu0 0.0
    %3047 = vmatprep.subr.mxu0 0.0
    %3048 = vmatpush1.msra.mxu0 0.0
    %3049 = vmatprep.subr.mxu0 0.0
    %3050 = vmatpush1.msra.mxu0 0.0
    %3051 = vmatprep.subr.mxu0 0.0
    %3052 = vmatpush1.msra.mxu0 0.0
    %3053 = vmatprep.subr.mxu0 0.0
    %3054 = vmatpush1.msra.mxu0 0.0
    %3055 = vmatprep.subr.mxu0 0.0
    %3056 = vmatpush1.msra.mxu0 0.0
    %3057 = vmatprep.subr.mxu0 0.0
    %3058 = vmatpush1.msra.mxu0 0.0
    %3059 = vmatprep.subr.mxu0 0.0
    %3060 = vmatpush1.msra.mxu0 0.0
    %3061 = vmatprep.subr.mxu0 0.0
    %3062 = vmatpush1.msra.mxu0 0.0
    %3063 = vmatprep.subr.mxu0 0.0
    %3064 = vmatpush1.msra.mxu0 0.0
    %3065 = vmatprep.subr.mxu0 0.0
    %3066 = vmatpush1.msra.mxu0 0.0
    %3067 = vmatprep.mubr.f32.mxu0 0.0
    %3068 = vmatmul.mubr.f32.gmra.mrb[0].mxu0 %v2998
    %v3069 = vpop.f32.mrb[0].mxu0
    %v3070 = vadd.f32 0.0, %v3069
    %v3071 = vpop.f32.mrb[0].mxu0
    %3072 = vmatprep.mubr.f32.mxu0 0.0
    %3073 = vmatmul.mubr.f32.gmra.mrb[0].mxu0 %v3001
    %v3074 = vpop.f32.mrb[0].mxu0
    %v3075 = vadd.f32 0.0, %v3074
    %v3076 = vpop.f32.mrb[0].mxu0
    %3077 = vdwg.mxu0
    %v3078 = vadd.f32 %v95, %v3070
    %v3079 = vadd.f32 %v96, %v3075
    %v3080 = vlaneseq
    %v3081 = vshrl.u32 %v3080, 7
    %v3082 = vsub.s32 0, %v3081
    %v3083 = vrot.slane %v2992, %v3082
    %v3084 = vadd.f32 %v3078, %v3083
    %v3085 = vadd.f32 %v3079, %v3083
    %v3086 = vsel %vm187, %v3084, 0.0
    %3087 = vadd.xlane.f32.xlu0 %v3086
    %v3088 = vpop.xlane.xlu0 %3087
    %v3089 = vsel %vm187, %v3085, 0.0
    %3090 = vadd.xlane.f32.xlu0 %v3089
    %v3091 = vpop.xlane.xlu0 %3090
    %v3092 = vrcp.pop 32.0
    %v3093 = vmul.f32 %v3088, %v3092
    %v3094 = vmul.f32 %v3091, %v3092
    %v3095 = vmul.f32 %v3084, %v3084
    %v3096 = vmul.f32 %v3085, %v3085
    %v3097 = vsel %vm187, %v3095, 0.0
    %3098 = vadd.xlane.f32.xlu0 %v3097
    %v3099 = vpop.xlane.xlu0 %3098
    %v3100 = vsel %vm187, %v3096, 0.0
    %3101 = vadd.xlane.f32.xlu0 %v3100
    %v3102 = vpop.xlane.xlu0 %3101
    %v3103 = vmul.f32 %v3099, %v3092
    %v3104 = vmul.f32 %v3102, %v3092
    %v3105 = vsub.f32 %v3084, %v3093
    %v3106 = vsub.f32 %v3085, %v3094
    %v3107 = vmul.f32 %v3093, %v3093
    %v3108 = vmul.f32 %v3094, %v3094
    %v3109 = vsub.f32 %v3103, %v3107
    %v3110 = vsub.f32 %v3104, %v3108
    %v3111 = vadd.f32 %v3109, 1e-05
    %v3112 = vadd.f32 %v3110, 1e-05
    %v3113 = vrsqrt.pop %v3111
    %v3114 = vrsqrt.pop %v3112
    %v3115 = vmul.f32 %v3105, %v3113
    %v3116 = vmul.f32 %v3106, %v3114
    %v3117 = vlaneseq
    %v3118 = vshrl.u32 %v3117, 7
    %v3119 = vsub.s32 1, %v3118
    %v3120 = vrot.slane %v2992, %v3119
    %v3121 = vmul.f32 %v3115, %v3120
    %v3122 = vmul.f32 %v3116, %v3120
    %v3123 = vlaneseq
    %v3124 = vshrl.u32 %v3123, 7
    %v3125 = vsub.s32 2, %v3124
    %v3126 = vrot.slane %v2992, %v3125
    %v3127 = vadd.f32 %v3121, %v3126
    %v3128 = vadd.f32 %v3122, %v3126
    %3129 = vst.msk [vmem:[#allocation11] sm:$0xff] %vm187, %v3127
    %3130 = vst.msk [vmem:[#allocation11 + $0x8] sm:$0xff] %vm187, %v3128
    // Predicated region
    $region50: #{tpu_custom_call.1} parent=1 // pred_check
      _
    $region51: #{tpu_custom_call.1} parent=1 // pred_check_branch
      %3132 = sbr.rel (0) target = $region53
    $region52: #{tpu_custom_call.1} parent=1 // pred_region
      %s3134 = ssub.s32 256, 256
      %3135 = vsyncadd [#allocation4], %s3134
      %s3136 = sshll.u32 [#allocation11], 4
      %s3137 = int_to_ptr.vmem [resolvable:$true] %s3136
      %3142 = dma.vmem_to_hbm [thread:$0]  %s3137, 256, %s7, [#allocation4], 128, 128, 8
    $region53: #{tpu_custom_call.1} parent=1 // pred_fallthru
      _
    // Predicated region
    $region54: #{tpu_custom_call.1} parent=1 // pred_check
      _
    $region55: #{tpu_custom_call.1} parent=1 // pred_check_branch
      %3144 = sbr.rel (0) target = $region57
    $region56: #{tpu_custom_call.1} parent=1 // pred_region
      %3145 = dma.done [#allocation4], 256
    $region57: #{tpu_custom_call.1} parent=1 // pred_fallthru
      _
    %3146 = vsyncpa [#allocation3], 1
    %3147 = vsyncpa [#allocation6], 1
    %3148 = vsyncpa [#allocation9], 1
    %3149 = vsyncpa [#allocation4], 1

</llo_original>
